<compile_context>
chip_gen: v6e
topology: v6e:2x2x1
jax: 0.10.0
libtpu: 0.0.40
codegen_flags: <defaults>
</compile_context>

<pallas_src>
import functools

import jax
import jax.numpy as jnp
from jax.experimental import pallas as pl
from jax.experimental.pallas import tpu as pltpu


def _round_up(x, m):
    return ((x + m - 1) // m) * m


# Safe on every generation: well under v7x's 64 MiB per-TC VMEM, and far above the
# ~1 MiB this kernel actually needs (double-buffered input block + weights + output).
VMEM_LIMIT_BYTES = 32 * 1024 * 1024


# ----------------------------------------------------------------------------
# Kernel 1: fused 3x3 'same' conv + bias + ReLU + global average pool.
#   One grid step = `bb` images (grid over batch, "parallel").
#   x_ref : (bb, HW + 2*halo, C)  bf16 flattened spatial rows with a zero halo
#   w_ref : (9, C, Cb)            bf16 conv weight, one (C, Cb) slab per tap
#   b_ref : (1, Cb)               f32 bias
#   o_ref : (bb, 1, Cb)           pooled f32 output rows
# ----------------------------------------------------------------------------
def _conv_relu_pool_kernel(x_ref, w_ref, b_ref, o_ref, *, h, w, halo, bb):
    hw = h * w

    # Hoisted: column index of every flattened spatial row (2D iota: TPU needs >=2D),
    # and the two edge-wrap keep-masks, built once and reused by all taps / images.
    col = jax.lax.broadcasted_iota(jnp.int32, (hw, 1), 0) % w
    left_keep = col >= 1           # tap column -1 wraps across the left image edge
    right_keep = col <= w - 2      # tap column +1 wraps across the right image edge

    for img in range(bb):
        # Register accumulation in f32: one MXU dot per tap, single write-out at the
        # end.  No VMEM scratch and no per-tap read-modify-write traffic.
        acc = None
        for di in range(3):
            for dj in range(3):
                t = 3 * di + dj
                # Tap (di, dj) reads input pixel (h_o + di - 1, w_o + dj - 1); in flat
                # index space that is a constant (static) shift of (di-1)*W + (dj-1)
                # plus the halo offset.  Rows above/below the image land in the zero
                # halo; column wrap-around is masked below.
                start = halo + (di - 1) * w + (dj - 1)
                x_t = x_ref[img, start:start + hw, :]          # (HW, C) bf16
                if dj == 0:
                    x_t = jnp.where(left_keep, x_t, 0)
                elif dj == 2:
                    x_t = jnp.where(right_keep, x_t, 0)
                d = jnp.dot(x_t, w_ref[t], preferred_element_type=jnp.float32)
                acc = d if acc is None else acc + d

        y = jnp.maximum(acc + b_ref[...], 0.0)                  # bias + ReLU in f32
        o_ref[img] = jnp.mean(y, axis=0, keepdims=True)         # fused global avg pool


def conv_relu_pool(x_flat_halo, w_conv, b_conv, *, h, w, halo, bb=1):
    """x_flat_halo: (B, HW + 2*halo, C) bf16 -> pooled (B, 1, Cb) f32."""
    bsz, l, c = x_flat_halo.shape
    cb = w_conv.shape[2]
    hw = h * w
    assert bsz % bb == 0, "batch must be divisible by the batch block"

    kern = functools.partial(_conv_relu_pool_kernel, h=h, w=w, halo=halo, bb=bb)

    cost = pl.CostEstimate(
        flops=2 * bsz * hw * 9 * c * cb,
        transcendentals=0,
        bytes_accessed=(x_flat_halo.size * x_flat_halo.dtype.itemsize
                        + w_conv.size * w_conv.dtype.itemsize
                        + b_conv.size * b_conv.dtype.itemsize
                        + bsz * cb * 4),
    )

    return pl.pallas_call(
        kern,
        out_shape=jax.ShapeDtypeStruct((bsz, 1, cb), jnp.float32),
        grid_spec=pltpu.PrefetchScalarGridSpec(
            num_scalar_prefetch=0,
            grid=(bsz // bb,),
            in_specs=[
                pl.BlockSpec((bb, l, c), lambda i: (i, 0, 0)),
                pl.BlockSpec((9, c, cb), lambda i: (0, 0, 0)),
                pl.BlockSpec((1, cb), lambda i: (0, 0)),
            ],
            out_specs=pl.BlockSpec((bb, 1, cb), lambda i: (i, 0, 0)),
        ),
        compiler_params=pltpu.CompilerParams(
            dimension_semantics=("parallel",),
            vmem_limit_bytes=VMEM_LIMIT_BYTES,
        ),
        cost_estimate=cost,
    )(x_flat_halo, w_conv, b_conv)


# ----------------------------------------------------------------------------
# Kernel 2: the module's fc layer as a single batched matmul.
#   pooled : (B, Cb)   w_fc : (Cb, E)   b_fc : (1, E)   ->   (B, E)
# Kept in f32 to preserve the module's own layer numerics exactly; at ResNet scale
# (Cb=2048) the weight would be cast to bf16 and the call tiled, but at toy shapes a
# single untiled call is cheapest.
# ----------------------------------------------------------------------------
def _fc_kernel(x_ref, w_ref, b_ref, o_ref):
    o_ref[...] = (
        jnp.dot(x_ref[...], w_ref[...], preferred_element_type=jnp.float32)
        + b_ref[...]
    )


def fc_linear(pooled, w_fc, b_fc):
    bsz = pooled.shape[0]
    e = w_fc.shape[1]
    return pl.pallas_call(
        _fc_kernel,
        out_shape=jax.ShapeDtypeStruct((bsz, e), jnp.float32),
        compiler_params=pltpu.CompilerParams(
            vmem_limit_bytes=VMEM_LIMIT_BYTES,
        ),
    )(pooled, w_fc, b_fc)


# ----------------------------------------------------------------------------
# EncoderImage forward
# ----------------------------------------------------------------------------
def encoder_image_forward(images_nchw, params):
    """images_nchw: (B, C, H, W) float32 -> (B, embed_size) float32."""
    b, c, h, w = images_nchw.shape
    # Single bf16 cast here (not 9x inside the kernel): halves DMA bytes too.
    x = jnp.transpose(images_nchw, (0, 2, 3, 1)).astype(jnp.bfloat16)   # NCHW -> NHWC
    x_flat = x.reshape(b, h * w, c)                                     # flatten spatial
    # Halo must cover the +-1 row taps (>= W+1); round to a bf16 sublane-tile multiple
    # so the static tap-window bases are aligned for the dj==1 column of taps.
    halo = _round_up(w + 1, 16)
    x_halo = jnp.pad(x_flat, ((0, 0), (halo, halo), (0, 0)))            # tiny zero halo

    # bb=1 keeps grid == B (2), so both v7x TensorCores get one image each; raise bb
    # for large batches to amortize the ~0.35us/step pipeline overhead.
    pooled = conv_relu_pool(x_halo, params["w_conv"], params["b_conv"],
                            h=h, w=w, halo=halo, bb=1)
    pooled = pooled[:, 0, :]                                            # (B, Cb_pad)

    z = fc_linear(pooled, params["w_fc"], params["b_fc"])               # (B, E_pad)
    return z[:, :params["embed_size"]]


def init_params(key, c_in, backbone_dim, embed_size):
    cb_pad = _round_up(backbone_dim, 128)     # lane-dense conv N dim / fc K dim
    e_pad = _round_up(embed_size, 128)        # lane-dense fc N dim
    k_conv, k_fc = jax.random.split(key)

    # Backbone stand-in conv weights (deterministic random), padded + bf16 for the MXU.
    w_conv = 0.05 * jax.random.normal(k_conv, (9, c_in, backbone_dim), jnp.float32)
    w_conv = jnp.pad(w_conv, ((0, 0), (0, 0), (0, cb_pad - backbone_dim)))
    w_conv = w_conv.astype(jnp.bfloat16)
    b_conv = jnp.zeros((1, cb_pad), jnp.float32)

    # fc: Xavier-uniform exactly as in EncoderImage.init_weights(), zero bias.
    r = (6.0 / float(backbone_dim + embed_size)) ** 0.5
    w_fc_out_in = jax.random.uniform(k_fc, (embed_size, backbone_dim),
                                     minval=-r, maxval=r, dtype=jnp.float32)
    w_fc = jnp.transpose(w_fc_out_in)                                   # (in, out): x @ W^T
    w_fc = jnp.pad(w_fc, ((0, cb_pad - backbone_dim), (0, e_pad - embed_size)))
    b_fc = jnp.zeros((1, e_pad), jnp.float32)

    return {"w_conv": w_conv, "b_conv": b_conv, "w_fc": w_fc, "b_fc": b_fc,
            "embed_size": embed_size}


# ----------------------------------------------------------------------------
# Pure-JAX reference (same stand-in backbone, same bf16-rounded inputs/weights).
# ----------------------------------------------------------------------------
def reference_forward(images_nchw, params):
    b, c, h, w = images_nchw.shape
    x = jnp.transpose(images_nchw, (0, 2, 3, 1))
    x = x.astype(jnp.bfloat16).astype(jnp.float32)      # mirror the kernel's bf16 input
    xp = jnp.pad(x, ((0, 0), (1, 1), (1, 1), (0, 0)))
    w_conv = params["w_conv"].astype(jnp.float32)        # (9, C, Cb_pad)
    acc = 0.0
    for di in range(3):
        for dj in range(3):
            acc = acc + jnp.einsum("bhwc,cd->bhwd",
                                   xp[:, di:di + h, dj:dj + w, :], w_conv[3 * di + dj])
    y = jnp.maximum(acc + params["b_conv"][0], 0.0)
    pooled = y.mean(axis=(1, 2))                                        # global avg pool
    z = pooled @ params["w_fc"] + params["b_fc"][0]
    return z[:, :params["embed_size"]]


if __name__ == "__main__":
    # Small shapes consistent with the module's forward: images (B, C, H, W);
    # backbone_dim (resnet50: 2048) scaled to 64; embed_size scaled to 32.
    B, C, H, W = 2, 4, 16, 16
    BACKBONE_DIM = 64
    EMBED_SIZE = 32

    key = jax.random.PRNGKey(0)
    k_img, k_par = jax.random.split(key)
    images = jax.random.normal(k_img, (B, C, H, W), jnp.float32)
    params = init_params(k_par, C, BACKBONE_DIM, EMBED_SIZE)

    fwd = jax.jit(functools.partial(encoder_image_forward, params=params))
    z = fwd(images)
    jax.block_until_ready(z)

    assert z.shape == (B, EMBED_SIZE) and z.dtype == jnp.float32

    z_ref = reference_forward(images, params)
    assert jnp.allclose(z, z_ref, rtol=2e-2, atol=2e-2), (
        "Pallas output diverges from reference")

    print("KERNEL_OK")
</pallas_src>

<mosaic_0001>
module attributes {stable_mosaic.version = 11 : i64} {
  func.func @_conv_relu_pool_kernel(%arg0: i32, %arg1: memref<1x320x4xbf16, #tpu.memory_space<vmem>>, %arg2: memref<9x4x128xbf16, #tpu.memory_space<vmem>>, %arg3: memref<1x128xf32, #tpu.memory_space<vmem>>, %arg4: memref<1x1x128xf32, #tpu.memory_space<vmem>>) attributes {dimension_semantics = [#tpu.dimension_semantics<parallel>], iteration_bounds = array<i64: 2>, scalar_prefetch = 0 : i64, scratch_operands = 0 : i64, tpu.core_type = #tpu.core_type<tc>, window_params = [{transform_indices = @transform_0, window_bounds = array<i64: 1, 320, 4>}, {pipeline_mode = #tpu.pipeline_mode<synchronous>, transform_indices = @transform_1, window_bounds = array<i64: 9, 4, 128>}, {pipeline_mode = #tpu.pipeline_mode<synchronous>, transform_indices = @transform_2, window_bounds = array<i64: 1, 128>}, {transform_indices = @transform_3, window_bounds = array<i64: 1, 1, 128>}]} {
    %0 = tpu.iota {dimensions = array<i32: 0>} : vector<256x1xi32>
    %c16_i32 = arith.constant 16 : i32
    %c0_i32 = arith.constant 0 : i32
    %1 = arith.cmpi eq, %c16_i32, %c0_i32 : i32
    %c1_i32 = arith.constant 1 : i32
    %2 = arith.select %1, %c1_i32, %c16_i32 : i32
    %3 = vector.broadcast %2 : i32 to vector<256x1xi32>
    %4 = arith.remsi %0, %3 : vector<256x1xi32>
    %c0_i32_0 = arith.constant 0 : i32
    %5 = vector.broadcast %c0_i32_0 : i32 to vector<256x1xi32>
    %6 = arith.cmpi ne, %4, %5 : vector<256x1xi32>
    %c0_i32_1 = arith.constant 0 : i32
    %7 = vector.broadcast %c0_i32_1 : i32 to vector<256x1xi32>
    %8 = arith.cmpi slt, %4, %7 : vector<256x1xi32>
    %c0_i32_2 = arith.constant 0 : i32
    %9 = arith.cmpi slt, %2, %c0_i32_2 : i32
    %10 = vector.broadcast %9 : i1 to vector<256x1xi1>
    %11 = vector.broadcast %10 : vector<256x1xi1> to vector<256x1xi1>
    %12 = arith.xori %8, %11 : vector<256x1xi1>
    %13 = arith.andi %12, %6 : vector<256x1xi1>
    %14 = vector.broadcast %2 : i32 to vector<256x1xi32>
    %15 = arith.addi %4, %14 : vector<256x1xi32>
    %16 = arith.select %13, %15, %4 : vector<256x1xi1>, vector<256x1xi32>
    %c1_i32_3 = arith.constant 1 : i32
    %17 = vector.broadcast %c1_i32_3 : i32 to vector<256x1xi32>
    %18 = arith.cmpi sge, %16, %17 : vector<256x1xi32>
    %c14_i32 = arith.constant 14 : i32
    %19 = vector.broadcast %c14_i32 : i32 to vector<256x1xi32>
    %20 = arith.cmpi sle, %16, %19 : vector<256x1xi32>
    %c0 = arith.constant 0 : index
    %c15 = arith.constant 15 : index
    %c0_4 = arith.constant 0 : index
    %21 = vector.load %arg1[%c0, %c15, %c0_4] : memref<1x320x4xbf16, #tpu.memory_space<vmem>>, vector<1x256x4xbf16>
    %22 = vector.shape_cast %21 : vector<1x256x4xbf16> to vector<256x4xbf16>
    %c0_i32_5 = arith.constant 0 : i32
    %23 = arith.sitofp %c0_i32_5 : i32 to bf16
    %24 = vector.shape_cast %18 : vector<256x1xi1> to vector<256x1xi1>
    %25 = vector.broadcast %24 : vector<256x1xi1> to vector<256x4xi1>
    %26 = vector.broadcast %23 : bf16 to vector<256x4xbf16>
    %27 = arith.select %25, %22, %26 : vector<256x4xi1>, vector<256x4xbf16>
    %c0_6 = arith.constant 0 : index
    %c0_7 = arith.constant 0 : index
    %c0_8 = arith.constant 0 : index
    %28 = vector.load %arg2[%c0_6, %c0_7, %c0_8] : memref<9x4x128xbf16, #tpu.memory_space<vmem>>, vector<1x4x128xbf16>
    %29 = vector.shape_cast %28 : vector<1x4x128xbf16> to vector<4x128xbf16>
    %cst = arith.constant dense<0.000000e+00> : vector<256x128xf32>
    %30 = tpu.matmul %27, %29, %cst {dimension_numbers = #tpu.dot_dimension_numbers<[1], [0], [0], [1], [0, 0, 1, 1], [], []>} : vector<256x4xbf16>, vector<4x128xbf16>, vector<256x128xf32> -> vector<256x128xf32>
    %c0_9 = arith.constant 0 : index
    %c16 = arith.constant 16 : index
    %c0_10 = arith.constant 0 : index
    %31 = vector.load %arg1[%c0_9, %c16, %c0_10] : memref<1x320x4xbf16, #tpu.memory_space<vmem>>, vector<1x256x4xbf16>
    %32 = vector.shape_cast %31 : vector<1x256x4xbf16> to vector<256x4xbf16>
    %c1 = arith.constant 1 : index
    %c0_11 = arith.constant 0 : index
    %c0_12 = arith.constant 0 : index
    %33 = vector.load %arg2[%c1, %c0_11, %c0_12] : memref<9x4x128xbf16, #tpu.memory_space<vmem>>, vector<1x4x128xbf16>
    %34 = vector.shape_cast %33 : vector<1x4x128xbf16> to vector<4x128xbf16>
    %cst_13 = arith.constant dense<0.000000e+00> : vector<256x128xf32>
    %35 = tpu.matmul %32, %34, %cst_13 {dimension_numbers = #tpu.dot_dimension_numbers<[1], [0], [0], [1], [0, 0, 1, 1], [], []>} : vector<256x4xbf16>, vector<4x128xbf16>, vector<256x128xf32> -> vector<256x128xf32>
    %36 = arith.addf %30, %35 : vector<256x128xf32>
    %c0_14 = arith.constant 0 : index
    %c17 = arith.constant 17 : index
    %c0_15 = arith.constant 0 : index
    %37 = vector.load %arg1[%c0_14, %c17, %c0_15] : memref<1x320x4xbf16, #tpu.memory_space<vmem>>, vector<1x256x4xbf16>
    %38 = vector.shape_cast %37 : vector<1x256x4xbf16> to vector<256x4xbf16>
    %c0_i32_16 = arith.constant 0 : i32
    %39 = arith.sitofp %c0_i32_16 : i32 to bf16
    %40 = vector.shape_cast %20 : vector<256x1xi1> to vector<256x1xi1>
    %41 = vector.broadcast %40 : vector<256x1xi1> to vector<256x4xi1>
    %42 = vector.broadcast %39 : bf16 to vector<256x4xbf16>
    %43 = arith.select %41, %38, %42 : vector<256x4xi1>, vector<256x4xbf16>
    %c2 = arith.constant 2 : index
    %c0_17 = arith.constant 0 : index
    %c0_18 = arith.constant 0 : index
    %44 = vector.load %arg2[%c2, %c0_17, %c0_18] : memref<9x4x128xbf16, #tpu.memory_space<vmem>>, vector<1x4x128xbf16>
    %45 = vector.shape_cast %44 : vector<1x4x128xbf16> to vector<4x128xbf16>
    %cst_19 = arith.constant dense<0.000000e+00> : vector<256x128xf32>
    %46 = tpu.matmul %43, %45, %cst_19 {dimension_numbers = #tpu.dot_dimension_numbers<[1], [0], [0], [1], [0, 0, 1, 1], [], []>} : vector<256x4xbf16>, vector<4x128xbf16>, vector<256x128xf32> -> vector<256x128xf32>
    %47 = arith.addf %36, %46 : vector<256x128xf32>
    %c0_20 = arith.constant 0 : index
    %c31 = arith.constant 31 : index
    %c0_21 = arith.constant 0 : index
    %48 = vector.load %arg1[%c0_20, %c31, %c0_21] : memref<1x320x4xbf16, #tpu.memory_space<vmem>>, vector<1x256x4xbf16>
    %49 = vector.shape_cast %48 : vector<1x256x4xbf16> to vector<256x4xbf16>
    %c0_i32_22 = arith.constant 0 : i32
    %50 = arith.sitofp %c0_i32_22 : i32 to bf16
    %51 = vector.shape_cast %18 : vector<256x1xi1> to vector<256x1xi1>
    %52 = vector.broadcast %51 : vector<256x1xi1> to vector<256x4xi1>
    %53 = vector.broadcast %50 : bf16 to vector<256x4xbf16>
    %54 = arith.select %52, %49, %53 : vector<256x4xi1>, vector<256x4xbf16>
    %c3 = arith.constant 3 : index
    %c0_23 = arith.constant 0 : index
    %c0_24 = arith.constant 0 : index
    %55 = vector.load %arg2[%c3, %c0_23, %c0_24] : memref<9x4x128xbf16, #tpu.memory_space<vmem>>, vector<1x4x128xbf16>
    %56 = vector.shape_cast %55 : vector<1x4x128xbf16> to vector<4x128xbf16>
    %cst_25 = arith.constant dense<0.000000e+00> : vector<256x128xf32>
    %57 = tpu.matmul %54, %56, %cst_25 {dimension_numbers = #tpu.dot_dimension_numbers<[1], [0], [0], [1], [0, 0, 1, 1], [], []>} : vector<256x4xbf16>, vector<4x128xbf16>, vector<256x128xf32> -> vector<256x128xf32>
    %58 = arith.addf %47, %57 : vector<256x128xf32>
    %c0_26 = arith.constant 0 : index
    %c32 = arith.constant 32 : index
    %c0_27 = arith.constant 0 : index
    %59 = vector.load %arg1[%c0_26, %c32, %c0_27] : memref<1x320x4xbf16, #tpu.memory_space<vmem>>, vector<1x256x4xbf16>
    %60 = vector.shape_cast %59 : vector<1x256x4xbf16> to vector<256x4xbf16>
    %c4 = arith.constant 4 : index
    %c0_28 = arith.constant 0 : index
    %c0_29 = arith.constant 0 : index
    %61 = vector.load %arg2[%c4, %c0_28, %c0_29] : memref<9x4x128xbf16, #tpu.memory_space<vmem>>, vector<1x4x128xbf16>
    %62 = vector.shape_cast %61 : vector<1x4x128xbf16> to vector<4x128xbf16>
    %cst_30 = arith.constant dense<0.000000e+00> : vector<256x128xf32>
    %63 = tpu.matmul %60, %62, %cst_30 {dimension_numbers = #tpu.dot_dimension_numbers<[1], [0], [0], [1], [0, 0, 1, 1], [], []>} : vector<256x4xbf16>, vector<4x128xbf16>, vector<256x128xf32> -> vector<256x128xf32>
    %64 = arith.addf %58, %63 : vector<256x128xf32>
    %c0_31 = arith.constant 0 : index
    %c33 = arith.constant 33 : index
    %c0_32 = arith.constant 0 : index
    %65 = vector.load %arg1[%c0_31, %c33, %c0_32] : memref<1x320x4xbf16, #tpu.memory_space<vmem>>, vector<1x256x4xbf16>
    %66 = vector.shape_cast %65 : vector<1x256x4xbf16> to vector<256x4xbf16>
    %c0_i32_33 = arith.constant 0 : i32
    %67 = arith.sitofp %c0_i32_33 : i32 to bf16
    %68 = vector.shape_cast %20 : vector<256x1xi1> to vector<256x1xi1>
    %69 = vector.broadcast %68 : vector<256x1xi1> to vector<256x4xi1>
    %70 = vector.broadcast %67 : bf16 to vector<256x4xbf16>
    %71 = arith.select %69, %66, %70 : vector<256x4xi1>, vector<256x4xbf16>
    %c5 = arith.constant 5 : index
    %c0_34 = arith.constant 0 : index
    %c0_35 = arith.constant 0 : index
    %72 = vector.load %arg2[%c5, %c0_34, %c0_35] : memref<9x4x128xbf16, #tpu.memory_space<vmem>>, vector<1x4x128xbf16>
    %73 = vector.shape_cast %72 : vector<1x4x128xbf16> to vector<4x128xbf16>
    %cst_36 = arith.constant dense<0.000000e+00> : vector<256x128xf32>
    %74 = tpu.matmul %71, %73, %cst_36 {dimension_numbers = #tpu.dot_dimension_numbers<[1], [0], [0], [1], [0, 0, 1, 1], [], []>} : vector<256x4xbf16>, vector<4x128xbf16>, vector<256x128xf32> -> vector<256x128xf32>
    %75 = arith.addf %64, %74 : vector<256x128xf32>
    %c0_37 = arith.constant 0 : index
    %c47 = arith.constant 47 : index
    %c0_38 = arith.constant 0 : index
    %76 = vector.load %arg1[%c0_37, %c47, %c0_38] : memref<1x320x4xbf16, #tpu.memory_space<vmem>>, vector<1x256x4xbf16>
    %77 = vector.shape_cast %76 : vector<1x256x4xbf16> to vector<256x4xbf16>
    %c0_i32_39 = arith.constant 0 : i32
    %78 = arith.sitofp %c0_i32_39 : i32 to bf16
    %79 = vector.shape_cast %18 : vector<256x1xi1> to vector<256x1xi1>
    %80 = vector.broadcast %79 : vector<256x1xi1> to vector<256x4xi1>
    %81 = vector.broadcast %78 : bf16 to vector<256x4xbf16>
    %82 = arith.select %80, %77, %81 : vector<256x4xi1>, vector<256x4xbf16>
    %c6 = arith.constant 6 : index
    %c0_40 = arith.constant 0 : index
    %c0_41 = arith.constant 0 : index
    %83 = vector.load %arg2[%c6, %c0_40, %c0_41] : memref<9x4x128xbf16, #tpu.memory_space<vmem>>, vector<1x4x128xbf16>
    %84 = vector.shape_cast %83 : vector<1x4x128xbf16> to vector<4x128xbf16>
    %cst_42 = arith.constant dense<0.000000e+00> : vector<256x128xf32>
    %85 = tpu.matmul %82, %84, %cst_42 {dimension_numbers = #tpu.dot_dimension_numbers<[1], [0], [0], [1], [0, 0, 1, 1], [], []>} : vector<256x4xbf16>, vector<4x128xbf16>, vector<256x128xf32> -> vector<256x128xf32>
    %86 = arith.addf %75, %85 : vector<256x128xf32>
    %c0_43 = arith.constant 0 : index
    %c48 = arith.constant 48 : index
    %c0_44 = arith.constant 0 : index
    %87 = vector.load %arg1[%c0_43, %c48, %c0_44] : memref<1x320x4xbf16, #tpu.memory_space<vmem>>, vector<1x256x4xbf16>
    %88 = vector.shape_cast %87 : vector<1x256x4xbf16> to vector<256x4xbf16>
    %c7 = arith.constant 7 : index
    %c0_45 = arith.constant 0 : index
    %c0_46 = arith.constant 0 : index
    %89 = vector.load %arg2[%c7, %c0_45, %c0_46] : memref<9x4x128xbf16, #tpu.memory_space<vmem>>, vector<1x4x128xbf16>
    %90 = vector.shape_cast %89 : vector<1x4x128xbf16> to vector<4x128xbf16>
    %cst_47 = arith.constant dense<0.000000e+00> : vector<256x128xf32>
    %91 = tpu.matmul %88, %90, %cst_47 {dimension_numbers = #tpu.dot_dimension_numbers<[1], [0], [0], [1], [0, 0, 1, 1], [], []>} : vector<256x4xbf16>, vector<4x128xbf16>, vector<256x128xf32> -> vector<256x128xf32>
    %92 = arith.addf %86, %91 : vector<256x128xf32>
    %c0_48 = arith.constant 0 : index
    %c49 = arith.constant 49 : index
    %c0_49 = arith.constant 0 : index
    %93 = vector.load %arg1[%c0_48, %c49, %c0_49] : memref<1x320x4xbf16, #tpu.memory_space<vmem>>, vector<1x256x4xbf16>
    %94 = vector.shape_cast %93 : vector<1x256x4xbf16> to vector<256x4xbf16>
    %c0_i32_50 = arith.constant 0 : i32
    %95 = arith.sitofp %c0_i32_50 : i32 to bf16
    %96 = vector.shape_cast %20 : vector<256x1xi1> to vector<256x1xi1>
    %97 = vector.broadcast %96 : vector<256x1xi1> to vector<256x4xi1>
    %98 = vector.broadcast %95 : bf16 to vector<256x4xbf16>
    %99 = arith.select %97, %94, %98 : vector<256x4xi1>, vector<256x4xbf16>
    %c8 = arith.constant 8 : index
    %c0_51 = arith.constant 0 : index
    %c0_52 = arith.constant 0 : index
    %100 = vector.load %arg2[%c8, %c0_51, %c0_52] : memref<9x4x128xbf16, #tpu.memory_space<vmem>>, vector<1x4x128xbf16>
    %101 = vector.shape_cast %100 : vector<1x4x128xbf16> to vector<4x128xbf16>
    %cst_53 = arith.constant dense<0.000000e+00> : vector<256x128xf32>
    %102 = tpu.matmul %99, %101, %cst_53 {dimension_numbers = #tpu.dot_dimension_numbers<[1], [0], [0], [1], [0, 0, 1, 1], [], []>} : vector<256x4xbf16>, vector<4x128xbf16>, vector<256x128xf32> -> vector<256x128xf32>
    %103 = arith.addf %92, %102 : vector<256x128xf32>
    %c0_54 = arith.constant 0 : index
    %c0_55 = arith.constant 0 : index
    %104 = vector.load %arg3[%c0_54, %c0_55] : memref<1x128xf32, #tpu.memory_space<vmem>>, vector<1x128xf32>
    %105 = vector.broadcast %104 : vector<1x128xf32> to vector<256x128xf32>
    %106 = arith.addf %103, %105 : vector<256x128xf32>
    %cst_56 = arith.constant 0.000000e+00 : f32
    %107 = vector.broadcast %cst_56 : f32 to vector<256x128xf32>
    %108 = arith.maximumf %106, %107 : vector<256x128xf32>
    %cst_57 = arith.constant dense<0.000000e+00> : vector<128xf32>
    %109 = vector.multi_reduction <add>, %108, %cst_57 [0] : vector<256x128xf32> to vector<128xf32>
    %110 = vector.shape_cast %109 : vector<128xf32> to vector<1x128xf32>
    %cst_58 = arith.constant 2.560000e+02 : f32
    %111 = vector.broadcast %cst_58 : f32 to vector<1x128xf32>
    %112 = arith.divf %110, %111 : vector<1x128xf32>
    %c0_59 = arith.constant 0 : index
    %c0_60 = arith.constant 0 : index
    %c0_61 = arith.constant 0 : index
    %113 = vector.load %arg4[%c0_59, %c0_60, %c0_61] : memref<1x1x128xf32, #tpu.memory_space<vmem>>, vector<1x1x128xf32>
    %114 = vector.shape_cast %113 : vector<1x1x128xf32> to vector<1x128xf32>
    %115 = vector.shape_cast %112 : vector<1x128xf32> to vector<1x1x128xf32>
    tpu.vector_store %arg4[%c0_59, %c0_60, %c0_61], %115 {strides = array<i32>} : memref<1x1x128xf32, #tpu.memory_space<vmem>>, vector<1x1x128xf32>,
    return
  }
  func.func @transform_0(%arg0: i32) -> (i32, i32, i32) {
    %c0_i32 = arith.constant 0 : i32
    %c0_i32_0 = arith.constant 0 : i32
    %c0_i32_1 = arith.constant 0 : i32
    return %arg0, %c0_i32, %c0_i32_0 : i32, i32, i32
  }
  func.func @transform_1(%arg0: i32) -> (i32, i32, i32) {
    %c0_i32 = arith.constant 0 : i32
    %c0_i32_0 = arith.constant 0 : i32
    %c0_i32_1 = arith.constant 0 : i32
    %c0_i32_2 = arith.constant 0 : i32
    return %c0_i32, %c0_i32_0, %c0_i32_1 : i32, i32, i32
  }
  func.func @transform_2(%arg0: i32) -> (i32, i32) {
    %c0_i32 = arith.constant 0 : i32
    %c0_i32_0 = arith.constant 0 : i32
    %c0_i32_1 = arith.constant 0 : i32
    return %c0_i32, %c0_i32_0 : i32, i32
  }
  func.func @transform_3(%arg0: i32) -> (i32, i32, i32) {
    %c0_i32 = arith.constant 0 : i32
    %c0_i32_0 = arith.constant 0 : i32
    %c0_i32_1 = arith.constant 0 : i32
    return %arg0, %c0_i32, %c0_i32_0 : i32, i32, i32
  }
}

module attributes {stable_mosaic.version = 11 : i64} {
  func.func @_fc_kernel(%arg0: memref<2x128xf32, #tpu.memory_space<vmem>>, %arg1: memref<128x128xf32, #tpu.memory_space<vmem>>, %arg2: memref<1x128xf32, #tpu.memory_space<vmem>>, %arg3: memref<2x128xf32, #tpu.memory_space<vmem>>) attributes {dimension_semantics = [], scalar_prefetch = 0 : i64, scratch_operands = 0 : i64, tpu.core_type = #tpu.core_type<tc>} {
    %c0 = arith.constant 0 : index
    %c0_0 = arith.constant 0 : index
    %0 = vector.load %arg0[%c0, %c0_0] : memref<2x128xf32, #tpu.memory_space<vmem>>, vector<2x128xf32>
    %c0_1 = arith.constant 0 : index
    %c0_2 = arith.constant 0 : index
    %1 = vector.load %arg1[%c0_1, %c0_2] : memref<128x128xf32, #tpu.memory_space<vmem>>, vector<128x128xf32>
    %cst = arith.constant dense<0.000000e+00> : vector<2x128xf32>
    %2 = tpu.matmul %0, %1, %cst {dimension_numbers = #tpu.dot_dimension_numbers<[1], [0], [0], [1], [0, 0, 1, 1], [], []>} : vector<2x128xf32>, vector<128x128xf32>, vector<2x128xf32> -> vector<2x128xf32>
    %c0_3 = arith.constant 0 : index
    %c0_4 = arith.constant 0 : index
    %3 = vector.load %arg2[%c0_3, %c0_4] : memref<1x128xf32, #tpu.memory_space<vmem>>, vector<1x128xf32>
    %4 = vector.broadcast %3 : vector<1x128xf32> to vector<2x128xf32>
    %5 = arith.addf %2, %4 : vector<2x128xf32>
    %c0_5 = arith.constant 0 : index
    %c0_6 = arith.constant 0 : index
    %6 = vector.load %arg3[%c0_5, %c0_6] : memref<2x128xf32, #tpu.memory_space<vmem>>, vector<2x128xf32>
    tpu.vector_store %arg3[%c0_5, %c0_6], %5 {strides = array<i32>} : memref<2x128xf32, #tpu.memory_space<vmem>>, vector<2x128xf32>,
    return
  }
}

</mosaic_0001>

<llo_original>
// kernel: encoder_image_forward.3
$region0: #{encoder_image_forward.3}
  #allocation0 [shape = 'u32[]', space=smem, size = 0x4, offset = 0x4, fixed_abs, tag = 'smem constant byte address 0x4 - core index']
  #allocation1 [shape = 'u32[144,128]{1,0:T(1,128)}', space=vmem, size = 0x12000, scoped, tag = 'internal scratch']
  %s0 = inlined_call_operand.vmem [shape: f32[2,128], index: 0, kind: input, shape index: {}]
  %s1 = inlined_call_operand.vmem [shape: f32[128,128], index: 1, kind: input, shape index: {}]
  %s2 = inlined_call_operand.vmem [shape: f32[1,128], index: 2, kind: input, shape index: {}]
  %s3 = inlined_call_operand.hbm [shape: f32[2,128], index: 3, kind: output, shape index: {}]
  %s4 = sld [smem:[#allocation0]]
  $region22: #{encoder_image_forward.3} parent=0
    _
  %s6 = ssub.s32 1, %s4
  %s7 = scalar_select 0, %s6, %s4
  $region1: #{encoder_image_forward.3} parent=0
    #allocation2 [shape = 'u8[1024]{0}', space=vmem, size = 0x400, scoped, tag = 'output window, operand 0, single buffered']
    #allocation3 [shape = 's32[1]{0}', space=sflag, size = 0x4, scoped, tag = 'scoped memory for encoder_image_forward.3']
    %8 = vsyncpa [#allocation3], 0
    // Predicated region
    $region2: #{encoder_image_forward.3} parent=1 // pred_check
      _
    $region3: #{encoder_image_forward.3} parent=1 // pred_check_branch
      %10 = sbr.rel (0) target = $region5
    $region4: #{encoder_image_forward.3} parent=1 // pred_region
      _
    $region5: #{encoder_image_forward.3} parent=1 // pred_fallthru
      _
    // Predicated region
    $region6: #{encoder_image_forward.3} parent=1 // pred_check
      _
    $region7: #{encoder_image_forward.3} parent=1 // pred_check_branch
      %12 = sbr.rel (0) target = $region9
    $region8: #{encoder_image_forward.3} parent=1 // pred_region
      _
    $region9: #{encoder_image_forward.3} parent=1 // pred_fallthru
      _
    // Predicated region
    $region10: #{encoder_image_forward.3} parent=1 // pred_check
      _
    $region11: #{encoder_image_forward.3} parent=1 // pred_check_branch
      %14 = sbr.rel (0) target = $region13
    $region12: #{encoder_image_forward.3} parent=1 // pred_region
      _
    $region13: #{encoder_image_forward.3} parent=1 // pred_fallthru
      _
    %v15 = vld [vmem:[%s0] sm:$0x3]
    %v16 = vld [vmem:[%s1] sm:$0xff]
    %v17 = vld [vmem:[%s1 + $0x8] sm:$0xff]
    %v18 = vld [vmem:[%s1 + $0x10] sm:$0xff]
    %v19 = vld [vmem:[%s1 + $0x18] sm:$0xff]
    %v20 = vld [vmem:[%s1 + $0x20] sm:$0xff]
    %v21 = vld [vmem:[%s1 + $0x28] sm:$0xff]
    %v22 = vld [vmem:[%s1 + $0x30] sm:$0xff]
    %v23 = vld [vmem:[%s1 + $0x38] sm:$0xff]
    %v24 = vld [vmem:[%s1 + $0x40] sm:$0xff]
    %v25 = vld [vmem:[%s1 + $0x48] sm:$0xff]
    %v26 = vld [vmem:[%s1 + $0x50] sm:$0xff]
    %v27 = vld [vmem:[%s1 + $0x58] sm:$0xff]
    %v28 = vld [vmem:[%s1 + $0x60] sm:$0xff]
    %v29 = vld [vmem:[%s1 + $0x68] sm:$0xff]
    %v30 = vld [vmem:[%s1 + $0x70] sm:$0xff]
    %v31 = vld [vmem:[%s1 + $0x78] sm:$0xff]
    %v32 = vld [vmem:[%s2] sm:$0x1]
    %v34 = vlaneseq
    %v35 = vshrl.u32 %v34, 7
    %v36 = vsub.s32 0, %v35
    %v37 = vrot.slane %v32, %v36
    %39 = vmatprep.subr.mxu0 0.0
    %40 = vmatpush1.msra.mxu0 %v31
    %41 = vmatprep.subr.mxu0 0.0
    %42 = vmatpush1.msra.mxu0 %v30
    %43 = vmatprep.subr.mxu0 0.0
    %44 = vmatpush1.msra.mxu0 %v29
    %45 = vmatprep.subr.mxu0 0.0
    %46 = vmatpush1.msra.mxu0 %v28
    %47 = vmatprep.subr.mxu0 0.0
    %48 = vmatpush1.msra.mxu0 %v27
    %49 = vmatprep.subr.mxu0 0.0
    %50 = vmatpush1.msra.mxu0 %v26
    %51 = vmatprep.subr.mxu0 0.0
    %52 = vmatpush1.msra.mxu0 %v25
    %53 = vmatprep.subr.mxu0 0.0
    %54 = vmatpush1.msra.mxu0 %v24
    %55 = vmatprep.subr.mxu0 0.0
    %56 = vmatpush1.msra.mxu0 %v23
    %57 = vmatprep.subr.mxu0 0.0
    %58 = vmatpush1.msra.mxu0 %v22
    %59 = vmatprep.subr.mxu0 0.0
    %60 = vmatpush1.msra.mxu0 %v21
    %61 = vmatprep.subr.mxu0 0.0
    %62 = vmatpush1.msra.mxu0 %v20
    %63 = vmatprep.subr.mxu0 0.0
    %64 = vmatpush1.msra.mxu0 %v19
    %65 = vmatprep.subr.mxu0 0.0
    %66 = vmatpush1.msra.mxu0 %v18
    %67 = vmatprep.subr.mxu0 0.0
    %68 = vmatpush1.msra.mxu0 %v17
    %69 = vmatprep.subr.mxu0 0.0
    %70 = vmatpush1.msra.mxu0 %v16
    %71 = vmatprep.subr.mxu0 0.0
    %72 = vmatpush2.msra.mxu0 0.0
    %73 = vmatprep.subr.mxu0 0.0
    %74 = vmatpush2.msra.mxu0 0.0
    %75 = vmatprep.subr.mxu0 0.0
    %76 = vmatpush2.msra.mxu0 0.0
    %77 = vmatprep.subr.mxu0 0.0
    %78 = vmatpush2.msra.mxu0 0.0
    %79 = vmatprep.subr.mxu0 0.0
    %80 = vmatpush2.msra.mxu0 0.0
    %81 = vmatprep.subr.mxu0 0.0
    %82 = vmatpush2.msra.mxu0 0.0
    %83 = vmatprep.subr.mxu0 0.0
    %84 = vmatpush2.msra.mxu0 0.0
    %85 = vmatprep.subr.mxu0 0.0
    %86 = vmatpush2.msra.mxu0 0.0
    %87 = vmatprep.subr.mxu0 0.0
    %88 = vmatpush2.msra.mxu0 0.0
    %89 = vmatprep.subr.mxu0 0.0
    %90 = vmatpush2.msra.mxu0 0.0
    %91 = vmatprep.subr.mxu0 0.0
    %92 = vmatpush2.msra.mxu0 0.0
    %93 = vmatprep.subr.mxu0 0.0
    %94 = vmatpush2.msra.mxu0 0.0
    %95 = vmatprep.subr.mxu0 0.0
    %96 = vmatpush2.msra.mxu0 0.0
    %97 = vmatprep.subr.mxu0 0.0
    %98 = vmatpush2.msra.mxu0 0.0
    %99 = vmatprep.subr.mxu0 0.0
    %100 = vmatpush2.msra.mxu0 0.0
    %101 = vmatprep.subr.mxu0 0.0
    %102 = vmatpush2.msra.mxu0 0.0
    %103 = vmatprep.mubr.f32.mxu0 0.0
    %104 = vmatmul.mubr.f32.gmra.mxu0 %v15
    %v105 = vpop.f32.mrf.mxu0
    %v106 = vadd.f32 %v37, %v105
    %v107 = vpop.f32.mrf.mxu0
    %108 = vdwg.mxu0
    %109 = vst [vmem:[#allocation2] sm:$0x3] %v106
    // Predicated region
    $region14: #{encoder_image_forward.3} parent=1 // pred_check
      _
    $region15: #{encoder_image_forward.3} parent=1 // pred_check_branch
      %111 = sbr.rel (0) target = $region17
    $region16: #{encoder_image_forward.3} parent=1 // pred_region
      %s113 = ssub.s32 32, 32
      %114 = vsyncadd [#allocation3], %s113
      %s116 = sshll.u32 [#allocation2], 4
      %s117 = int_to_ptr.vmem [resolvable:$true] %s116
      %119 = dma.vmem_to_hbm [thread:$0]  %s117, 32, %s3, [#allocation3]
    $region17: #{encoder_image_forward.3} parent=1 // pred_fallthru
      _
    // Predicated region
    $region18: #{encoder_image_forward.3} parent=1 // pred_check
      _
    $region19: #{encoder_image_forward.3} parent=1 // pred_check_branch
      %121 = sbr.rel (0) target = $region21
    $region20: #{encoder_image_forward.3} parent=1 // pred_region
      %122 = dma.done [#allocation3], 32
    $region21: #{encoder_image_forward.3} parent=1 // pred_fallthru
      _
    %123 = vsyncpa [#allocation3], 1

// kernel: encoder_image_forward.2
$region0: #{encoder_image_forward.2}
  #allocation0 [shape = 'u32[]', space=smem, size = 0x4, offset = 0x4, fixed_abs, tag = 'smem constant byte address 0x4 - core index']
  #allocation1 [shape = 'u32[144,128]{1,0:T(1,128)}', space=vmem, size = 0x12000, scoped, tag = 'internal scratch']
  %s0 = inlined_call_operand.vmem [shape: bf16[2,320,4], index: 0, kind: input, shape index: {}]
  %s1 = inlined_call_operand.vmem [shape: bf16[9,4,128], index: 1, kind: input, shape index: {}]
  %s2 = inlined_call_operand.vmem [shape: f32[1,128], index: 2, kind: input, shape index: {}]
  %s3 = inlined_call_operand.vmem [shape: f32[2,1,128], index: 3, kind: output, shape index: {}]
  %s4 = sld [smem:[#allocation0]]
  $region45: #{encoder_image_forward.2} parent=0
    _
  %s6 = ssub.s32 1, %s4
  %s7 = scalar_select 0, %s6, %s4
  loop: start=0, step=1, limit=4
  $region2: #{encoder_image_forward.2} parent=0 // loop_pre_header
    _
  $region3: #{encoder_image_forward.2} parent=0 // loop_header
    %s9 = sphi 0, %s13
    %p10 = scmp.ge.s32.totalorder %s9, 4
    %s19 = sphi 0, %s21
    %s22 = sphi 0, %s19
    %s23 = sphi 0, %s22
    %s39 = sphi 0, %s23
    %s43 = sphi 0, %s43
    %s45 = sphi 0, %s43
    %s46 = sphi 0, %s45
    %s60 = sphi 0, %s46
    %s64 = sphi 0, %s64
    %s66 = sphi 0, %s64
    %s67 = sphi 0, %s66
    %s81 = sphi 0, %s67
    %s87 = sphi 0, %s89
    %s90 = sphi 0, %s87
    %s91 = sphi 0, %s90
    %s107 = sphi 0, %s91
  $region4: #{encoder_image_forward.2} parent=0 // loop_header_branch
    %12 = sbr.rel (%p10) target = $region8
  $region5: #{encoder_image_forward.2} parent=0 // loop_body
    %s14 = ssub.s32 %s9, 1
    %s15 = ssub.s32 %s9, 2
    %s16 = sadd.s32 %s9, 1
    %s17 = ssub.s32 %s9, %s16
    %p18 = scmp.eq.s32.totalorder %s17, 0
    %s20 = sadd.s32 %s19, 1
    %s21 = scalar_select %p18, %s19, %s20
    %p24 = pneg %p18
    %p25 = scmp.eq.s32.totalorder %s9, 1
    %p26 = por %p24, %p25
    %p27 = scmp.ne.s32.totalorder %s19, %s22
    %p28 = scmp.eq.s32.totalorder %s9, 0
    %p29 = por %p27, %p28
    %p30 = scmp.ne.s32.totalorder %s19, %s22
    %p31 = scmp.eq.s32.totalorder %s14, 1
    %p32 = por %p30, %p31
    %p33 = scmp.ne.s32.totalorder %s22, %s23
    %p34 = scmp.eq.s32.totalorder %s14, 0
    %p35 = por %p33, %p34
    %p36 = scmp.ne.s32.totalorder %s22, %s23
    %p37 = scmp.eq.s32.totalorder %s15, 1
    %p38 = por %p36, %p37
    %p40 = scmp.ne.s32.totalorder %s23, %s39
    %p41 = scmp.eq.s32.totalorder %s15, 0
    %p42 = por %p40, %p41
    %s44 = sadd.s32 %s43, 1
    %p47 = scmp.eq.s32.totalorder %s9, 1
    %p48 = scmp.ne.s32.totalorder %s43, %s45
    %p49 = scmp.eq.s32.totalorder %s9, 0
    %p50 = por %p48, %p49
    %p51 = scmp.ne.s32.totalorder %s43, %s45
    %p52 = scmp.eq.s32.totalorder %s14, 1
    %p53 = por %p51, %p52
    %p54 = scmp.ne.s32.totalorder %s45, %s46
    %p55 = scmp.eq.s32.totalorder %s14, 0
    %p56 = por %p54, %p55
    %p57 = scmp.ne.s32.totalorder %s45, %s46
    %p58 = scmp.eq.s32.totalorder %s15, 1
    %p59 = por %p57, %p58
    %p61 = scmp.ne.s32.totalorder %s46, %s60
    %p62 = scmp.eq.s32.totalorder %s15, 0
    %p63 = por %p61, %p62
    %s65 = sadd.s32 %s64, 1
    %p68 = scmp.eq.s32.totalorder %s9, 1
    %p69 = scmp.ne.s32.totalorder %s64, %s66
    %p70 = scmp.eq.s32.totalorder %s9, 0
    %p71 = por %p69, %p70
    %p72 = scmp.ne.s32.totalorder %s64, %s66
    %p73 = scmp.eq.s32.totalorder %s14, 1
    %p74 = por %p72, %p73
    %p75 = scmp.ne.s32.totalorder %s66, %s67
    %p76 = scmp.eq.s32.totalorder %s14, 0
    %p77 = por %p75, %p76
    %p78 = scmp.ne.s32.totalorder %s66, %s67
    %p79 = scmp.eq.s32.totalorder %s15, 1
    %p80 = por %p78, %p79
    %p82 = scmp.ne.s32.totalorder %s67, %s81
    %p83 = scmp.eq.s32.totalorder %s15, 0
    %p84 = por %p82, %p83
    %s85 = ssub.s32 %s9, %s16
    %p86 = scmp.eq.s32.totalorder %s85, 0
    %s88 = sadd.s32 %s87, 1
    %s89 = scalar_select %p86, %s87, %s88
    %p92 = pneg %p86
    %p93 = scmp.eq.s32.totalorder %s9, 1
    %p94 = por %p92, %p93
    %p95 = scmp.ne.s32.totalorder %s87, %s90
    %p96 = scmp.eq.s32.totalorder %s9, 0
    %p97 = por %p95, %p96
    %p98 = scmp.ne.s32.totalorder %s87, %s90
    %p99 = scmp.eq.s32.totalorder %s14, 1
    %p100 = por %p98, %p99
    %p101 = scmp.ne.s32.totalorder %s90, %s91
    %p102 = scmp.eq.s32.totalorder %s14, 0
    %p103 = por %p101, %p102
    %p104 = scmp.ne.s32.totalorder %s90, %s91
    %p105 = scmp.eq.s32.totalorder %s15, 1
    %p106 = por %p104, %p105
    %p108 = scmp.ne.s32.totalorder %s91, %s107
    %p109 = scmp.eq.s32.totalorder %s15, 0
    %p110 = por %p108, %p109
    %p111 = scmp.le.s32.totalorder 1, %s9
    %p112 = scmp.lt.s32.totalorder %s9, 3
    %p113 = pnand %p111, %p112
    %p114 = pneg %p113
    // Predicated region
    $region9: #{encoder_image_forward.2} parent=5 // pred_check
      _
    $region10: #{encoder_image_forward.2} parent=5 // pred_check_branch
      %116 = sbr.rel (%p113) target = $region12
    $region11: #{encoder_image_forward.2} parent=5 // pred_region
      %s117 = ssub.s32 %s9, 1
      // Predicated region
      $region13: #{encoder_image_forward.2} parent=11 // pred_check
        %p118 = pneg %p56
      $region14: #{encoder_image_forward.2} parent=11 // pred_check_branch
        %120 = sbr.rel (%p118) target = $region16
      $region15: #{encoder_image_forward.2} parent=11 // pred_region
        _
      $region16: #{encoder_image_forward.2} parent=11 // pred_fallthru
        _
      // Predicated region
      $region17: #{encoder_image_forward.2} parent=11 // pred_check
        %p121 = pneg %p77
      $region18: #{encoder_image_forward.2} parent=11 // pred_check_branch
        %123 = sbr.rel (%p121) target = $region20
      $region19: #{encoder_image_forward.2} parent=11 // pred_region
        _
      $region20: #{encoder_image_forward.2} parent=11 // pred_fallthru
        _
    $region12: #{encoder_image_forward.2} parent=5 // pred_fallthru
      _
    %p124 = scmp.lt.s32.totalorder %s9, 2
    // Predicated region
    $region21: #{encoder_image_forward.2} parent=5 // pred_check
      %p125 = pneg %p124
    $region22: #{encoder_image_forward.2} parent=5 // pred_check_branch
      %127 = sbr.rel (%p125) target = $region24
    $region23: #{encoder_image_forward.2} parent=5 // pred_region
      // Predicated region
      $region25: #{encoder_image_forward.2} parent=23 // pred_check
        %p128 = pneg %p29
      $region26: #{encoder_image_forward.2} parent=23 // pred_check_branch
        %130 = sbr.rel (%p128) target = $region28
      $region27: #{encoder_image_forward.2} parent=23 // pred_region
        %p131 = scmp.lt.s32.totalorder %s9, 1
        %s132 = scalar_select %p131, %s9, 1
        %s133 = smul.addr %s132, 40
        %s134 = smul.addr %s133, 4
        %s135 = scalar_lea.vmem %s0, %s134
      $region28: #{encoder_image_forward.2} parent=23 // pred_fallthru
        _
    $region24: #{encoder_image_forward.2} parent=5 // pred_fallthru
      _
    %p136 = scmp.le.s32.totalorder 1, %s9
    %p137 = scmp.lt.s32.totalorder %s9, 3
    %p138 = pnand %p136, %p137
    %p139 = pneg %p138
    // Predicated region
    $region29: #{encoder_image_forward.2} parent=5 // pred_check
      _
    $region30: #{encoder_image_forward.2} parent=5 // pred_check_branch
      %141 = sbr.rel (%p138) target = $region32
    $region31: #{encoder_image_forward.2} parent=5 // pred_region
      %s142 = ssub.s32 %s9, 1
      %p143 = scmp.lt.s32.totalorder %s14, 1
      %s144 = scalar_select %p143, %s14, 1
      %s145 = smul.addr %s144, 40
      %s146 = smul.addr %s145, 4
      %s147 = scalar_lea.vmem %s0, %s146
      %p148 = pneg %p35
      %p149 = pneg %p32
      %p150 = pneg %p56
      %p151 = pneg %p53
      %p152 = pneg %p77
      %p153 = pneg %p74
      %p154 = pneg %p103
      %p155 = pneg %p100
      %p156 = scmp.lt.s32.totalorder %s14, 1
      %s157 = scalar_select %p156, %s14, 1
      %s158 = scalar_lea.vmem %s3, %s157
      %p159 = scmp.lt.s32.totalorder %s14, 1
      %s160 = scalar_select %p159, %s14, 1
      %s161 = smul.addr %s160, 40
      %s162 = smul.addr %s161, 4
      %s163 = scalar_lea.vmem %s0, %s162
      %p164 = scmp.lt.s32.totalorder %s14, 1
      %s165 = scalar_select %p164, %s14, 1
      %s166 = scalar_lea.vmem %s3, %s165
      %v170 = vlaneseq
      %v171 = vshrl.u32 %v170, 7
      %v172 = vadd.s32 %v171, 8
      %v173 = vadd.s32 %v171, 16
      %v174 = vadd.s32 %v171, 24
      %v175 = vadd.s32 %v171, 32
      %v176 = vadd.s32 %v171, 40
      %v177 = vadd.s32 %v171, 48
      %v178 = vadd.s32 %v171, 56
      %v179 = vadd.s32 %v171, 64
      %v180 = vadd.s32 %v171, 72
      %v181 = vadd.s32 %v171, 80
      %v182 = vadd.s32 %v171, 88
      %v183 = vadd.s32 %v171, 96
      %v184 = vadd.s32 %v171, 104
      %v185 = vadd.s32 %v171, 112
      %v186 = vadd.s32 %v171, 120
      %v187 = vadd.s32 %v171, 128
      %v188 = vadd.s32 %v171, 136
      %v189 = vadd.s32 %v171, 144
      %v190 = vadd.s32 %v171, 152
      %v191 = vadd.s32 %v171, 160
      %v192 = vadd.s32 %v171, 168
      %v193 = vadd.s32 %v171, 176
      %v194 = vadd.s32 %v171, 184
      %v195 = vadd.s32 %v171, 192
      %v196 = vadd.s32 %v171, 200
      %v197 = vadd.s32 %v171, 208
      %v198 = vadd.s32 %v171, 216
      %v199 = vadd.s32 %v171, 224
      %v200 = vadd.s32 %v171, 232
      %v201 = vadd.s32 %v171, 240
      %v202 = vadd.s32 %v171, 248
      %vm203 = vcmp.lt.s32.totalorder %v171, 0
      %v204 = vsub.s32 0, %v171
      %v205 = vsel %vm203, %v204, %v171
      %v206 = vshrl.u32 %v205, 4
      %v207 = vand.u32 %v205, 15
      %v208 = vsub.s32 0, %v207
      %v209 = vsel %vm203, %v208, %v207
      %vm210 = vcmp.lt.s32.totalorder %v172, 0
      %v211 = vsub.s32 0, %v172
      %v212 = vsel %vm210, %v211, %v172
      %v213 = vshrl.u32 %v212, 4
      %v214 = vand.u32 %v212, 15
      %v215 = vsub.s32 0, %v214
      %v216 = vsel %vm210, %v215, %v214
      %vm217 = vcmp.lt.s32.totalorder %v173, 0
      %v218 = vsub.s32 0, %v173
      %v219 = vsel %vm217, %v218, %v173
      %v220 = vshrl.u32 %v219, 4
      %v221 = vand.u32 %v219, 15
      %v222 = vsub.s32 0, %v221
      %v223 = vsel %vm217, %v222, %v221
      %vm224 = vcmp.lt.s32.totalorder %v174, 0
      %v225 = vsub.s32 0, %v174
      %v226 = vsel %vm224, %v225, %v174
      %v227 = vshrl.u32 %v226, 4
      %v228 = vand.u32 %v226, 15
      %v229 = vsub.s32 0, %v228
      %v230 = vsel %vm224, %v229, %v228
      %vm231 = vcmp.lt.s32.totalorder %v175, 0
      %v232 = vsub.s32 0, %v175
      %v233 = vsel %vm231, %v232, %v175
      %v234 = vshrl.u32 %v233, 4
      %v235 = vand.u32 %v233, 15
      %v236 = vsub.s32 0, %v235
      %v237 = vsel %vm231, %v236, %v235
      %vm238 = vcmp.lt.s32.totalorder %v176, 0
      %v239 = vsub.s32 0, %v176
      %v240 = vsel %vm238, %v239, %v176
      %v241 = vshrl.u32 %v240, 4
      %v242 = vand.u32 %v240, 15
      %v243 = vsub.s32 0, %v242
      %v244 = vsel %vm238, %v243, %v242
      %vm245 = vcmp.lt.s32.totalorder %v177, 0
      %v246 = vsub.s32 0, %v177
      %v247 = vsel %vm245, %v246, %v177
      %v248 = vshrl.u32 %v247, 4
      %v249 = vand.u32 %v247, 15
      %v250 = vsub.s32 0, %v249
      %v251 = vsel %vm245, %v250, %v249
      %vm252 = vcmp.lt.s32.totalorder %v178, 0
      %v253 = vsub.s32 0, %v178
      %v254 = vsel %vm252, %v253, %v178
      %v255 = vshrl.u32 %v254, 4
      %v256 = vand.u32 %v254, 15
      %v257 = vsub.s32 0, %v256
      %v258 = vsel %vm252, %v257, %v256
      %vm259 = vcmp.lt.s32.totalorder %v179, 0
      %v260 = vsub.s32 0, %v179
      %v261 = vsel %vm259, %v260, %v179
      %v262 = vshrl.u32 %v261, 4
      %v263 = vand.u32 %v261, 15
      %v264 = vsub.s32 0, %v263
      %v265 = vsel %vm259, %v264, %v263
      %vm266 = vcmp.lt.s32.totalorder %v180, 0
      %v267 = vsub.s32 0, %v180
      %v268 = vsel %vm266, %v267, %v180
      %v269 = vshrl.u32 %v268, 4
      %v270 = vand.u32 %v268, 15
      %v271 = vsub.s32 0, %v270
      %v272 = vsel %vm266, %v271, %v270
      %vm273 = vcmp.lt.s32.totalorder %v181, 0
      %v274 = vsub.s32 0, %v181
      %v275 = vsel %vm273, %v274, %v181
      %v276 = vshrl.u32 %v275, 4
      %v277 = vand.u32 %v275, 15
      %v278 = vsub.s32 0, %v277
      %v279 = vsel %vm273, %v278, %v277
      %vm280 = vcmp.lt.s32.totalorder %v182, 0
      %v281 = vsub.s32 0, %v182
      %v282 = vsel %vm280, %v281, %v182
      %v283 = vshrl.u32 %v282, 4
      %v284 = vand.u32 %v282, 15
      %v285 = vsub.s32 0, %v284
      %v286 = vsel %vm280, %v285, %v284
      %vm287 = vcmp.lt.s32.totalorder %v183, 0
      %v288 = vsub.s32 0, %v183
      %v289 = vsel %vm287, %v288, %v183
      %v290 = vshrl.u32 %v289, 4
      %v291 = vand.u32 %v289, 15
      %v292 = vsub.s32 0, %v291
      %v293 = vsel %vm287, %v292, %v291
      %vm294 = vcmp.lt.s32.totalorder %v184, 0
      %v295 = vsub.s32 0, %v184
      %v296 = vsel %vm294, %v295, %v184
      %v297 = vshrl.u32 %v296, 4
      %v298 = vand.u32 %v296, 15
      %v299 = vsub.s32 0, %v298
      %v300 = vsel %vm294, %v299, %v298
      %vm301 = vcmp.lt.s32.totalorder %v185, 0
      %v302 = vsub.s32 0, %v185
      %v303 = vsel %vm301, %v302, %v185
      %v304 = vshrl.u32 %v303, 4
      %v305 = vand.u32 %v303, 15
      %v306 = vsub.s32 0, %v305
      %v307 = vsel %vm301, %v306, %v305
      %vm308 = vcmp.lt.s32.totalorder %v186, 0
      %v309 = vsub.s32 0, %v186
      %v310 = vsel %vm308, %v309, %v186
      %v311 = vshrl.u32 %v310, 4
      %v312 = vand.u32 %v310, 15
      %v313 = vsub.s32 0, %v312
      %v314 = vsel %vm308, %v313, %v312
      %vm315 = vcmp.lt.s32.totalorder %v187, 0
      %v316 = vsub.s32 0, %v187
      %v317 = vsel %vm315, %v316, %v187
      %v318 = vshrl.u32 %v317, 4
      %v319 = vand.u32 %v317, 15
      %v320 = vsub.s32 0, %v319
      %v321 = vsel %vm315, %v320, %v319
      %vm322 = vcmp.lt.s32.totalorder %v188, 0
      %v323 = vsub.s32 0, %v188
      %v324 = vsel %vm322, %v323, %v188
      %v325 = vshrl.u32 %v324, 4
      %v326 = vand.u32 %v324, 15
      %v327 = vsub.s32 0, %v326
      %v328 = vsel %vm322, %v327, %v326
      %vm329 = vcmp.lt.s32.totalorder %v189, 0
      %v330 = vsub.s32 0, %v189
      %v331 = vsel %vm329, %v330, %v189
      %v332 = vshrl.u32 %v331, 4
      %v333 = vand.u32 %v331, 15
      %v334 = vsub.s32 0, %v333
      %v335 = vsel %vm329, %v334, %v333
      %vm336 = vcmp.lt.s32.totalorder %v190, 0
      %v337 = vsub.s32 0, %v190
      %v338 = vsel %vm336, %v337, %v190
      %v339 = vshrl.u32 %v338, 4
      %v340 = vand.u32 %v338, 15
      %v341 = vsub.s32 0, %v340
      %v342 = vsel %vm336, %v341, %v340
      %vm343 = vcmp.lt.s32.totalorder %v191, 0
      %v344 = vsub.s32 0, %v191
      %v345 = vsel %vm343, %v344, %v191
      %v346 = vshrl.u32 %v345, 4
      %v347 = vand.u32 %v345, 15
      %v348 = vsub.s32 0, %v347
      %v349 = vsel %vm343, %v348, %v347
      %vm350 = vcmp.lt.s32.totalorder %v192, 0
      %v351 = vsub.s32 0, %v192
      %v352 = vsel %vm350, %v351, %v192
      %v353 = vshrl.u32 %v352, 4
      %v354 = vand.u32 %v352, 15
      %v355 = vsub.s32 0, %v354
      %v356 = vsel %vm350, %v355, %v354
      %vm357 = vcmp.lt.s32.totalorder %v193, 0
      %v358 = vsub.s32 0, %v193
      %v359 = vsel %vm357, %v358, %v193
      %v360 = vshrl.u32 %v359, 4
      %v361 = vand.u32 %v359, 15
      %v362 = vsub.s32 0, %v361
      %v363 = vsel %vm357, %v362, %v361
      %vm364 = vcmp.lt.s32.totalorder %v194, 0
      %v365 = vsub.s32 0, %v194
      %v366 = vsel %vm364, %v365, %v194
      %v367 = vshrl.u32 %v366, 4
      %v368 = vand.u32 %v366, 15
      %v369 = vsub.s32 0, %v368
      %v370 = vsel %vm364, %v369, %v368
      %vm371 = vcmp.lt.s32.totalorder %v195, 0
      %v372 = vsub.s32 0, %v195
      %v373 = vsel %vm371, %v372, %v195
      %v374 = vshrl.u32 %v373, 4
      %v375 = vand.u32 %v373, 15
      %v376 = vsub.s32 0, %v375
      %v377 = vsel %vm371, %v376, %v375
      %vm378 = vcmp.lt.s32.totalorder %v196, 0
      %v379 = vsub.s32 0, %v196
      %v380 = vsel %vm378, %v379, %v196
      %v381 = vshrl.u32 %v380, 4
      %v382 = vand.u32 %v380, 15
      %v383 = vsub.s32 0, %v382
      %v384 = vsel %vm378, %v383, %v382
      %vm385 = vcmp.lt.s32.totalorder %v197, 0
      %v386 = vsub.s32 0, %v197
      %v387 = vsel %vm385, %v386, %v197
      %v388 = vshrl.u32 %v387, 4
      %v389 = vand.u32 %v387, 15
      %v390 = vsub.s32 0, %v389
      %v391 = vsel %vm385, %v390, %v389
      %vm392 = vcmp.lt.s32.totalorder %v198, 0
      %v393 = vsub.s32 0, %v198
      %v394 = vsel %vm392, %v393, %v198
      %v395 = vshrl.u32 %v394, 4
      %v396 = vand.u32 %v394, 15
      %v397 = vsub.s32 0, %v396
      %v398 = vsel %vm392, %v397, %v396
      %vm399 = vcmp.lt.s32.totalorder %v199, 0
      %v400 = vsub.s32 0, %v199
      %v401 = vsel %vm399, %v400, %v199
      %v402 = vshrl.u32 %v401, 4
      %v403 = vand.u32 %v401, 15
      %v404 = vsub.s32 0, %v403
      %v405 = vsel %vm399, %v404, %v403
      %vm406 = vcmp.lt.s32.totalorder %v200, 0
      %v407 = vsub.s32 0, %v200
      %v408 = vsel %vm406, %v407, %v200
      %v409 = vshrl.u32 %v408, 4
      %v410 = vand.u32 %v408, 15
      %v411 = vsub.s32 0, %v410
      %v412 = vsel %vm406, %v411, %v410
      %vm413 = vcmp.lt.s32.totalorder %v201, 0
      %v414 = vsub.s32 0, %v201
      %v415 = vsel %vm413, %v414, %v201
      %v416 = vshrl.u32 %v415, 4
      %v417 = vand.u32 %v415, 15
      %v418 = vsub.s32 0, %v417
      %v419 = vsel %vm413, %v418, %v417
      %vm420 = vcmp.lt.s32.totalorder %v202, 0
      %v421 = vsub.s32 0, %v202
      %v422 = vsel %vm420, %v421, %v202
      %v423 = vshrl.u32 %v422, 4
      %v424 = vand.u32 %v422, 15
      %v425 = vsub.s32 0, %v424
      %v426 = vsel %vm420, %v425, %v424
      %vm427 = vcmp.ne.s32.totalorder %v209, 0
      %vm428 = vcmp.ne.s32.totalorder %v216, 0
      %vm429 = vcmp.ne.s32.totalorder %v223, 0
      %vm430 = vcmp.ne.s32.totalorder %v230, 0
      %vm431 = vcmp.ne.s32.totalorder %v237, 0
      %vm432 = vcmp.ne.s32.totalorder %v244, 0
      %vm433 = vcmp.ne.s32.totalorder %v251, 0
      %vm434 = vcmp.ne.s32.totalorder %v258, 0
      %vm435 = vcmp.ne.s32.totalorder %v265, 0
      %vm436 = vcmp.ne.s32.totalorder %v272, 0
      %vm437 = vcmp.ne.s32.totalorder %v279, 0
      %vm438 = vcmp.ne.s32.totalorder %v286, 0
      %vm439 = vcmp.ne.s32.totalorder %v293, 0
      %vm440 = vcmp.ne.s32.totalorder %v300, 0
      %vm441 = vcmp.ne.s32.totalorder %v307, 0
      %vm442 = vcmp.ne.s32.totalorder %v314, 0
      %vm443 = vcmp.ne.s32.totalorder %v321, 0
      %vm444 = vcmp.ne.s32.totalorder %v328, 0
      %vm445 = vcmp.ne.s32.totalorder %v335, 0
      %vm446 = vcmp.ne.s32.totalorder %v342, 0
      %vm447 = vcmp.ne.s32.totalorder %v349, 0
      %vm448 = vcmp.ne.s32.totalorder %v356, 0
      %vm449 = vcmp.ne.s32.totalorder %v363, 0
      %vm450 = vcmp.ne.s32.totalorder %v370, 0
      %vm451 = vcmp.ne.s32.totalorder %v377, 0
      %vm452 = vcmp.ne.s32.totalorder %v384, 0
      %vm453 = vcmp.ne.s32.totalorder %v391, 0
      %vm454 = vcmp.ne.s32.totalorder %v398, 0
      %vm455 = vcmp.ne.s32.totalorder %v405, 0
      %vm456 = vcmp.ne.s32.totalorder %v412, 0
      %vm457 = vcmp.ne.s32.totalorder %v419, 0
      %vm458 = vcmp.ne.s32.totalorder %v426, 0
      %vm459 = vcmp.lt.s32.totalorder %v209, 0
      %vm460 = vcmp.lt.s32.totalorder %v216, 0
      %vm461 = vcmp.lt.s32.totalorder %v223, 0
      %vm462 = vcmp.lt.s32.totalorder %v230, 0
      %vm463 = vcmp.lt.s32.totalorder %v237, 0
      %vm464 = vcmp.lt.s32.totalorder %v244, 0
      %vm465 = vcmp.lt.s32.totalorder %v251, 0
      %vm466 = vcmp.lt.s32.totalorder %v258, 0
      %vm467 = vcmp.lt.s32.totalorder %v265, 0
      %vm468 = vcmp.lt.s32.totalorder %v272, 0
      %vm469 = vcmp.lt.s32.totalorder %v279, 0
      %vm470 = vcmp.lt.s32.totalorder %v286, 0
      %vm471 = vcmp.lt.s32.totalorder %v293, 0
      %vm472 = vcmp.lt.s32.totalorder %v300, 0
      %vm473 = vcmp.lt.s32.totalorder %v307, 0
      %vm474 = vcmp.lt.s32.totalorder %v314, 0
      %vm475 = vcmp.lt.s32.totalorder %v321, 0
      %vm476 = vcmp.lt.s32.totalorder %v328, 0
      %vm477 = vcmp.lt.s32.totalorder %v335, 0
      %vm478 = vcmp.lt.s32.totalorder %v342, 0
      %vm479 = vcmp.lt.s32.totalorder %v349, 0
      %vm480 = vcmp.lt.s32.totalorder %v356, 0
      %vm481 = vcmp.lt.s32.totalorder %v363, 0
      %vm482 = vcmp.lt.s32.totalorder %v370, 0
      %vm483 = vcmp.lt.s32.totalorder %v377, 0
      %vm484 = vcmp.lt.s32.totalorder %v384, 0
      %vm485 = vcmp.lt.s32.totalorder %v391, 0
      %vm486 = vcmp.lt.s32.totalorder %v398, 0
      %vm487 = vcmp.lt.s32.totalorder %v405, 0
      %vm488 = vcmp.lt.s32.totalorder %v412, 0
      %vm489 = vcmp.lt.s32.totalorder %v419, 0
      %vm490 = vcmp.lt.s32.totalorder %v426, 0
      %vm491 = vmand %vm459, %vm427
      %vm492 = vmand %vm460, %vm428
      %vm493 = vmand %vm461, %vm429
      %vm494 = vmand %vm462, %vm430
      %vm495 = vmand %vm463, %vm431
      %vm496 = vmand %vm464, %vm432
      %vm497 = vmand %vm465, %vm433
      %vm498 = vmand %vm466, %vm434
      %vm499 = vmand %vm467, %vm435
      %vm500 = vmand %vm468, %vm436
      %vm501 = vmand %vm469, %vm437
      %vm502 = vmand %vm470, %vm438
      %vm503 = vmand %vm471, %vm439
      %vm504 = vmand %vm472, %vm440
      %vm505 = vmand %vm473, %vm441
      %vm506 = vmand %vm474, %vm442
      %vm507 = vmand %vm475, %vm443
      %vm508 = vmand %vm476, %vm444
      %vm509 = vmand %vm477, %vm445
      %vm510 = vmand %vm478, %vm446
      %vm511 = vmand %vm479, %vm447
      %vm512 = vmand %vm480, %vm448
      %vm513 = vmand %vm481, %vm449
      %vm514 = vmand %vm482, %vm450
      %vm515 = vmand %vm483, %vm451
      %vm516 = vmand %vm484, %vm452
      %vm517 = vmand %vm485, %vm453
      %vm518 = vmand %vm486, %vm454
      %vm519 = vmand %vm487, %vm455
      %vm520 = vmand %vm488, %vm456
      %vm521 = vmand %vm489, %vm457
      %vm522 = vmand %vm490, %vm458
      %v523 = vadd.s32 %v209, 16
      %v524 = vadd.s32 %v216, 16
      %v525 = vadd.s32 %v223, 16
      %v526 = vadd.s32 %v230, 16
      %v527 = vadd.s32 %v237, 16
      %v528 = vadd.s32 %v244, 16
      %v529 = vadd.s32 %v251, 16
      %v530 = vadd.s32 %v258, 16
      %v531 = vadd.s32 %v265, 16
      %v532 = vadd.s32 %v272, 16
      %v533 = vadd.s32 %v279, 16
      %v534 = vadd.s32 %v286, 16
      %v535 = vadd.s32 %v293, 16
      %v536 = vadd.s32 %v300, 16
      %v537 = vadd.s32 %v307, 16
      %v538 = vadd.s32 %v314, 16
      %v539 = vadd.s32 %v321, 16
      %v540 = vadd.s32 %v328, 16
      %v541 = vadd.s32 %v335, 16
      %v542 = vadd.s32 %v342, 16
      %v543 = vadd.s32 %v349, 16
      %v544 = vadd.s32 %v356, 16
      %v545 = vadd.s32 %v363, 16
      %v546 = vadd.s32 %v370, 16
      %v547 = vadd.s32 %v377, 16
      %v548 = vadd.s32 %v384, 16
      %v549 = vadd.s32 %v391, 16
      %v550 = vadd.s32 %v398, 16
      %v551 = vadd.s32 %v405, 16
      %v552 = vadd.s32 %v412, 16
      %v553 = vadd.s32 %v419, 16
      %v554 = vadd.s32 %v426, 16
      %v555 = vsel %vm491, %v523, %v209
      %v556 = vsel %vm492, %v524, %v216
      %v557 = vsel %vm493, %v525, %v223
      %v558 = vsel %vm494, %v526, %v230
      %v559 = vsel %vm495, %v527, %v237
      %v560 = vsel %vm496, %v528, %v244
      %v561 = vsel %vm497, %v529, %v251
      %v562 = vsel %vm498, %v530, %v258
      %v563 = vsel %vm499, %v531, %v265
      %v564 = vsel %vm500, %v532, %v272
      %v565 = vsel %vm501, %v533, %v279
      %v566 = vsel %vm502, %v534, %v286
      %v567 = vsel %vm503, %v535, %v293
      %v568 = vsel %vm504, %v536, %v300
      %v569 = vsel %vm505, %v537, %v307
      %v570 = vsel %vm506, %v538, %v314
      %v571 = vsel %vm507, %v539, %v321
      %v572 = vsel %vm508, %v540, %v328
      %v573 = vsel %vm509, %v541, %v335
      %v574 = vsel %vm510, %v542, %v342
      %v575 = vsel %vm511, %v543, %v349
      %v576 = vsel %vm512, %v544, %v356
      %v577 = vsel %vm513, %v545, %v363
      %v578 = vsel %vm514, %v546, %v370
      %v579 = vsel %vm515, %v547, %v377
      %v580 = vsel %vm516, %v548, %v384
      %v581 = vsel %vm517, %v549, %v391
      %v582 = vsel %vm518, %v550, %v398
      %v583 = vsel %vm519, %v551, %v405
      %v584 = vsel %vm520, %v552, %v412
      %v585 = vsel %vm521, %v553, %v419
      %v586 = vsel %vm522, %v554, %v426
      %vm587 = vcmp.ge.s32.totalorder %v555, 1
      %vm588 = vcmp.ge.s32.totalorder %v556, 1
      %vm589 = vcmp.ge.s32.totalorder %v557, 1
      %vm590 = vcmp.ge.s32.totalorder %v558, 1
      %vm591 = vcmp.ge.s32.totalorder %v559, 1
      %vm592 = vcmp.ge.s32.totalorder %v560, 1
      %vm593 = vcmp.ge.s32.totalorder %v561, 1
      %vm594 = vcmp.ge.s32.totalorder %v562, 1
      %vm595 = vcmp.ge.s32.totalorder %v563, 1
      %vm596 = vcmp.ge.s32.totalorder %v564, 1
      %vm597 = vcmp.ge.s32.totalorder %v565, 1
      %vm598 = vcmp.ge.s32.totalorder %v566, 1
      %vm599 = vcmp.ge.s32.totalorder %v567, 1
      %vm600 = vcmp.ge.s32.totalorder %v568, 1
      %vm601 = vcmp.ge.s32.totalorder %v569, 1
      %vm602 = vcmp.ge.s32.totalorder %v570, 1
      %vm603 = vcmp.ge.s32.totalorder %v571, 1
      %vm604 = vcmp.ge.s32.totalorder %v572, 1
      %vm605 = vcmp.ge.s32.totalorder %v573, 1
      %vm606 = vcmp.ge.s32.totalorder %v574, 1
      %vm607 = vcmp.ge.s32.totalorder %v575, 1
      %vm608 = vcmp.ge.s32.totalorder %v576, 1
      %vm609 = vcmp.ge.s32.totalorder %v577, 1
      %vm610 = vcmp.ge.s32.totalorder %v578, 1
      %vm611 = vcmp.ge.s32.totalorder %v579, 1
      %vm612 = vcmp.ge.s32.totalorder %v580, 1
      %vm613 = vcmp.ge.s32.totalorder %v581, 1
      %vm614 = vcmp.ge.s32.totalorder %v582, 1
      %vm615 = vcmp.ge.s32.totalorder %v583, 1
      %vm616 = vcmp.ge.s32.totalorder %v584, 1
      %vm617 = vcmp.ge.s32.totalorder %v585, 1
      %vm618 = vcmp.ge.s32.totalorder %v586, 1
      %vm619 = vcmp.le.s32.totalorder %v555, 14
      %vm620 = vcmp.le.s32.totalorder %v556, 14
      %vm621 = vcmp.le.s32.totalorder %v557, 14
      %vm622 = vcmp.le.s32.totalorder %v558, 14
      %vm623 = vcmp.le.s32.totalorder %v559, 14
      %vm624 = vcmp.le.s32.totalorder %v560, 14
      %vm625 = vcmp.le.s32.totalorder %v561, 14
      %vm626 = vcmp.le.s32.totalorder %v562, 14
      %vm627 = vcmp.le.s32.totalorder %v563, 14
      %vm628 = vcmp.le.s32.totalorder %v564, 14
      %vm629 = vcmp.le.s32.totalorder %v565, 14
      %vm630 = vcmp.le.s32.totalorder %v566, 14
      %vm631 = vcmp.le.s32.totalorder %v567, 14
      %vm632 = vcmp.le.s32.totalorder %v568, 14
      %vm633 = vcmp.le.s32.totalorder %v569, 14
      %vm634 = vcmp.le.s32.totalorder %v570, 14
      %vm635 = vcmp.le.s32.totalorder %v571, 14
      %vm636 = vcmp.le.s32.totalorder %v572, 14
      %vm637 = vcmp.le.s32.totalorder %v573, 14
      %vm638 = vcmp.le.s32.totalorder %v574, 14
      %vm639 = vcmp.le.s32.totalorder %v575, 14
      %vm640 = vcmp.le.s32.totalorder %v576, 14
      %vm641 = vcmp.le.s32.totalorder %v577, 14
      %vm642 = vcmp.le.s32.totalorder %v578, 14
      %vm643 = vcmp.le.s32.totalorder %v579, 14
      %vm644 = vcmp.le.s32.totalorder %v580, 14
      %vm645 = vcmp.le.s32.totalorder %v581, 14
      %vm646 = vcmp.le.s32.totalorder %v582, 14
      %vm647 = vcmp.le.s32.totalorder %v583, 14
      %vm648 = vcmp.le.s32.totalorder %v584, 14
      %vm649 = vcmp.le.s32.totalorder %v585, 14
      %vm650 = vcmp.le.s32.totalorder %v586, 14
      %v651 = vld [vmem:[%s163 + $0x4] sm:$0x8]
      %v652 = vld [vmem:[%s163 + $0x8] sm:$0xf]
      %v653 = vld [vmem:[%s163 + $0xc] sm:$0xf]
      %v654 = vld [vmem:[%s163 + $0x10] sm:$0xf]
      %v655 = vld [vmem:[%s163 + $0x14] sm:$0xf]
      %v656 = vld [vmem:[%s163 + $0x18] sm:$0xf]
      %v657 = vld [vmem:[%s163 + $0x1c] sm:$0xf]
      %v658 = vld [vmem:[%s163 + $0x20] sm:$0xf]
      %v659 = vld [vmem:[%s163 + $0x24] sm:$0xf]
      %v660 = vld [vmem:[%s163 + $0x28] sm:$0xf]
      %v661 = vld [vmem:[%s163 + $0x2c] sm:$0xf]
      %v662 = vld [vmem:[%s163 + $0x30] sm:$0xf]
      %v663 = vld [vmem:[%s163 + $0x34] sm:$0xf]
      %v664 = vld [vmem:[%s163 + $0x38] sm:$0xf]
      %v665 = vld [vmem:[%s163 + $0x3c] sm:$0xf]
      %v666 = vld [vmem:[%s163 + $0x40] sm:$0xf]
      %v667 = vld [vmem:[%s163 + $0x44] sm:$0xf]
      %v668 = vld [vmem:[%s163 + $0x48] sm:$0xf]
      %v669 = vld [vmem:[%s163 + $0x4c] sm:$0xf]
      %v670 = vld [vmem:[%s163 + $0x50] sm:$0xf]
      %v671 = vld [vmem:[%s163 + $0x54] sm:$0xf]
      %v672 = vld [vmem:[%s163 + $0x58] sm:$0xf]
      %v673 = vld [vmem:[%s163 + $0x5c] sm:$0xf]
      %v674 = vld [vmem:[%s163 + $0x60] sm:$0xf]
      %v675 = vld [vmem:[%s163 + $0x64] sm:$0xf]
      %v676 = vld [vmem:[%s163 + $0x68] sm:$0xf]
      %v677 = vld [vmem:[%s163 + $0x6c] sm:$0xf]
      %v678 = vld [vmem:[%s163 + $0x70] sm:$0xf]
      %v679 = vld [vmem:[%s163 + $0x74] sm:$0xf]
      %v680 = vld [vmem:[%s163 + $0x78] sm:$0xf]
      %v681 = vld [vmem:[%s163 + $0x7c] sm:$0xf]
      %v682 = vld [vmem:[%s163 + $0x80] sm:$0xf]
      %v683 = vld [vmem:[%s163 + $0x84] sm:$0xf]
      %v684 = vsel %vm587, 1, 0
      %v685 = vsel %vm588, 1, 0
      %v686 = vsel %vm589, 1, 0
      %v687 = vsel %vm590, 1, 0
      %v688 = vsel %vm591, 1, 0
      %v689 = vsel %vm592, 1, 0
      %v690 = vsel %vm593, 1, 0
      %v691 = vsel %vm594, 1, 0
      %v692 = vsel %vm595, 1, 0
      %v693 = vsel %vm596, 1, 0
      %v694 = vsel %vm597, 1, 0
      %v695 = vsel %vm598, 1, 0
      %v696 = vsel %vm599, 1, 0
      %v697 = vsel %vm600, 1, 0
      %v698 = vsel %vm601, 1, 0
      %v699 = vsel %vm602, 1, 0
      %v700 = vsel %vm603, 1, 0
      %v701 = vsel %vm604, 1, 0
      %v702 = vsel %vm605, 1, 0
      %v703 = vsel %vm606, 1, 0
      %v704 = vsel %vm607, 1, 0
      %v705 = vsel %vm608, 1, 0
      %v706 = vsel %vm609, 1, 0
      %v707 = vsel %vm610, 1, 0
      %v708 = vsel %vm611, 1, 0
      %v709 = vsel %vm612, 1, 0
      %v710 = vsel %vm613, 1, 0
      %v711 = vsel %vm614, 1, 0
      %v712 = vsel %vm615, 1, 0
      %v713 = vsel %vm616, 1, 0
      %v714 = vsel %vm617, 1, 0
      %v715 = vsel %vm618, 1, 0
      %vm716 = vcmp.eq.s32.totalorder %v684, 1
      %vm717 = vcmp.eq.s32.totalorder %v685, 1
      %vm718 = vcmp.eq.s32.totalorder %v686, 1
      %vm719 = vcmp.eq.s32.totalorder %v687, 1
      %vm720 = vcmp.eq.s32.totalorder %v688, 1
      %vm721 = vcmp.eq.s32.totalorder %v689, 1
      %vm722 = vcmp.eq.s32.totalorder %v690, 1
      %vm723 = vcmp.eq.s32.totalorder %v691, 1
      %vm724 = vcmp.eq.s32.totalorder %v692, 1
      %vm725 = vcmp.eq.s32.totalorder %v693, 1
      %vm726 = vcmp.eq.s32.totalorder %v694, 1
      %vm727 = vcmp.eq.s32.totalorder %v695, 1
      %vm728 = vcmp.eq.s32.totalorder %v696, 1
      %vm729 = vcmp.eq.s32.totalorder %v697, 1
      %vm730 = vcmp.eq.s32.totalorder %v698, 1
      %vm731 = vcmp.eq.s32.totalorder %v699, 1
      %vm732 = vcmp.eq.s32.totalorder %v700, 1
      %vm733 = vcmp.eq.s32.totalorder %v701, 1
      %vm734 = vcmp.eq.s32.totalorder %v702, 1
      %vm735 = vcmp.eq.s32.totalorder %v703, 1
      %vm736 = vcmp.eq.s32.totalorder %v704, 1
      %vm737 = vcmp.eq.s32.totalorder %v705, 1
      %vm738 = vcmp.eq.s32.totalorder %v706, 1
      %vm739 = vcmp.eq.s32.totalorder %v707, 1
      %vm740 = vcmp.eq.s32.totalorder %v708, 1
      %vm741 = vcmp.eq.s32.totalorder %v709, 1
      %vm742 = vcmp.eq.s32.totalorder %v710, 1
      %vm743 = vcmp.eq.s32.totalorder %v711, 1
      %vm744 = vcmp.eq.s32.totalorder %v712, 1
      %vm745 = vcmp.eq.s32.totalorder %v713, 1
      %vm746 = vcmp.eq.s32.totalorder %v714, 1
      %vm747 = vcmp.eq.s32.totalorder %v715, 1
      %vm748 = vmpackc.low %vm716, %vm716
      %vm749 = vmpackc.low %vm717, %vm717
      %vm750 = vmpackc.low %vm718, %vm718
      %vm751 = vmpackc.low %vm719, %vm719
      %vm752 = vmpackc.low %vm720, %vm720
      %vm753 = vmpackc.low %vm721, %vm721
      %vm754 = vmpackc.low %vm722, %vm722
      %vm755 = vmpackc.low %vm723, %vm723
      %vm756 = vmpackc.low %vm724, %vm724
      %vm757 = vmpackc.low %vm725, %vm725
      %vm758 = vmpackc.low %vm726, %vm726
      %vm759 = vmpackc.low %vm727, %vm727
      %vm760 = vmpackc.low %vm728, %vm728
      %vm761 = vmpackc.low %vm729, %vm729
      %vm762 = vmpackc.low %vm730, %vm730
      %vm763 = vmpackc.low %vm731, %vm731
      %vm764 = vmpackc.low %vm732, %vm732
      %vm765 = vmpackc.low %vm733, %vm733
      %vm766 = vmpackc.low %vm734, %vm734
      %vm767 = vmpackc.low %vm735, %vm735
      %vm768 = vmpackc.low %vm736, %vm736
      %vm769 = vmpackc.low %vm737, %vm737
      %vm770 = vmpackc.low %vm738, %vm738
      %vm771 = vmpackc.low %vm739, %vm739
      %vm772 = vmpackc.low %vm740, %vm740
      %vm773 = vmpackc.low %vm741, %vm741
      %vm774 = vmpackc.low %vm742, %vm742
      %vm775 = vmpackc.low %vm743, %vm743
      %vm776 = vmpackc.low %vm744, %vm744
      %vm777 = vmpackc.low %vm745, %vm745
      %vm778 = vmpackc.low %vm746, %vm746
      %vm779 = vmpackc.low %vm747, %vm747
      %v780 = vsel %vm748, 65537, 0
      %v781 = vsel %vm749, 65537, 0
      %v782 = vsel %vm750, 65537, 0
      %v783 = vsel %vm751, 65537, 0
      %v784 = vsel %vm752, 65537, 0
      %v785 = vsel %vm753, 65537, 0
      %v786 = vsel %vm754, 65537, 0
      %v787 = vsel %vm755, 65537, 0
      %v788 = vsel %vm756, 65537, 0
      %v789 = vsel %vm757, 65537, 0
      %v790 = vsel %vm758, 65537, 0
      %v791 = vsel %vm759, 65537, 0
      %v792 = vsel %vm760, 65537, 0
      %v793 = vsel %vm761, 65537, 0
      %v794 = vsel %vm762, 65537, 0
      %v795 = vsel %vm763, 65537, 0
      %v796 = vsel %vm764, 65537, 0
      %v797 = vsel %vm765, 65537, 0
      %v798 = vsel %vm766, 65537, 0
      %v799 = vsel %vm767, 65537, 0
      %v800 = vsel %vm768, 65537, 0
      %v801 = vsel %vm769, 65537, 0
      %v802 = vsel %vm770, 65537, 0
      %v803 = vsel %vm771, 65537, 0
      %v804 = vsel %vm772, 65537, 0
      %v805 = vsel %vm773, 65537, 0
      %v806 = vsel %vm774, 65537, 0
      %v807 = vsel %vm775, 65537, 0
      %v808 = vsel %vm776, 65537, 0
      %v809 = vsel %vm777, 65537, 0
      %v810 = vsel %vm778, 65537, 0
      %v811 = vsel %vm779, 65537, 0
      %vm812 = vsmask.f32 3328
      %vm813 = vsmask.f32 7440
      %vm814 = vmor %vm812, %vm813
      %v816 = vshll.u32 %v780, 16
      %v818 = vrot.slane %v816, 5
      %v819 = vshrl.u32 %v780, 16
      %v821 = vrot.slane %v819, 4
      %v822 = vor.u32 %v821, %v818
      %v823 = vrot.slane %v822, 4
      %v825 = vshll.u32 %v781, 16
      %v827 = vrot.slane %v825, 5
      %v828 = vsel %vm814, %v823, %v827
      %v829 = vshrl.u32 %v781, 16
      %v831 = vrot.slane %v829, 4
      %v832 = vor.u32 %v831, %v827
      %v833 = vrot.slane %v832, 4
      %v835 = vshll.u32 %v782, 16
      %v837 = vrot.slane %v835, 5
      %v838 = vsel %vm814, %v833, %v837
      %v839 = vshrl.u32 %v782, 16
      %v841 = vrot.slane %v839, 4
      %v842 = vor.u32 %v841, %v837
      %v843 = vrot.slane %v842, 4
      %v845 = vshll.u32 %v783, 16
      %v847 = vrot.slane %v845, 5
      %v848 = vsel %vm814, %v843, %v847
      %v849 = vshrl.u32 %v783, 16
      %v851 = vrot.slane %v849, 4
      %v852 = vor.u32 %v851, %v847
      %v853 = vrot.slane %v852, 4
      %v855 = vshll.u32 %v784, 16
      %v857 = vrot.slane %v855, 5
      %v858 = vsel %vm814, %v853, %v857
      %v859 = vshrl.u32 %v784, 16
      %v861 = vrot.slane %v859, 4
      %v862 = vor.u32 %v861, %v857
      %v863 = vrot.slane %v862, 4
      %v865 = vshll.u32 %v785, 16
      %v867 = vrot.slane %v865, 5
      %v868 = vsel %vm814, %v863, %v867
      %v869 = vshrl.u32 %v785, 16
      %v871 = vrot.slane %v869, 4
      %v872 = vor.u32 %v871, %v867
      %v873 = vrot.slane %v872, 4
      %v875 = vshll.u32 %v786, 16
      %v877 = vrot.slane %v875, 5
      %v878 = vsel %vm814, %v873, %v877
      %v879 = vshrl.u32 %v786, 16
      %v881 = vrot.slane %v879, 4
      %v882 = vor.u32 %v881, %v877
      %v883 = vrot.slane %v882, 4
      %v885 = vshll.u32 %v787, 16
      %v887 = vrot.slane %v885, 5
      %v888 = vsel %vm814, %v883, %v887
      %v889 = vshrl.u32 %v787, 16
      %v891 = vrot.slane %v889, 4
      %v892 = vor.u32 %v891, %v887
      %v893 = vrot.slane %v892, 4
      %v895 = vshll.u32 %v788, 16
      %v897 = vrot.slane %v895, 5
      %v898 = vsel %vm814, %v893, %v897
      %v899 = vshrl.u32 %v788, 16
      %v901 = vrot.slane %v899, 4
      %v902 = vor.u32 %v901, %v897
      %v903 = vrot.slane %v902, 4
      %v905 = vshll.u32 %v789, 16
      %v907 = vrot.slane %v905, 5
      %v908 = vsel %vm814, %v903, %v907
      %v909 = vshrl.u32 %v789, 16
      %v911 = vrot.slane %v909, 4
      %v912 = vor.u32 %v911, %v907
      %v913 = vrot.slane %v912, 4
      %v915 = vshll.u32 %v790, 16
      %v917 = vrot.slane %v915, 5
      %v918 = vsel %vm814, %v913, %v917
      %v919 = vshrl.u32 %v790, 16
      %v921 = vrot.slane %v919, 4
      %v922 = vor.u32 %v921, %v917
      %v923 = vrot.slane %v922, 4
      %v925 = vshll.u32 %v791, 16
      %v927 = vrot.slane %v925, 5
      %v928 = vsel %vm814, %v923, %v927
      %v929 = vshrl.u32 %v791, 16
      %v931 = vrot.slane %v929, 4
      %v932 = vor.u32 %v931, %v927
      %v933 = vrot.slane %v932, 4
      %v935 = vshll.u32 %v792, 16
      %v937 = vrot.slane %v935, 5
      %v938 = vsel %vm814, %v933, %v937
      %v939 = vshrl.u32 %v792, 16
      %v941 = vrot.slane %v939, 4
      %v942 = vor.u32 %v941, %v937
      %v943 = vrot.slane %v942, 4
      %v945 = vshll.u32 %v793, 16
      %v947 = vrot.slane %v945, 5
      %v948 = vsel %vm814, %v943, %v947
      %v949 = vshrl.u32 %v793, 16
      %v951 = vrot.slane %v949, 4
      %v952 = vor.u32 %v951, %v947
      %v953 = vrot.slane %v952, 4
      %v955 = vshll.u32 %v794, 16
      %v957 = vrot.slane %v955, 5
      %v958 = vsel %vm814, %v953, %v957
      %v959 = vshrl.u32 %v794, 16
      %v961 = vrot.slane %v959, 4
      %v962 = vor.u32 %v961, %v957
      %v963 = vrot.slane %v962, 4
      %v965 = vshll.u32 %v795, 16
      %v967 = vrot.slane %v965, 5
      %v968 = vsel %vm814, %v963, %v967
      %v969 = vshrl.u32 %v795, 16
      %v971 = vrot.slane %v969, 4
      %v972 = vor.u32 %v971, %v967
      %v973 = vrot.slane %v972, 4
      %v975 = vshll.u32 %v796, 16
      %v977 = vrot.slane %v975, 5
      %v978 = vsel %vm814, %v973, %v977
      %v979 = vshrl.u32 %v796, 16
      %v981 = vrot.slane %v979, 4
      %v982 = vor.u32 %v981, %v977
      %v983 = vrot.slane %v982, 4
      %v985 = vshll.u32 %v797, 16
      %v987 = vrot.slane %v985, 5
      %v988 = vsel %vm814, %v983, %v987
      %v989 = vshrl.u32 %v797, 16
      %v991 = vrot.slane %v989, 4
      %v992 = vor.u32 %v991, %v987
      %v993 = vrot.slane %v992, 4
      %v995 = vshll.u32 %v798, 16
      %v997 = vrot.slane %v995, 5
      %v998 = vsel %vm814, %v993, %v997
      %v999 = vshrl.u32 %v798, 16
      %v1001 = vrot.slane %v999, 4
      %v1002 = vor.u32 %v1001, %v997
      %v1003 = vrot.slane %v1002, 4
      %v1005 = vshll.u32 %v799, 16
      %v1007 = vrot.slane %v1005, 5
      %v1008 = vsel %vm814, %v1003, %v1007
      %v1009 = vshrl.u32 %v799, 16
      %v1011 = vrot.slane %v1009, 4
      %v1012 = vor.u32 %v1011, %v1007
      %v1013 = vrot.slane %v1012, 4
      %v1015 = vshll.u32 %v800, 16
      %v1017 = vrot.slane %v1015, 5
      %v1018 = vsel %vm814, %v1013, %v1017
      %v1019 = vshrl.u32 %v800, 16
      %v1021 = vrot.slane %v1019, 4
      %v1022 = vor.u32 %v1021, %v1017
      %v1023 = vrot.slane %v1022, 4
      %v1025 = vshll.u32 %v801, 16
      %v1027 = vrot.slane %v1025, 5
      %v1028 = vsel %vm814, %v1023, %v1027
      %v1029 = vshrl.u32 %v801, 16
      %v1031 = vrot.slane %v1029, 4
      %v1032 = vor.u32 %v1031, %v1027
      %v1033 = vrot.slane %v1032, 4
      %v1035 = vshll.u32 %v802, 16
      %v1037 = vrot.slane %v1035, 5
      %v1038 = vsel %vm814, %v1033, %v1037
      %v1039 = vshrl.u32 %v802, 16
      %v1041 = vrot.slane %v1039, 4
      %v1042 = vor.u32 %v1041, %v1037
      %v1043 = vrot.slane %v1042, 4
      %v1045 = vshll.u32 %v803, 16
      %v1047 = vrot.slane %v1045, 5
      %v1048 = vsel %vm814, %v1043, %v1047
      %v1049 = vshrl.u32 %v803, 16
      %v1051 = vrot.slane %v1049, 4
      %v1052 = vor.u32 %v1051, %v1047
      %v1053 = vrot.slane %v1052, 4
      %v1055 = vshll.u32 %v804, 16
      %v1057 = vrot.slane %v1055, 5
      %v1058 = vsel %vm814, %v1053, %v1057
      %v1059 = vshrl.u32 %v804, 16
      %v1061 = vrot.slane %v1059, 4
      %v1062 = vor.u32 %v1061, %v1057
      %v1063 = vrot.slane %v1062, 4
      %v1065 = vshll.u32 %v805, 16
      %v1067 = vrot.slane %v1065, 5
      %v1068 = vsel %vm814, %v1063, %v1067
      %v1069 = vshrl.u32 %v805, 16
      %v1071 = vrot.slane %v1069, 4
      %v1072 = vor.u32 %v1071, %v1067
      %v1073 = vrot.slane %v1072, 4
      %v1075 = vshll.u32 %v806, 16
      %v1077 = vrot.slane %v1075, 5
      %v1078 = vsel %vm814, %v1073, %v1077
      %v1079 = vshrl.u32 %v806, 16
      %v1081 = vrot.slane %v1079, 4
      %v1082 = vor.u32 %v1081, %v1077
      %v1083 = vrot.slane %v1082, 4
      %v1085 = vshll.u32 %v807, 16
      %v1087 = vrot.slane %v1085, 5
      %v1088 = vsel %vm814, %v1083, %v1087
      %v1089 = vshrl.u32 %v807, 16
      %v1091 = vrot.slane %v1089, 4
      %v1092 = vor.u32 %v1091, %v1087
      %v1093 = vrot.slane %v1092, 4
      %v1095 = vshll.u32 %v808, 16
      %v1097 = vrot.slane %v1095, 5
      %v1098 = vsel %vm814, %v1093, %v1097
      %v1099 = vshrl.u32 %v808, 16
      %v1101 = vrot.slane %v1099, 4
      %v1102 = vor.u32 %v1101, %v1097
      %v1103 = vrot.slane %v1102, 4
      %v1105 = vshll.u32 %v809, 16
      %v1107 = vrot.slane %v1105, 5
      %v1108 = vsel %vm814, %v1103, %v1107
      %v1109 = vshrl.u32 %v809, 16
      %v1111 = vrot.slane %v1109, 4
      %v1112 = vor.u32 %v1111, %v1107
      %v1113 = vrot.slane %v1112, 4
      %v1115 = vshll.u32 %v810, 16
      %v1117 = vrot.slane %v1115, 5
      %v1118 = vsel %vm814, %v1113, %v1117
      %v1119 = vshrl.u32 %v810, 16
      %v1121 = vrot.slane %v1119, 4
      %v1122 = vor.u32 %v1121, %v1117
      %v1123 = vrot.slane %v1122, 4
      %v1125 = vshll.u32 %v811, 16
      %v1127 = vrot.slane %v1125, 5
      %v1128 = vsel %vm814, %v1123, %v1127
      %v1129 = vshrl.u32 %v811, 16
      %v1131 = vrot.slane %v1129, 4
      %v1132 = vor.u32 %v1131, %v1127
      %v1133 = vrot.slane %v1132, 4
      %vm1134 = vcmp.ne.s16.totalorder %v818, 0
      %vm1135 = vcmp.ne.s16.totalorder %v828, 0
      %vm1136 = vcmp.ne.s16.totalorder %v838, 0
      %vm1137 = vcmp.ne.s16.totalorder %v848, 0
      %vm1138 = vcmp.ne.s16.totalorder %v858, 0
      %vm1139 = vcmp.ne.s16.totalorder %v868, 0
      %vm1140 = vcmp.ne.s16.totalorder %v878, 0
      %vm1141 = vcmp.ne.s16.totalorder %v888, 0
      %vm1142 = vcmp.ne.s16.totalorder %v898, 0
      %vm1143 = vcmp.ne.s16.totalorder %v908, 0
      %vm1144 = vcmp.ne.s16.totalorder %v918, 0
      %vm1145 = vcmp.ne.s16.totalorder %v928, 0
      %vm1146 = vcmp.ne.s16.totalorder %v938, 0
      %vm1147 = vcmp.ne.s16.totalorder %v948, 0
      %vm1148 = vcmp.ne.s16.totalorder %v958, 0
      %vm1149 = vcmp.ne.s16.totalorder %v968, 0
      %vm1150 = vcmp.ne.s16.totalorder %v978, 0
      %vm1151 = vcmp.ne.s16.totalorder %v988, 0
      %vm1152 = vcmp.ne.s16.totalorder %v998, 0
      %vm1153 = vcmp.ne.s16.totalorder %v1008, 0
      %vm1154 = vcmp.ne.s16.totalorder %v1018, 0
      %vm1155 = vcmp.ne.s16.totalorder %v1028, 0
      %vm1156 = vcmp.ne.s16.totalorder %v1038, 0
      %vm1157 = vcmp.ne.s16.totalorder %v1048, 0
      %vm1158 = vcmp.ne.s16.totalorder %v1058, 0
      %vm1159 = vcmp.ne.s16.totalorder %v1068, 0
      %vm1160 = vcmp.ne.s16.totalorder %v1078, 0
      %vm1161 = vcmp.ne.s16.totalorder %v1088, 0
      %vm1162 = vcmp.ne.s16.totalorder %v1098, 0
      %vm1163 = vcmp.ne.s16.totalorder %v1108, 0
      %vm1164 = vcmp.ne.s16.totalorder %v1118, 0
      %vm1165 = vcmp.ne.s16.totalorder %v1128, 0
      %vm1166 = vcmp.ne.s16.totalorder %v1133, 0
      %v1167 = vsel %vm1134, %v651, 0
      %v1168 = vsel %vm1135, %v652, 0
      %v1169 = vsel %vm1136, %v653, 0
      %v1170 = vsel %vm1137, %v654, 0
      %v1171 = vsel %vm1138, %v655, 0
      %v1172 = vsel %vm1139, %v656, 0
      %v1173 = vsel %vm1140, %v657, 0
      %v1174 = vsel %vm1141, %v658, 0
      %v1175 = vsel %vm1142, %v659, 0
      %v1176 = vsel %vm1143, %v660, 0
      %v1177 = vsel %vm1144, %v661, 0
      %v1178 = vsel %vm1145, %v662, 0
      %v1179 = vsel %vm1146, %v663, 0
      %v1180 = vsel %vm1147, %v664, 0
      %v1181 = vsel %vm1148, %v665, 0
      %v1182 = vsel %vm1149, %v666, 0
      %v1183 = vsel %vm1150, %v667, 0
      %v1184 = vsel %vm1151, %v668, 0
      %v1185 = vsel %vm1152, %v669, 0
      %v1186 = vsel %vm1153, %v670, 0
      %v1187 = vsel %vm1154, %v671, 0
      %v1188 = vsel %vm1155, %v672, 0
      %v1189 = vsel %vm1156, %v673, 0
      %v1190 = vsel %vm1157, %v674, 0
      %v1191 = vsel %vm1158, %v675, 0
      %v1192 = vsel %vm1159, %v676, 0
      %v1193 = vsel %vm1160, %v677, 0
      %v1194 = vsel %vm1161, %v678, 0
      %v1195 = vsel %vm1162, %v679, 0
      %v1196 = vsel %vm1163, %v680, 0
      %v1197 = vsel %vm1164, %v681, 0
      %v1198 = vsel %vm1165, %v682, 0
      %v1199 = vsel %vm1166, %v683, 0
      %v1200 = vld [vmem:[%s1] sm:$0x3]
      %s1201 = scalar_lea.vmem %s1, 2
      %v1202 = vld [vmem:[%s1201] sm:$0x3]
      %v1235 = vunpack.c.l.b16 %v652
      %v1236 = vunpack.c.l.b16 %v653
      %v1237 = vunpack.c.l.b16 %v654
      %v1238 = vunpack.c.l.b16 %v655
      %v1239 = vunpack.c.l.b16 %v656
      %v1240 = vunpack.c.l.b16 %v657
      %v1241 = vunpack.c.l.b16 %v658
      %v1242 = vunpack.c.l.b16 %v659
      %v1243 = vunpack.c.l.b16 %v660
      %v1244 = vunpack.c.l.b16 %v661
      %v1245 = vunpack.c.l.b16 %v662
      %v1246 = vunpack.c.l.b16 %v663
      %v1247 = vunpack.c.l.b16 %v664
      %v1248 = vunpack.c.l.b16 %v665
      %v1249 = vunpack.c.l.b16 %v666
      %v1250 = vunpack.c.l.b16 %v667
      %v1251 = vunpack.c.l.b16 %v668
      %v1252 = vunpack.c.l.b16 %v669
      %v1253 = vunpack.c.l.b16 %v670
      %v1254 = vunpack.c.l.b16 %v671
      %v1255 = vunpack.c.l.b16 %v672
      %v1256 = vunpack.c.l.b16 %v673
      %v1257 = vunpack.c.l.b16 %v674
      %v1258 = vunpack.c.l.b16 %v675
      %v1259 = vunpack.c.l.b16 %v676
      %v1260 = vunpack.c.l.b16 %v677
      %v1261 = vunpack.c.l.b16 %v678
      %v1262 = vunpack.c.l.b16 %v679
      %v1263 = vunpack.c.l.b16 %v680
      %v1264 = vunpack.c.l.b16 %v681
      %v1265 = vunpack.c.l.b16 %v682
      %v1266 = vunpack.c.l.b16 %v683
      %v1267 = vpack.c.b16 %v1236, %v1235
      %v1268 = vpack.c.b16 %v1238, %v1237
      %v1269 = vpack.c.b16 %v1240, %v1239
      %v1270 = vpack.c.b16 %v1242, %v1241
      %v1271 = vpack.c.b16 %v1244, %v1243
      %v1272 = vpack.c.b16 %v1246, %v1245
      %v1273 = vpack.c.b16 %v1248, %v1247
      %v1274 = vpack.c.b16 %v1250, %v1249
      %v1275 = vpack.c.b16 %v1252, %v1251
      %v1276 = vpack.c.b16 %v1254, %v1253
      %v1277 = vpack.c.b16 %v1256, %v1255
      %v1278 = vpack.c.b16 %v1258, %v1257
      %v1279 = vpack.c.b16 %v1260, %v1259
      %v1280 = vpack.c.b16 %v1262, %v1261
      %v1281 = vpack.c.b16 %v1264, %v1263
      %v1282 = vpack.c.b16 %v1266, %v1265
      %vm1283 = vcmask 31744
      %v1285 = vsel %vm1283, %v1267, 0
      %v1288 = vsel %vm1283, %v1268, 0
      %v1291 = vsel %vm1283, %v1269, 0
      %v1294 = vsel %vm1283, %v1270, 0
      %v1297 = vsel %vm1283, %v1271, 0
      %v1300 = vsel %vm1283, %v1272, 0
      %v1303 = vsel %vm1283, %v1273, 0
      %v1306 = vsel %vm1283, %v1274, 0
      %v1309 = vsel %vm1283, %v1275, 0
      %v1312 = vsel %vm1283, %v1276, 0
      %v1315 = vsel %vm1283, %v1277, 0
      %v1318 = vsel %vm1283, %v1278, 0
      %v1321 = vsel %vm1283, %v1279, 0
      %v1324 = vsel %vm1283, %v1280, 0
      %v1327 = vsel %vm1283, %v1281, 0
      %v1330 = vsel %vm1283, %v1282, 0
      %vm1332 = vcmask 1041408
      %v1334 = vsel %vm1332, %v1202, 0
      %1336 = vmatprep.subr.bf16.mxu0 0
      %1337 = vmatpush1.bf16.msra.mxu0 0
      %1338 = vmatprep.subr.bf16.mxu0 0
      %1339 = vmatpush1.bf16.msra.mxu0 0
      %1340 = vmatprep.subr.bf16.mxu0 0
      %1341 = vmatpush1.bf16.msra.mxu0 0
      %1342 = vmatprep.subr.bf16.mxu0 0
      %1343 = vmatpush1.bf16.msra.mxu0 0
      %1344 = vmatprep.subr.bf16.mxu0 0
      %1345 = vmatpush1.bf16.msra.mxu0 0
      %1346 = vmatprep.subr.bf16.mxu0 0
      %1347 = vmatpush1.bf16.msra.mxu0 0
      %1348 = vmatprep.subr.bf16.mxu0 0
      %1349 = vmatpush1.bf16.msra.mxu0 0
      %1350 = vmatprep.subr.bf16.mxu0 0
      %1351 = vmatpush1.bf16.msra.mxu0 %v1334
      %1352 = vmatprep.subr.bf16.mxu0 0
      %1353 = vmatpush2.bf16.msra.mxu0 0
      %1354 = vmatprep.subr.bf16.mxu0 0
      %1355 = vmatpush2.bf16.msra.mxu0 0
      %1356 = vmatprep.subr.bf16.mxu0 0
      %1357 = vmatpush2.bf16.msra.mxu0 0
      %1358 = vmatprep.subr.bf16.mxu0 0
      %1359 = vmatpush2.bf16.msra.mxu0 0
      %1360 = vmatprep.subr.bf16.mxu0 0
      %1361 = vmatpush2.bf16.msra.mxu0 0
      %1362 = vmatprep.subr.bf16.mxu0 0
      %1363 = vmatpush2.bf16.msra.mxu0 0
      %1364 = vmatprep.subr.bf16.mxu0 0
      %1365 = vmatpush2.bf16.msra.mxu0 0
      %1366 = vmatprep.subr.bf16.mxu0 0
      %1367 = vmatpush2.bf16.msra.mxu0 0
      %1368 = vmatprep.mubr.bf16.mxu0 0
      %1369 = vmatmul.mubr.bf16.gmra.mxu0 %v1285
      %v1370 = vpop.f32.mrf.mxu0
      %v1371 = vadd.f32 0.0, %v1370
      %v1372 = vpop.f32.mrf.mxu0
      %v1373 = vpop.f32.mrf.mxu0
      %v1374 = vadd.f32 0.0, %v1373
      %v1375 = vpop.f32.mrf.mxu0
      %1376 = vmatprep.mubr.bf16.mxu0 0
      %1377 = vmatmul.mubr.bf16.gmra.mxu0 %v1288
      %v1378 = vpop.f32.mrf.mxu0
      %v1379 = vadd.f32 0.0, %v1378
      %v1380 = vpop.f32.mrf.mxu0
      %v1381 = vpop.f32.mrf.mxu0
      %v1382 = vadd.f32 0.0, %v1381
      %v1383 = vpop.f32.mrf.mxu0
      %1384 = vmatprep.mubr.bf16.mxu0 0
      %1385 = vmatmul.mubr.bf16.gmra.mxu0 %v1291
      %v1386 = vpop.f32.mrf.mxu0
      %v1387 = vadd.f32 0.0, %v1386
      %v1388 = vpop.f32.mrf.mxu0
      %v1389 = vpop.f32.mrf.mxu0
      %v1390 = vadd.f32 0.0, %v1389
      %v1391 = vpop.f32.mrf.mxu0
      %1392 = vmatprep.mubr.bf16.mxu0 0
      %1393 = vmatmul.mubr.bf16.gmra.mxu0 %v1294
      %v1394 = vpop.f32.mrf.mxu0
      %v1395 = vadd.f32 0.0, %v1394
      %v1396 = vpop.f32.mrf.mxu0
      %v1397 = vpop.f32.mrf.mxu0
      %v1398 = vadd.f32 0.0, %v1397
      %v1399 = vpop.f32.mrf.mxu0
      %1400 = vmatprep.mubr.bf16.mxu0 0
      %1401 = vmatmul.mubr.bf16.gmra.mxu0 %v1297
      %v1402 = vpop.f32.mrf.mxu0
      %v1403 = vadd.f32 0.0, %v1402
      %v1404 = vpop.f32.mrf.mxu0
      %v1405 = vpop.f32.mrf.mxu0
      %v1406 = vadd.f32 0.0, %v1405
      %v1407 = vpop.f32.mrf.mxu0
      %1408 = vmatprep.mubr.bf16.mxu0 0
      %1409 = vmatmul.mubr.bf16.gmra.mxu0 %v1300
      %v1410 = vpop.f32.mrf.mxu0
      %v1411 = vadd.f32 0.0, %v1410
      %v1412 = vpop.f32.mrf.mxu0
      %v1413 = vpop.f32.mrf.mxu0
      %v1414 = vadd.f32 0.0, %v1413
      %v1415 = vpop.f32.mrf.mxu0
      %1416 = vmatprep.mubr.bf16.mxu0 0
      %1417 = vmatmul.mubr.bf16.gmra.mxu0 %v1303
      %v1418 = vpop.f32.mrf.mxu0
      %v1419 = vadd.f32 0.0, %v1418
      %v1420 = vpop.f32.mrf.mxu0
      %v1421 = vpop.f32.mrf.mxu0
      %v1422 = vadd.f32 0.0, %v1421
      %v1423 = vpop.f32.mrf.mxu0
      %1424 = vmatprep.mubr.bf16.mxu0 0
      %1425 = vmatmul.mubr.bf16.gmra.mxu0 %v1306
      %v1426 = vpop.f32.mrf.mxu0
      %v1427 = vadd.f32 0.0, %v1426
      %v1428 = vpop.f32.mrf.mxu0
      %v1429 = vpop.f32.mrf.mxu0
      %v1430 = vadd.f32 0.0, %v1429
      %v1431 = vpop.f32.mrf.mxu0
      %1432 = vmatprep.mubr.bf16.mxu0 0
      %1433 = vmatmul.mubr.bf16.gmra.mxu0 %v1309
      %v1434 = vpop.f32.mrf.mxu0
      %v1435 = vadd.f32 0.0, %v1434
      %v1436 = vpop.f32.mrf.mxu0
      %v1437 = vpop.f32.mrf.mxu0
      %v1438 = vadd.f32 0.0, %v1437
      %v1439 = vpop.f32.mrf.mxu0
      %1440 = vmatprep.mubr.bf16.mxu0 0
      %1441 = vmatmul.mubr.bf16.gmra.mxu0 %v1312
      %v1442 = vpop.f32.mrf.mxu0
      %v1443 = vadd.f32 0.0, %v1442
      %v1444 = vpop.f32.mrf.mxu0
      %v1445 = vpop.f32.mrf.mxu0
      %v1446 = vadd.f32 0.0, %v1445
      %v1447 = vpop.f32.mrf.mxu0
      %1448 = vmatprep.mubr.bf16.mxu0 0
      %1449 = vmatmul.mubr.bf16.gmra.mxu0 %v1315
      %v1450 = vpop.f32.mrf.mxu0
      %v1451 = vadd.f32 0.0, %v1450
      %v1452 = vpop.f32.mrf.mxu0
      %v1453 = vpop.f32.mrf.mxu0
      %v1454 = vadd.f32 0.0, %v1453
      %v1455 = vpop.f32.mrf.mxu0
      %1456 = vmatprep.mubr.bf16.mxu0 0
      %1457 = vmatmul.mubr.bf16.gmra.mxu0 %v1318
      %v1458 = vpop.f32.mrf.mxu0
      %v1459 = vadd.f32 0.0, %v1458
      %v1460 = vpop.f32.mrf.mxu0
      %v1461 = vpop.f32.mrf.mxu0
      %v1462 = vadd.f32 0.0, %v1461
      %v1463 = vpop.f32.mrf.mxu0
      %1464 = vmatprep.mubr.bf16.mxu0 0
      %1465 = vmatmul.mubr.bf16.gmra.mxu0 %v1321
      %v1466 = vpop.f32.mrf.mxu0
      %v1467 = vadd.f32 0.0, %v1466
      %v1468 = vpop.f32.mrf.mxu0
      %v1469 = vpop.f32.mrf.mxu0
      %v1470 = vadd.f32 0.0, %v1469
      %v1471 = vpop.f32.mrf.mxu0
      %1472 = vmatprep.mubr.bf16.mxu0 0
      %1473 = vmatmul.mubr.bf16.gmra.mxu0 %v1324
      %v1474 = vpop.f32.mrf.mxu0
      %v1475 = vadd.f32 0.0, %v1474
      %v1476 = vpop.f32.mrf.mxu0
      %v1477 = vpop.f32.mrf.mxu0
      %v1478 = vadd.f32 0.0, %v1477
      %v1479 = vpop.f32.mrf.mxu0
      %1480 = vmatprep.mubr.bf16.mxu0 0
      %1481 = vmatmul.mubr.bf16.gmra.mxu0 %v1327
      %v1482 = vpop.f32.mrf.mxu0
      %v1483 = vadd.f32 0.0, %v1482
      %v1484 = vpop.f32.mrf.mxu0
      %v1485 = vpop.f32.mrf.mxu0
      %v1486 = vadd.f32 0.0, %v1485
      %v1487 = vpop.f32.mrf.mxu0
      %1488 = vmatprep.mubr.bf16.mxu0 0
      %1489 = vmatmul.mubr.bf16.gmra.mxu0 %v1330
      %v1490 = vpop.f32.mrf.mxu0
      %v1491 = vadd.f32 0.0, %v1490
      %v1492 = vpop.f32.mrf.mxu0
      %v1493 = vpop.f32.mrf.mxu0
      %v1494 = vadd.f32 0.0, %v1493
      %v1495 = vpop.f32.mrf.mxu0
      %1496 = vdwg.mxu0
      %v1530 = vunpack.c.l.b16 %v1167
      %v1531 = vunpack.c.l.b16 %v1168
      %v1532 = vunpack.c.l.b16 %v1169
      %v1533 = vunpack.c.l.b16 %v1170
      %v1534 = vunpack.c.l.b16 %v1171
      %v1535 = vunpack.c.l.b16 %v1172
      %v1536 = vunpack.c.l.b16 %v1173
      %v1537 = vunpack.c.l.b16 %v1174
      %v1538 = vunpack.c.l.b16 %v1175
      %v1539 = vunpack.c.l.b16 %v1176
      %v1540 = vunpack.c.l.b16 %v1177
      %v1541 = vunpack.c.l.b16 %v1178
      %v1542 = vunpack.c.l.b16 %v1179
      %v1543 = vunpack.c.l.b16 %v1180
      %v1544 = vunpack.c.l.b16 %v1181
      %v1545 = vunpack.c.l.b16 %v1182
      %v1546 = vunpack.c.l.b16 %v1183
      %v1547 = vunpack.c.l.b16 %v1184
      %v1548 = vunpack.c.l.b16 %v1185
      %v1549 = vunpack.c.l.b16 %v1186
      %v1550 = vunpack.c.l.b16 %v1187
      %v1551 = vunpack.c.l.b16 %v1188
      %v1552 = vunpack.c.l.b16 %v1189
      %v1553 = vunpack.c.l.b16 %v1190
      %v1554 = vunpack.c.l.b16 %v1191
      %v1555 = vunpack.c.l.b16 %v1192
      %v1556 = vunpack.c.l.b16 %v1193
      %v1557 = vunpack.c.l.b16 %v1194
      %v1558 = vunpack.c.l.b16 %v1195
      %v1559 = vunpack.c.l.b16 %v1196
      %v1560 = vunpack.c.l.b16 %v1197
      %v1561 = vunpack.c.l.b16 %v1198
      %v1562 = vunpack.c.l.b16 %v1199
      %v1563 = vpack.c.b16 %v1531, %v1530
      %v1564 = vpack.c.b16 %v1533, %v1532
      %v1565 = vpack.c.b16 %v1535, %v1534
      %v1566 = vpack.c.b16 %v1537, %v1536
      %v1567 = vpack.c.b16 %v1539, %v1538
      %v1568 = vpack.c.b16 %v1541, %v1540
      %v1569 = vpack.c.b16 %v1543, %v1542
      %v1570 = vpack.c.b16 %v1545, %v1544
      %v1571 = vpack.c.b16 %v1547, %v1546
      %v1572 = vpack.c.b16 %v1549, %v1548
      %v1573 = vpack.c.b16 %v1551, %v1550
      %v1574 = vpack.c.b16 %v1553, %v1552
      %v1575 = vpack.c.b16 %v1555, %v1554
      %v1576 = vpack.c.b16 %v1557, %v1556
      %v1577 = vpack.c.b16 %v1559, %v1558
      %v1578 = vpack.c.b16 %v1561, %v1560
      %v1579 = vpack.c.b16 %v1562, %v1562
      %vm1580 = vsmask.f32 4352
      %v1582 = vshrl.u32 %v1563, 16
      %v1584 = vrot.slane %v1582, 3
      %v1585 = vshll.u32 %v1563, 16
      %v1587 = vrot.slane %v1585, 4
      %v1588 = vor.u32 %v1584, %v1587
      %v1590 = vshrl.u32 %v1564, 16
      %v1592 = vrot.slane %v1590, 3
      %v1593 = vshll.u32 %v1564, 16
      %v1595 = vrot.slane %v1593, 4
      %v1596 = vor.u32 %v1592, %v1595
      %v1597 = vsel %vm1580, %v1588, %v1596
      %v1599 = vshrl.u32 %v1565, 16
      %v1601 = vrot.slane %v1599, 3
      %v1602 = vshll.u32 %v1565, 16
      %v1604 = vrot.slane %v1602, 4
      %v1605 = vor.u32 %v1601, %v1604
      %v1606 = vsel %vm1580, %v1596, %v1605
      %v1608 = vshrl.u32 %v1566, 16
      %v1610 = vrot.slane %v1608, 3
      %v1611 = vshll.u32 %v1566, 16
      %v1613 = vrot.slane %v1611, 4
      %v1614 = vor.u32 %v1610, %v1613
      %v1615 = vsel %vm1580, %v1605, %v1614
      %v1617 = vshrl.u32 %v1567, 16
      %v1619 = vrot.slane %v1617, 3
      %v1620 = vshll.u32 %v1567, 16
      %v1622 = vrot.slane %v1620, 4
      %v1623 = vor.u32 %v1619, %v1622
      %v1624 = vsel %vm1580, %v1614, %v1623
      %v1626 = vshrl.u32 %v1568, 16
      %v1628 = vrot.slane %v1626, 3
      %v1629 = vshll.u32 %v1568, 16
      %v1631 = vrot.slane %v1629, 4
      %v1632 = vor.u32 %v1628, %v1631
      %v1633 = vsel %vm1580, %v1623, %v1632
      %v1635 = vshrl.u32 %v1569, 16
      %v1637 = vrot.slane %v1635, 3
      %v1638 = vshll.u32 %v1569, 16
      %v1640 = vrot.slane %v1638, 4
      %v1641 = vor.u32 %v1637, %v1640
      %v1642 = vsel %vm1580, %v1632, %v1641
      %v1644 = vshrl.u32 %v1570, 16
      %v1646 = vrot.slane %v1644, 3
      %v1647 = vshll.u32 %v1570, 16
      %v1649 = vrot.slane %v1647, 4
      %v1650 = vor.u32 %v1646, %v1649
      %v1651 = vsel %vm1580, %v1641, %v1650
      %v1653 = vshrl.u32 %v1571, 16
      %v1655 = vrot.slane %v1653, 3
      %v1656 = vshll.u32 %v1571, 16
      %v1658 = vrot.slane %v1656, 4
      %v1659 = vor.u32 %v1655, %v1658
      %v1660 = vsel %vm1580, %v1650, %v1659
      %v1662 = vshrl.u32 %v1572, 16
      %v1664 = vrot.slane %v1662, 3
      %v1665 = vshll.u32 %v1572, 16
      %v1667 = vrot.slane %v1665, 4
      %v1668 = vor.u32 %v1664, %v1667
      %v1669 = vsel %vm1580, %v1659, %v1668
      %v1671 = vshrl.u32 %v1573, 16
      %v1673 = vrot.slane %v1671, 3
      %v1674 = vshll.u32 %v1573, 16
      %v1676 = vrot.slane %v1674, 4
      %v1677 = vor.u32 %v1673, %v1676
      %v1678 = vsel %vm1580, %v1668, %v1677
      %v1680 = vshrl.u32 %v1574, 16
      %v1682 = vrot.slane %v1680, 3
      %v1683 = vshll.u32 %v1574, 16
      %v1685 = vrot.slane %v1683, 4
      %v1686 = vor.u32 %v1682, %v1685
      %v1687 = vsel %vm1580, %v1677, %v1686
      %v1689 = vshrl.u32 %v1575, 16
      %v1691 = vrot.slane %v1689, 3
      %v1692 = vshll.u32 %v1575, 16
      %v1694 = vrot.slane %v1692, 4
      %v1695 = vor.u32 %v1691, %v1694
      %v1696 = vsel %vm1580, %v1686, %v1695
      %v1698 = vshrl.u32 %v1576, 16
      %v1700 = vrot.slane %v1698, 3
      %v1701 = vshll.u32 %v1576, 16
      %v1703 = vrot.slane %v1701, 4
      %v1704 = vor.u32 %v1700, %v1703
      %v1705 = vsel %vm1580, %v1695, %v1704
      %v1707 = vshrl.u32 %v1577, 16
      %v1709 = vrot.slane %v1707, 3
      %v1710 = vshll.u32 %v1577, 16
      %v1712 = vrot.slane %v1710, 4
      %v1713 = vor.u32 %v1709, %v1712
      %v1714 = vsel %vm1580, %v1704, %v1713
      %v1716 = vshrl.u32 %v1578, 16
      %v1718 = vrot.slane %v1716, 3
      %v1719 = vshll.u32 %v1578, 16
      %v1721 = vrot.slane %v1719, 4
      %v1722 = vor.u32 %v1718, %v1721
      %v1723 = vsel %vm1580, %v1713, %v1722
      %v1725 = vshrl.u32 %v1579, 16
      %v1727 = vrot.slane %v1725, 3
      %v1728 = vshll.u32 %v1579, 16
      %v1730 = vrot.slane %v1728, 4
      %v1731 = vor.u32 %v1727, %v1730
      %v1732 = vsel %vm1580, %v1722, %v1731
      %v1734 = vsel %vm1283, %v1597, 0
      %v1737 = vsel %vm1283, %v1606, 0
      %v1740 = vsel %vm1283, %v1615, 0
      %v1743 = vsel %vm1283, %v1624, 0
      %v1746 = vsel %vm1283, %v1633, 0
      %v1749 = vsel %vm1283, %v1642, 0
      %v1752 = vsel %vm1283, %v1651, 0
      %v1755 = vsel %vm1283, %v1660, 0
      %v1758 = vsel %vm1283, %v1669, 0
      %v1761 = vsel %vm1283, %v1678, 0
      %v1764 = vsel %vm1283, %v1687, 0
      %v1767 = vsel %vm1283, %v1696, 0
      %v1770 = vsel %vm1283, %v1705, 0
      %v1773 = vsel %vm1283, %v1714, 0
      %v1776 = vsel %vm1283, %v1723, 0
      %v1779 = vsel %vm1283, %v1732, 0
      %v1782 = vsel %vm1332, %v1200, 0
      %1784 = vmatprep.subr.bf16.mxu0 0
      %1785 = vmatpush1.bf16.msra.mxu0 0
      %1786 = vmatprep.subr.bf16.mxu0 0
      %1787 = vmatpush1.bf16.msra.mxu0 0
      %1788 = vmatprep.subr.bf16.mxu0 0
      %1789 = vmatpush1.bf16.msra.mxu0 0
      %1790 = vmatprep.subr.bf16.mxu0 0
      %1791 = vmatpush1.bf16.msra.mxu0 0
      %1792 = vmatprep.subr.bf16.mxu0 0
      %1793 = vmatpush1.bf16.msra.mxu0 0
      %1794 = vmatprep.subr.bf16.mxu0 0
      %1795 = vmatpush1.bf16.msra.mxu0 0
      %1796 = vmatprep.subr.bf16.mxu0 0
      %1797 = vmatpush1.bf16.msra.mxu0 0
      %1798 = vmatprep.subr.bf16.mxu0 0
      %1799 = vmatpush1.bf16.msra.mxu0 %v1782
      %1800 = vmatprep.subr.bf16.mxu0 0
      %1801 = vmatpush2.bf16.msra.mxu0 0
      %1802 = vmatprep.subr.bf16.mxu0 0
      %1803 = vmatpush2.bf16.msra.mxu0 0
      %1804 = vmatprep.subr.bf16.mxu0 0
      %1805 = vmatpush2.bf16.msra.mxu0 0
      %1806 = vmatprep.subr.bf16.mxu0 0
      %1807 = vmatpush2.bf16.msra.mxu0 0
      %1808 = vmatprep.subr.bf16.mxu0 0
      %1809 = vmatpush2.bf16.msra.mxu0 0
      %1810 = vmatprep.subr.bf16.mxu0 0
      %1811 = vmatpush2.bf16.msra.mxu0 0
      %1812 = vmatprep.subr.bf16.mxu0 0
      %1813 = vmatpush2.bf16.msra.mxu0 0
      %1814 = vmatprep.subr.bf16.mxu0 0
      %1815 = vmatpush2.bf16.msra.mxu0 0
      %1816 = vmatprep.mubr.bf16.mxu0 0
      %1817 = vmatmul.mubr.bf16.gmra.mxu0 %v1734
      %v1818 = vpop.f32.mrf.mxu0
      %v1819 = vadd.f32 %v1371, %v1818
      %v1820 = vpop.f32.mrf.mxu0
      %v1821 = vpop.f32.mrf.mxu0
      %v1822 = vadd.f32 %v1374, %v1821
      %v1823 = vpop.f32.mrf.mxu0
      %1824 = vmatprep.mubr.bf16.mxu0 0
      %1825 = vmatmul.mubr.bf16.gmra.mxu0 %v1737
      %v1826 = vpop.f32.mrf.mxu0
      %v1827 = vadd.f32 %v1379, %v1826
      %v1828 = vpop.f32.mrf.mxu0
      %v1829 = vpop.f32.mrf.mxu0
      %v1830 = vadd.f32 %v1382, %v1829
      %v1831 = vpop.f32.mrf.mxu0
      %1832 = vmatprep.mubr.bf16.mxu0 0
      %1833 = vmatmul.mubr.bf16.gmra.mxu0 %v1740
      %v1834 = vpop.f32.mrf.mxu0
      %v1835 = vadd.f32 %v1387, %v1834
      %v1836 = vpop.f32.mrf.mxu0
      %v1837 = vpop.f32.mrf.mxu0
      %v1838 = vadd.f32 %v1390, %v1837
      %v1839 = vpop.f32.mrf.mxu0
      %1840 = vmatprep.mubr.bf16.mxu0 0
      %1841 = vmatmul.mubr.bf16.gmra.mxu0 %v1743
      %v1842 = vpop.f32.mrf.mxu0
      %v1843 = vadd.f32 %v1395, %v1842
      %v1844 = vpop.f32.mrf.mxu0
      %v1845 = vpop.f32.mrf.mxu0
      %v1846 = vadd.f32 %v1398, %v1845
      %v1847 = vpop.f32.mrf.mxu0
      %1848 = vmatprep.mubr.bf16.mxu0 0
      %1849 = vmatmul.mubr.bf16.gmra.mxu0 %v1746
      %v1850 = vpop.f32.mrf.mxu0
      %v1851 = vadd.f32 %v1403, %v1850
      %v1852 = vpop.f32.mrf.mxu0
      %v1853 = vpop.f32.mrf.mxu0
      %v1854 = vadd.f32 %v1406, %v1853
      %v1855 = vpop.f32.mrf.mxu0
      %1856 = vmatprep.mubr.bf16.mxu0 0
      %1857 = vmatmul.mubr.bf16.gmra.mxu0 %v1749
      %v1858 = vpop.f32.mrf.mxu0
      %v1859 = vadd.f32 %v1411, %v1858
      %v1860 = vpop.f32.mrf.mxu0
      %v1861 = vpop.f32.mrf.mxu0
      %v1862 = vadd.f32 %v1414, %v1861
      %v1863 = vpop.f32.mrf.mxu0
      %1864 = vmatprep.mubr.bf16.mxu0 0
      %1865 = vmatmul.mubr.bf16.gmra.mxu0 %v1752
      %v1866 = vpop.f32.mrf.mxu0
      %v1867 = vadd.f32 %v1419, %v1866
      %v1868 = vpop.f32.mrf.mxu0
      %v1869 = vpop.f32.mrf.mxu0
      %v1870 = vadd.f32 %v1422, %v1869
      %v1871 = vpop.f32.mrf.mxu0
      %1872 = vmatprep.mubr.bf16.mxu0 0
      %1873 = vmatmul.mubr.bf16.gmra.mxu0 %v1755
      %v1874 = vpop.f32.mrf.mxu0
      %v1875 = vadd.f32 %v1427, %v1874
      %v1876 = vpop.f32.mrf.mxu0
      %v1877 = vpop.f32.mrf.mxu0
      %v1878 = vadd.f32 %v1430, %v1877
      %v1879 = vpop.f32.mrf.mxu0
      %1880 = vmatprep.mubr.bf16.mxu0 0
      %1881 = vmatmul.mubr.bf16.gmra.mxu0 %v1758
      %v1882 = vpop.f32.mrf.mxu0
      %v1883 = vadd.f32 %v1435, %v1882
      %v1884 = vpop.f32.mrf.mxu0
      %v1885 = vpop.f32.mrf.mxu0
      %v1886 = vadd.f32 %v1438, %v1885
      %v1887 = vpop.f32.mrf.mxu0
      %1888 = vmatprep.mubr.bf16.mxu0 0
      %1889 = vmatmul.mubr.bf16.gmra.mxu0 %v1761
      %v1890 = vpop.f32.mrf.mxu0
      %v1891 = vadd.f32 %v1443, %v1890
      %v1892 = vpop.f32.mrf.mxu0
      %v1893 = vpop.f32.mrf.mxu0
      %v1894 = vadd.f32 %v1446, %v1893
      %v1895 = vpop.f32.mrf.mxu0
      %1896 = vmatprep.mubr.bf16.mxu0 0
      %1897 = vmatmul.mubr.bf16.gmra.mxu0 %v1764
      %v1898 = vpop.f32.mrf.mxu0
      %v1899 = vadd.f32 %v1451, %v1898
      %v1900 = vpop.f32.mrf.mxu0
      %v1901 = vpop.f32.mrf.mxu0
      %v1902 = vadd.f32 %v1454, %v1901
      %v1903 = vpop.f32.mrf.mxu0
      %1904 = vmatprep.mubr.bf16.mxu0 0
      %1905 = vmatmul.mubr.bf16.gmra.mxu0 %v1767
      %v1906 = vpop.f32.mrf.mxu0
      %v1907 = vadd.f32 %v1459, %v1906
      %v1908 = vpop.f32.mrf.mxu0
      %v1909 = vpop.f32.mrf.mxu0
      %v1910 = vadd.f32 %v1462, %v1909
      %v1911 = vpop.f32.mrf.mxu0
      %1912 = vmatprep.mubr.bf16.mxu0 0
      %1913 = vmatmul.mubr.bf16.gmra.mxu0 %v1770
      %v1914 = vpop.f32.mrf.mxu0
      %v1915 = vadd.f32 %v1467, %v1914
      %v1916 = vpop.f32.mrf.mxu0
      %v1917 = vpop.f32.mrf.mxu0
      %v1918 = vadd.f32 %v1470, %v1917
      %v1919 = vpop.f32.mrf.mxu0
      %1920 = vmatprep.mubr.bf16.mxu0 0
      %1921 = vmatmul.mubr.bf16.gmra.mxu0 %v1773
      %v1922 = vpop.f32.mrf.mxu0
      %v1923 = vadd.f32 %v1475, %v1922
      %v1924 = vpop.f32.mrf.mxu0
      %v1925 = vpop.f32.mrf.mxu0
      %v1926 = vadd.f32 %v1478, %v1925
      %v1927 = vpop.f32.mrf.mxu0
      %1928 = vmatprep.mubr.bf16.mxu0 0
      %1929 = vmatmul.mubr.bf16.gmra.mxu0 %v1776
      %v1930 = vpop.f32.mrf.mxu0
      %v1931 = vadd.f32 %v1483, %v1930
      %v1932 = vpop.f32.mrf.mxu0
      %v1933 = vpop.f32.mrf.mxu0
      %v1934 = vadd.f32 %v1486, %v1933
      %v1935 = vpop.f32.mrf.mxu0
      %1936 = vmatprep.mubr.bf16.mxu0 0
      %1937 = vmatmul.mubr.bf16.gmra.mxu0 %v1779
      %v1938 = vpop.f32.mrf.mxu0
      %v1939 = vadd.f32 %v1491, %v1938
      %v1940 = vpop.f32.mrf.mxu0
      %v1941 = vpop.f32.mrf.mxu0
      %v1942 = vadd.f32 %v1494, %v1941
      %v1943 = vpop.f32.mrf.mxu0
      %1944 = vdwg.mxu0
      %v1945 = vld [vmem:[%s163 + $0x8] sm:$0xf]
      %v1946 = vld [vmem:[%s163 + $0xc] sm:$0xf]
      %v1947 = vld [vmem:[%s163 + $0x10] sm:$0xf]
      %v1948 = vld [vmem:[%s163 + $0x14] sm:$0xf]
      %v1949 = vld [vmem:[%s163 + $0x18] sm:$0xf]
      %v1950 = vld [vmem:[%s163 + $0x1c] sm:$0xf]
      %v1951 = vld [vmem:[%s163 + $0x20] sm:$0xf]
      %v1952 = vld [vmem:[%s163 + $0x24] sm:$0xf]
      %v1953 = vld [vmem:[%s163 + $0x28] sm:$0xf]
      %v1954 = vld [vmem:[%s163 + $0x2c] sm:$0xf]
      %v1955 = vld [vmem:[%s163 + $0x30] sm:$0xf]
      %v1956 = vld [vmem:[%s163 + $0x34] sm:$0xf]
      %v1957 = vld [vmem:[%s163 + $0x38] sm:$0xf]
      %v1958 = vld [vmem:[%s163 + $0x3c] sm:$0xf]
      %v1959 = vld [vmem:[%s163 + $0x40] sm:$0xf]
      %v1960 = vld [vmem:[%s163 + $0x44] sm:$0xf]
      %v1961 = vld [vmem:[%s163 + $0x48] sm:$0xf]
      %v1962 = vld [vmem:[%s163 + $0x4c] sm:$0xf]
      %v1963 = vld [vmem:[%s163 + $0x50] sm:$0xf]
      %v1964 = vld [vmem:[%s163 + $0x54] sm:$0xf]
      %v1965 = vld [vmem:[%s163 + $0x58] sm:$0xf]
      %v1966 = vld [vmem:[%s163 + $0x5c] sm:$0xf]
      %v1967 = vld [vmem:[%s163 + $0x60] sm:$0xf]
      %v1968 = vld [vmem:[%s163 + $0x64] sm:$0xf]
      %v1969 = vld [vmem:[%s163 + $0x68] sm:$0xf]
      %v1970 = vld [vmem:[%s163 + $0x6c] sm:$0xf]
      %v1971 = vld [vmem:[%s163 + $0x70] sm:$0xf]
      %v1972 = vld [vmem:[%s163 + $0x74] sm:$0xf]
      %v1973 = vld [vmem:[%s163 + $0x78] sm:$0xf]
      %v1974 = vld [vmem:[%s163 + $0x7c] sm:$0xf]
      %v1975 = vld [vmem:[%s163 + $0x80] sm:$0xf]
      %v1976 = vld [vmem:[%s163 + $0x84] sm:$0xf]
      %v1977 = vld [vmem:[%s163 + $0x88] sm:$0x1]
      %v1978 = vsel %vm619, 1, 0
      %v1979 = vsel %vm620, 1, 0
      %v1980 = vsel %vm621, 1, 0
      %v1981 = vsel %vm622, 1, 0
      %v1982 = vsel %vm623, 1, 0
      %v1983 = vsel %vm624, 1, 0
      %v1984 = vsel %vm625, 1, 0
      %v1985 = vsel %vm626, 1, 0
      %v1986 = vsel %vm627, 1, 0
      %v1987 = vsel %vm628, 1, 0
      %v1988 = vsel %vm629, 1, 0
      %v1989 = vsel %vm630, 1, 0
      %v1990 = vsel %vm631, 1, 0
      %v1991 = vsel %vm632, 1, 0
      %v1992 = vsel %vm633, 1, 0
      %v1993 = vsel %vm634, 1, 0
      %v1994 = vsel %vm635, 1, 0
      %v1995 = vsel %vm636, 1, 0
      %v1996 = vsel %vm637, 1, 0
      %v1997 = vsel %vm638, 1, 0
      %v1998 = vsel %vm639, 1, 0
      %v1999 = vsel %vm640, 1, 0
      %v2000 = vsel %vm641, 1, 0
      %v2001 = vsel %vm642, 1, 0
      %v2002 = vsel %vm643, 1, 0
      %v2003 = vsel %vm644, 1, 0
      %v2004 = vsel %vm645, 1, 0
      %v2005 = vsel %vm646, 1, 0
      %v2006 = vsel %vm647, 1, 0
      %v2007 = vsel %vm648, 1, 0
      %v2008 = vsel %vm649, 1, 0
      %v2009 = vsel %vm650, 1, 0
      %vm2010 = vcmp.eq.s32.totalorder %v1978, 1
      %vm2011 = vcmp.eq.s32.totalorder %v1979, 1
      %vm2012 = vcmp.eq.s32.totalorder %v1980, 1
      %vm2013 = vcmp.eq.s32.totalorder %v1981, 1
      %vm2014 = vcmp.eq.s32.totalorder %v1982, 1
      %vm2015 = vcmp.eq.s32.totalorder %v1983, 1
      %vm2016 = vcmp.eq.s32.totalorder %v1984, 1
      %vm2017 = vcmp.eq.s32.totalorder %v1985, 1
      %vm2018 = vcmp.eq.s32.totalorder %v1986, 1
      %vm2019 = vcmp.eq.s32.totalorder %v1987, 1
      %vm2020 = vcmp.eq.s32.totalorder %v1988, 1
      %vm2021 = vcmp.eq.s32.totalorder %v1989, 1
      %vm2022 = vcmp.eq.s32.totalorder %v1990, 1
      %vm2023 = vcmp.eq.s32.totalorder %v1991, 1
      %vm2024 = vcmp.eq.s32.totalorder %v1992, 1
      %vm2025 = vcmp.eq.s32.totalorder %v1993, 1
      %vm2026 = vcmp.eq.s32.totalorder %v1994, 1
      %vm2027 = vcmp.eq.s32.totalorder %v1995, 1
      %vm2028 = vcmp.eq.s32.totalorder %v1996, 1
      %vm2029 = vcmp.eq.s32.totalorder %v1997, 1
      %vm2030 = vcmp.eq.s32.totalorder %v1998, 1
      %vm2031 = vcmp.eq.s32.totalorder %v1999, 1
      %vm2032 = vcmp.eq.s32.totalorder %v2000, 1
      %vm2033 = vcmp.eq.s32.totalorder %v2001, 1
      %vm2034 = vcmp.eq.s32.totalorder %v2002, 1
      %vm2035 = vcmp.eq.s32.totalorder %v2003, 1
      %vm2036 = vcmp.eq.s32.totalorder %v2004, 1
      %vm2037 = vcmp.eq.s32.totalorder %v2005, 1
      %vm2038 = vcmp.eq.s32.totalorder %v2006, 1
      %vm2039 = vcmp.eq.s32.totalorder %v2007, 1
      %vm2040 = vcmp.eq.s32.totalorder %v2008, 1
      %vm2041 = vcmp.eq.s32.totalorder %v2009, 1
      %vm2042 = vmpackc.low %vm2010, %vm2010
      %vm2043 = vmpackc.low %vm2011, %vm2011
      %vm2044 = vmpackc.low %vm2012, %vm2012
      %vm2045 = vmpackc.low %vm2013, %vm2013
      %vm2046 = vmpackc.low %vm2014, %vm2014
      %vm2047 = vmpackc.low %vm2015, %vm2015
      %vm2048 = vmpackc.low %vm2016, %vm2016
      %vm2049 = vmpackc.low %vm2017, %vm2017
      %vm2050 = vmpackc.low %vm2018, %vm2018
      %vm2051 = vmpackc.low %vm2019, %vm2019
      %vm2052 = vmpackc.low %vm2020, %vm2020
      %vm2053 = vmpackc.low %vm2021, %vm2021
      %vm2054 = vmpackc.low %vm2022, %vm2022
      %vm2055 = vmpackc.low %vm2023, %vm2023
      %vm2056 = vmpackc.low %vm2024, %vm2024
      %vm2057 = vmpackc.low %vm2025, %vm2025
      %vm2058 = vmpackc.low %vm2026, %vm2026
      %vm2059 = vmpackc.low %vm2027, %vm2027
      %vm2060 = vmpackc.low %vm2028, %vm2028
      %vm2061 = vmpackc.low %vm2029, %vm2029
      %vm2062 = vmpackc.low %vm2030, %vm2030
      %vm2063 = vmpackc.low %vm2031, %vm2031
      %vm2064 = vmpackc.low %vm2032, %vm2032
      %vm2065 = vmpackc.low %vm2033, %vm2033
      %vm2066 = vmpackc.low %vm2034, %vm2034
      %vm2067 = vmpackc.low %vm2035, %vm2035
      %vm2068 = vmpackc.low %vm2036, %vm2036
      %vm2069 = vmpackc.low %vm2037, %vm2037
      %vm2070 = vmpackc.low %vm2038, %vm2038
      %vm2071 = vmpackc.low %vm2039, %vm2039
      %vm2072 = vmpackc.low %vm2040, %vm2040
      %vm2073 = vmpackc.low %vm2041, %vm2041
      %v2074 = vsel %vm2042, 65537, 0
      %v2075 = vsel %vm2043, 65537, 0
      %v2076 = vsel %vm2044, 65537, 0
      %v2077 = vsel %vm2045, 65537, 0
      %v2078 = vsel %vm2046, 65537, 0
      %v2079 = vsel %vm2047, 65537, 0
      %v2080 = vsel %vm2048, 65537, 0
      %v2081 = vsel %vm2049, 65537, 0
      %v2082 = vsel %vm2050, 65537, 0
      %v2083 = vsel %vm2051, 65537, 0
      %v2084 = vsel %vm2052, 65537, 0
      %v2085 = vsel %vm2053, 65537, 0
      %v2086 = vsel %vm2054, 65537, 0
      %v2087 = vsel %vm2055, 65537, 0
      %v2088 = vsel %vm2056, 65537, 0
      %v2089 = vsel %vm2057, 65537, 0
      %v2090 = vsel %vm2058, 65537, 0
      %v2091 = vsel %vm2059, 65537, 0
      %v2092 = vsel %vm2060, 65537, 0
      %v2093 = vsel %vm2061, 65537, 0
      %v2094 = vsel %vm2062, 65537, 0
      %v2095 = vsel %vm2063, 65537, 0
      %v2096 = vsel %vm2064, 65537, 0
      %v2097 = vsel %vm2065, 65537, 0
      %v2098 = vsel %vm2066, 65537, 0
      %v2099 = vsel %vm2067, 65537, 0
      %v2100 = vsel %vm2068, 65537, 0
      %v2101 = vsel %vm2069, 65537, 0
      %v2102 = vsel %vm2070, 65537, 0
      %v2103 = vsel %vm2071, 65537, 0
      %v2104 = vsel %vm2072, 65537, 0
      %v2105 = vsel %vm2073, 65537, 0
      %vm2106 = vsmask.f32 256
      %vm2107 = vsmask.f32 4368
      %vm2108 = vmor %vm2106, %vm2107
      %v2110 = vshrl.u32 %v2074, 16
      %v2112 = vrot.slane %v2110, 7
      %v2113 = vshll.u32 %v2074, 16
      %v2115 = vor.u32 %v2112, %v2113
      %v2116 = vrot.slane %v2112, 4
      %v2118 = vshrl.u32 %v2075, 16
      %v2120 = vrot.slane %v2118, 7
      %v2121 = vshll.u32 %v2075, 16
      %v2123 = vor.u32 %v2120, %v2121
      %v2124 = vsel %vm2108, %v2116, %v2123
      %v2125 = vrot.slane %v2120, 4
      %v2127 = vshrl.u32 %v2076, 16
      %v2129 = vrot.slane %v2127, 7
      %v2130 = vshll.u32 %v2076, 16
      %v2132 = vor.u32 %v2129, %v2130
      %v2133 = vsel %vm2108, %v2125, %v2132
      %v2134 = vrot.slane %v2129, 4
      %v2136 = vshrl.u32 %v2077, 16
      %v2138 = vrot.slane %v2136, 7
      %v2139 = vshll.u32 %v2077, 16
      %v2141 = vor.u32 %v2138, %v2139
      %v2142 = vsel %vm2108, %v2134, %v2141
      %v2143 = vrot.slane %v2138, 4
      %v2145 = vshrl.u32 %v2078, 16
      %v2147 = vrot.slane %v2145, 7
      %v2148 = vshll.u32 %v2078, 16
      %v2150 = vor.u32 %v2147, %v2148
      %v2151 = vsel %vm2108, %v2143, %v2150
      %v2152 = vrot.slane %v2147, 4
      %v2154 = vshrl.u32 %v2079, 16
      %v2156 = vrot.slane %v2154, 7
      %v2157 = vshll.u32 %v2079, 16
      %v2159 = vor.u32 %v2156, %v2157
      %v2160 = vsel %vm2108, %v2152, %v2159
      %v2161 = vrot.slane %v2156, 4
      %v2163 = vshrl.u32 %v2080, 16
      %v2165 = vrot.slane %v2163, 7
      %v2166 = vshll.u32 %v2080, 16
      %v2168 = vor.u32 %v2165, %v2166
      %v2169 = vsel %vm2108, %v2161, %v2168
      %v2170 = vrot.slane %v2165, 4
      %v2172 = vshrl.u32 %v2081, 16
      %v2174 = vrot.slane %v2172, 7
      %v2175 = vshll.u32 %v2081, 16
      %v2177 = vor.u32 %v2174, %v2175
      %v2178 = vsel %vm2108, %v2170, %v2177
      %v2179 = vrot.slane %v2174, 4
      %v2181 = vshrl.u32 %v2082, 16
      %v2183 = vrot.slane %v2181, 7
      %v2184 = vshll.u32 %v2082, 16
      %v2186 = vor.u32 %v2183, %v2184
      %v2187 = vsel %vm2108, %v2179, %v2186
      %v2188 = vrot.slane %v2183, 4
      %v2190 = vshrl.u32 %v2083, 16
      %v2192 = vrot.slane %v2190, 7
      %v2193 = vshll.u32 %v2083, 16
      %v2195 = vor.u32 %v2192, %v2193
      %v2196 = vsel %vm2108, %v2188, %v2195
      %v2197 = vrot.slane %v2192, 4
      %v2199 = vshrl.u32 %v2084, 16
      %v2201 = vrot.slane %v2199, 7
      %v2202 = vshll.u32 %v2084, 16
      %v2204 = vor.u32 %v2201, %v2202
      %v2205 = vsel %vm2108, %v2197, %v2204
      %v2206 = vrot.slane %v2201, 4
      %v2208 = vshrl.u32 %v2085, 16
      %v2210 = vrot.slane %v2208, 7
      %v2211 = vshll.u32 %v2085, 16
      %v2213 = vor.u32 %v2210, %v2211
      %v2214 = vsel %vm2108, %v2206, %v2213
      %v2215 = vrot.slane %v2210, 4
      %v2217 = vshrl.u32 %v2086, 16
      %v2219 = vrot.slane %v2217, 7
      %v2220 = vshll.u32 %v2086, 16
      %v2222 = vor.u32 %v2219, %v2220
      %v2223 = vsel %vm2108, %v2215, %v2222
      %v2224 = vrot.slane %v2219, 4
      %v2226 = vshrl.u32 %v2087, 16
      %v2228 = vrot.slane %v2226, 7
      %v2229 = vshll.u32 %v2087, 16
      %v2231 = vor.u32 %v2228, %v2229
      %v2232 = vsel %vm2108, %v2224, %v2231
      %v2233 = vrot.slane %v2228, 4
      %v2235 = vshrl.u32 %v2088, 16
      %v2237 = vrot.slane %v2235, 7
      %v2238 = vshll.u32 %v2088, 16
      %v2240 = vor.u32 %v2237, %v2238
      %v2241 = vsel %vm2108, %v2233, %v2240
      %v2242 = vrot.slane %v2237, 4
      %v2244 = vshrl.u32 %v2089, 16
      %v2246 = vrot.slane %v2244, 7
      %v2247 = vshll.u32 %v2089, 16
      %v2249 = vor.u32 %v2246, %v2247
      %v2250 = vsel %vm2108, %v2242, %v2249
      %v2251 = vrot.slane %v2246, 4
      %v2253 = vshrl.u32 %v2090, 16
      %v2255 = vrot.slane %v2253, 7
      %v2256 = vshll.u32 %v2090, 16
      %v2258 = vor.u32 %v2255, %v2256
      %v2259 = vsel %vm2108, %v2251, %v2258
      %v2260 = vrot.slane %v2255, 4
      %v2262 = vshrl.u32 %v2091, 16
      %v2264 = vrot.slane %v2262, 7
      %v2265 = vshll.u32 %v2091, 16
      %v2267 = vor.u32 %v2264, %v2265
      %v2268 = vsel %vm2108, %v2260, %v2267
      %v2269 = vrot.slane %v2264, 4
      %v2271 = vshrl.u32 %v2092, 16
      %v2273 = vrot.slane %v2271, 7
      %v2274 = vshll.u32 %v2092, 16
      %v2276 = vor.u32 %v2273, %v2274
      %v2277 = vsel %vm2108, %v2269, %v2276
      %v2278 = vrot.slane %v2273, 4
      %v2280 = vshrl.u32 %v2093, 16
      %v2282 = vrot.slane %v2280, 7
      %v2283 = vshll.u32 %v2093, 16
      %v2285 = vor.u32 %v2282, %v2283
      %v2286 = vsel %vm2108, %v2278, %v2285
      %v2287 = vrot.slane %v2282, 4
      %v2289 = vshrl.u32 %v2094, 16
      %v2291 = vrot.slane %v2289, 7
      %v2292 = vshll.u32 %v2094, 16
      %v2294 = vor.u32 %v2291, %v2292
      %v2295 = vsel %vm2108, %v2287, %v2294
      %v2296 = vrot.slane %v2291, 4
      %v2298 = vshrl.u32 %v2095, 16
      %v2300 = vrot.slane %v2298, 7
      %v2301 = vshll.u32 %v2095, 16
      %v2303 = vor.u32 %v2300, %v2301
      %v2304 = vsel %vm2108, %v2296, %v2303
      %v2305 = vrot.slane %v2300, 4
      %v2307 = vshrl.u32 %v2096, 16
      %v2309 = vrot.slane %v2307, 7
      %v2310 = vshll.u32 %v2096, 16
      %v2312 = vor.u32 %v2309, %v2310
      %v2313 = vsel %vm2108, %v2305, %v2312
      %v2314 = vrot.slane %v2309, 4
      %v2316 = vshrl.u32 %v2097, 16
      %v2318 = vrot.slane %v2316, 7
      %v2319 = vshll.u32 %v2097, 16
      %v2321 = vor.u32 %v2318, %v2319
      %v2322 = vsel %vm2108, %v2314, %v2321
      %v2323 = vrot.slane %v2318, 4
      %v2325 = vshrl.u32 %v2098, 16
      %v2327 = vrot.slane %v2325, 7
      %v2328 = vshll.u32 %v2098, 16
      %v2330 = vor.u32 %v2327, %v2328
      %v2331 = vsel %vm2108, %v2323, %v2330
      %v2332 = vrot.slane %v2327, 4
      %v2334 = vshrl.u32 %v2099, 16
      %v2336 = vrot.slane %v2334, 7
      %v2337 = vshll.u32 %v2099, 16
      %v2339 = vor.u32 %v2336, %v2337
      %v2340 = vsel %vm2108, %v2332, %v2339
      %v2341 = vrot.slane %v2336, 4
      %v2343 = vshrl.u32 %v2100, 16
      %v2345 = vrot.slane %v2343, 7
      %v2346 = vshll.u32 %v2100, 16
      %v2348 = vor.u32 %v2345, %v2346
      %v2349 = vsel %vm2108, %v2341, %v2348
      %v2350 = vrot.slane %v2345, 4
      %v2352 = vshrl.u32 %v2101, 16
      %v2354 = vrot.slane %v2352, 7
      %v2355 = vshll.u32 %v2101, 16
      %v2357 = vor.u32 %v2354, %v2355
      %v2358 = vsel %vm2108, %v2350, %v2357
      %v2359 = vrot.slane %v2354, 4
      %v2361 = vshrl.u32 %v2102, 16
      %v2363 = vrot.slane %v2361, 7
      %v2364 = vshll.u32 %v2102, 16
      %v2366 = vor.u32 %v2363, %v2364
      %v2367 = vsel %vm2108, %v2359, %v2366
      %v2368 = vrot.slane %v2363, 4
      %v2370 = vshrl.u32 %v2103, 16
      %v2372 = vrot.slane %v2370, 7
      %v2373 = vshll.u32 %v2103, 16
      %v2375 = vor.u32 %v2372, %v2373
      %v2376 = vsel %vm2108, %v2368, %v2375
      %v2377 = vrot.slane %v2372, 4
      %v2379 = vshrl.u32 %v2104, 16
      %v2381 = vrot.slane %v2379, 7
      %v2382 = vshll.u32 %v2104, 16
      %v2384 = vor.u32 %v2381, %v2382
      %v2385 = vsel %vm2108, %v2377, %v2384
      %v2386 = vrot.slane %v2381, 4
      %v2388 = vshrl.u32 %v2105, 16
      %v2390 = vrot.slane %v2388, 7
      %v2391 = vshll.u32 %v2105, 16
      %v2393 = vor.u32 %v2390, %v2391
      %v2394 = vsel %vm2108, %v2386, %v2393
      %v2395 = vrot.slane %v2390, 4
      %vm2396 = vcmp.ne.s16.totalorder %v2115, 0
      %vm2397 = vcmp.ne.s16.totalorder %v2124, 0
      %vm2398 = vcmp.ne.s16.totalorder %v2133, 0
      %vm2399 = vcmp.ne.s16.totalorder %v2142, 0
      %vm2400 = vcmp.ne.s16.totalorder %v2151, 0
      %vm2401 = vcmp.ne.s16.totalorder %v2160, 0
      %vm2402 = vcmp.ne.s16.totalorder %v2169, 0
      %vm2403 = vcmp.ne.s16.totalorder %v2178, 0
      %vm2404 = vcmp.ne.s16.totalorder %v2187, 0
      %vm2405 = vcmp.ne.s16.totalorder %v2196, 0
      %vm2406 = vcmp.ne.s16.totalorder %v2205, 0
      %vm2407 = vcmp.ne.s16.totalorder %v2214, 0
      %vm2408 = vcmp.ne.s16.totalorder %v2223, 0
      %vm2409 = vcmp.ne.s16.totalorder %v2232, 0
      %vm2410 = vcmp.ne.s16.totalorder %v2241, 0
      %vm2411 = vcmp.ne.s16.totalorder %v2250, 0
      %vm2412 = vcmp.ne.s16.totalorder %v2259, 0
      %vm2413 = vcmp.ne.s16.totalorder %v2268, 0
      %vm2414 = vcmp.ne.s16.totalorder %v2277, 0
      %vm2415 = vcmp.ne.s16.totalorder %v2286, 0
      %vm2416 = vcmp.ne.s16.totalorder %v2295, 0
      %vm2417 = vcmp.ne.s16.totalorder %v2304, 0
      %vm2418 = vcmp.ne.s16.totalorder %v2313, 0
      %vm2419 = vcmp.ne.s16.totalorder %v2322, 0
      %vm2420 = vcmp.ne.s16.totalorder %v2331, 0
      %vm2421 = vcmp.ne.s16.totalorder %v2340, 0
      %vm2422 = vcmp.ne.s16.totalorder %v2349, 0
      %vm2423 = vcmp.ne.s16.totalorder %v2358, 0
      %vm2424 = vcmp.ne.s16.totalorder %v2367, 0
      %vm2425 = vcmp.ne.s16.totalorder %v2376, 0
      %vm2426 = vcmp.ne.s16.totalorder %v2385, 0
      %vm2427 = vcmp.ne.s16.totalorder %v2394, 0
      %vm2428 = vcmp.ne.s16.totalorder %v2395, 0
      %v2429 = vsel %vm2396, %v1945, 0
      %v2430 = vsel %vm2397, %v1946, 0
      %v2431 = vsel %vm2398, %v1947, 0
      %v2432 = vsel %vm2399, %v1948, 0
      %v2433 = vsel %vm2400, %v1949, 0
      %v2434 = vsel %vm2401, %v1950, 0
      %v2435 = vsel %vm2402, %v1951, 0
      %v2436 = vsel %vm2403, %v1952, 0
      %v2437 = vsel %vm2404, %v1953, 0
      %v2438 = vsel %vm2405, %v1954, 0
      %v2439 = vsel %vm2406, %v1955, 0
      %v2440 = vsel %vm2407, %v1956, 0
      %v2441 = vsel %vm2408, %v1957, 0
      %v2442 = vsel %vm2409, %v1958, 0
      %v2443 = vsel %vm2410, %v1959, 0
      %v2444 = vsel %vm2411, %v1960, 0
      %v2445 = vsel %vm2412, %v1961, 0
      %v2446 = vsel %vm2413, %v1962, 0
      %v2447 = vsel %vm2414, %v1963, 0
      %v2448 = vsel %vm2415, %v1964, 0
      %v2449 = vsel %vm2416, %v1965, 0
      %v2450 = vsel %vm2417, %v1966, 0
      %v2451 = vsel %vm2418, %v1967, 0
      %v2452 = vsel %vm2419, %v1968, 0
      %v2453 = vsel %vm2420, %v1969, 0
      %v2454 = vsel %vm2421, %v1970, 0
      %v2455 = vsel %vm2422, %v1971, 0
      %v2456 = vsel %vm2423, %v1972, 0
      %v2457 = vsel %vm2424, %v1973, 0
      %v2458 = vsel %vm2425, %v1974, 0
      %v2459 = vsel %vm2426, %v1975, 0
      %v2460 = vsel %vm2427, %v1976, 0
      %v2461 = vsel %vm2428, %v1977, 0
      %s2462 = scalar_lea.vmem %s1, 4
      %v2463 = vld [vmem:[%s2462] sm:$0x3]
      %v2497 = vunpack.c.l.b16 %v2429
      %v2498 = vunpack.c.l.b16 %v2430
      %v2499 = vunpack.c.l.b16 %v2431
      %v2500 = vunpack.c.l.b16 %v2432
      %v2501 = vunpack.c.l.b16 %v2433
      %v2502 = vunpack.c.l.b16 %v2434
      %v2503 = vunpack.c.l.b16 %v2435
      %v2504 = vunpack.c.l.b16 %v2436
      %v2505 = vunpack.c.l.b16 %v2437
      %v2506 = vunpack.c.l.b16 %v2438
      %v2507 = vunpack.c.l.b16 %v2439
      %v2508 = vunpack.c.l.b16 %v2440
      %v2509 = vunpack.c.l.b16 %v2441
      %v2510 = vunpack.c.l.b16 %v2442
      %v2511 = vunpack.c.l.b16 %v2443
      %v2512 = vunpack.c.l.b16 %v2444
      %v2513 = vunpack.c.l.b16 %v2445
      %v2514 = vunpack.c.l.b16 %v2446
      %v2515 = vunpack.c.l.b16 %v2447
      %v2516 = vunpack.c.l.b16 %v2448
      %v2517 = vunpack.c.l.b16 %v2449
      %v2518 = vunpack.c.l.b16 %v2450
      %v2519 = vunpack.c.l.b16 %v2451
      %v2520 = vunpack.c.l.b16 %v2452
      %v2521 = vunpack.c.l.b16 %v2453
      %v2522 = vunpack.c.l.b16 %v2454
      %v2523 = vunpack.c.l.b16 %v2455
      %v2524 = vunpack.c.l.b16 %v2456
      %v2525 = vunpack.c.l.b16 %v2457
      %v2526 = vunpack.c.l.b16 %v2458
      %v2527 = vunpack.c.l.b16 %v2459
      %v2528 = vunpack.c.l.b16 %v2460
      %v2529 = vunpack.c.l.b16 %v2461
      %v2530 = vpack.c.b16 %v2498, %v2497
      %v2531 = vpack.c.b16 %v2500, %v2499
      %v2532 = vpack.c.b16 %v2502, %v2501
      %v2533 = vpack.c.b16 %v2504, %v2503
      %v2534 = vpack.c.b16 %v2506, %v2505
      %v2535 = vpack.c.b16 %v2508, %v2507
      %v2536 = vpack.c.b16 %v2510, %v2509
      %v2537 = vpack.c.b16 %v2512, %v2511
      %v2538 = vpack.c.b16 %v2514, %v2513
      %v2539 = vpack.c.b16 %v2516, %v2515
      %v2540 = vpack.c.b16 %v2518, %v2517
      %v2541 = vpack.c.b16 %v2520, %v2519
      %v2542 = vpack.c.b16 %v2522, %v2521
      %v2543 = vpack.c.b16 %v2524, %v2523
      %v2544 = vpack.c.b16 %v2526, %v2525
      %v2545 = vpack.c.b16 %v2528, %v2527
      %v2546 = vpack.c.b16 %v2529, %v2529
      %vm2547 = vsmask.f32 7424
      %v2549 = vshrl.u32 %v2530, 16
      %v2551 = vshll.u32 %v2530, 16
      %v2553 = vrot.slane %v2551, 1
      %v2554 = vor.u32 %v2549, %v2553
      %v2556 = vshll.u32 %v2531, 16
      %v2558 = vrot.slane %v2556, 1
      %v2559 = vsel %vm2547, %v2554, %v2558
      %v2560 = vshrl.u32 %v2531, 16
      %v2562 = vor.u32 %v2560, %v2558
      %v2564 = vshll.u32 %v2532, 16
      %v2566 = vrot.slane %v2564, 1
      %v2567 = vsel %vm2547, %v2562, %v2566
      %v2568 = vshrl.u32 %v2532, 16
      %v2570 = vor.u32 %v2568, %v2566
      %v2572 = vshll.u32 %v2533, 16
      %v2574 = vrot.slane %v2572, 1
      %v2575 = vsel %vm2547, %v2570, %v2574
      %v2576 = vshrl.u32 %v2533, 16
      %v2578 = vor.u32 %v2576, %v2574
      %v2580 = vshll.u32 %v2534, 16
      %v2582 = vrot.slane %v2580, 1
      %v2583 = vsel %vm2547, %v2578, %v2582
      %v2584 = vshrl.u32 %v2534, 16
      %v2586 = vor.u32 %v2584, %v2582
      %v2588 = vshll.u32 %v2535, 16
      %v2590 = vrot.slane %v2588, 1
      %v2591 = vsel %vm2547, %v2586, %v2590
      %v2592 = vshrl.u32 %v2535, 16
      %v2594 = vor.u32 %v2592, %v2590
      %v2596 = vshll.u32 %v2536, 16
      %v2598 = vrot.slane %v2596, 1
      %v2599 = vsel %vm2547, %v2594, %v2598
      %v2600 = vshrl.u32 %v2536, 16
      %v2602 = vor.u32 %v2600, %v2598
      %v2604 = vshll.u32 %v2537, 16
      %v2606 = vrot.slane %v2604, 1
      %v2607 = vsel %vm2547, %v2602, %v2606
      %v2608 = vshrl.u32 %v2537, 16
      %v2610 = vor.u32 %v2608, %v2606
      %v2612 = vshll.u32 %v2538, 16
      %v2614 = vrot.slane %v2612, 1
      %v2615 = vsel %vm2547, %v2610, %v2614
      %v2616 = vshrl.u32 %v2538, 16
      %v2618 = vor.u32 %v2616, %v2614
      %v2620 = vshll.u32 %v2539, 16
      %v2622 = vrot.slane %v2620, 1
      %v2623 = vsel %vm2547, %v2618, %v2622
      %v2624 = vshrl.u32 %v2539, 16
      %v2626 = vor.u32 %v2624, %v2622
      %v2628 = vshll.u32 %v2540, 16
      %v2630 = vrot.slane %v2628, 1
      %v2631 = vsel %vm2547, %v2626, %v2630
      %v2632 = vshrl.u32 %v2540, 16
      %v2634 = vor.u32 %v2632, %v2630
      %v2636 = vshll.u32 %v2541, 16
      %v2638 = vrot.slane %v2636, 1
      %v2639 = vsel %vm2547, %v2634, %v2638
      %v2640 = vshrl.u32 %v2541, 16
      %v2642 = vor.u32 %v2640, %v2638
      %v2644 = vshll.u32 %v2542, 16
      %v2646 = vrot.slane %v2644, 1
      %v2647 = vsel %vm2547, %v2642, %v2646
      %v2648 = vshrl.u32 %v2542, 16
      %v2650 = vor.u32 %v2648, %v2646
      %v2652 = vshll.u32 %v2543, 16
      %v2654 = vrot.slane %v2652, 1
      %v2655 = vsel %vm2547, %v2650, %v2654
      %v2656 = vshrl.u32 %v2543, 16
      %v2658 = vor.u32 %v2656, %v2654
      %v2660 = vshll.u32 %v2544, 16
      %v2662 = vrot.slane %v2660, 1
      %v2663 = vsel %vm2547, %v2658, %v2662
      %v2664 = vshrl.u32 %v2544, 16
      %v2666 = vor.u32 %v2664, %v2662
      %v2668 = vshll.u32 %v2545, 16
      %v2670 = vrot.slane %v2668, 1
      %v2671 = vsel %vm2547, %v2666, %v2670
      %v2672 = vshrl.u32 %v2545, 16
      %v2674 = vor.u32 %v2672, %v2670
      %v2676 = vshll.u32 %v2546, 16
      %v2678 = vrot.slane %v2676, 1
      %v2679 = vsel %vm2547, %v2674, %v2678
      %v2681 = vsel %vm1283, %v2559, 0
      %v2684 = vsel %vm1283, %v2567, 0
      %v2687 = vsel %vm1283, %v2575, 0
      %v2690 = vsel %vm1283, %v2583, 0
      %v2693 = vsel %vm1283, %v2591, 0
      %v2696 = vsel %vm1283, %v2599, 0
      %v2699 = vsel %vm1283, %v2607, 0
      %v2702 = vsel %vm1283, %v2615, 0
      %v2705 = vsel %vm1283, %v2623, 0
      %v2708 = vsel %vm1283, %v2631, 0
      %v2711 = vsel %vm1283, %v2639, 0
      %v2714 = vsel %vm1283, %v2647, 0
      %v2717 = vsel %vm1283, %v2655, 0
      %v2720 = vsel %vm1283, %v2663, 0
      %v2723 = vsel %vm1283, %v2671, 0
      %v2726 = vsel %vm1283, %v2679, 0
      %v2729 = vsel %vm1332, %v2463, 0
      %2731 = vmatprep.subr.bf16.mxu0 0
      %2732 = vmatpush1.bf16.msra.mxu0 0
      %2733 = vmatprep.subr.bf16.mxu0 0
      %2734 = vmatpush1.bf16.msra.mxu0 0
      %2735 = vmatprep.subr.bf16.mxu0 0
      %2736 = vmatpush1.bf16.msra.mxu0 0
      %2737 = vmatprep.subr.bf16.mxu0 0
      %2738 = vmatpush1.bf16.msra.mxu0 0
      %2739 = vmatprep.subr.bf16.mxu0 0
      %2740 = vmatpush1.bf16.msra.mxu0 0
      %2741 = vmatprep.subr.bf16.mxu0 0
      %2742 = vmatpush1.bf16.msra.mxu0 0
      %2743 = vmatprep.subr.bf16.mxu0 0
      %2744 = vmatpush1.bf16.msra.mxu0 0
      %2745 = vmatprep.subr.bf16.mxu0 0
      %2746 = vmatpush1.bf16.msra.mxu0 %v2729
      %2747 = vmatprep.subr.bf16.mxu0 0
      %2748 = vmatpush2.bf16.msra.mxu0 0
      %2749 = vmatprep.subr.bf16.mxu0 0
      %2750 = vmatpush2.bf16.msra.mxu0 0
      %2751 = vmatprep.subr.bf16.mxu0 0
      %2752 = vmatpush2.bf16.msra.mxu0 0
      %2753 = vmatprep.subr.bf16.mxu0 0
      %2754 = vmatpush2.bf16.msra.mxu0 0
      %2755 = vmatprep.subr.bf16.mxu0 0
      %2756 = vmatpush2.bf16.msra.mxu0 0
      %2757 = vmatprep.subr.bf16.mxu0 0
      %2758 = vmatpush2.bf16.msra.mxu0 0
      %2759 = vmatprep.subr.bf16.mxu0 0
      %2760 = vmatpush2.bf16.msra.mxu0 0
      %2761 = vmatprep.subr.bf16.mxu0 0
      %2762 = vmatpush2.bf16.msra.mxu0 0
      %2763 = vmatprep.mubr.bf16.mxu0 0
      %2764 = vmatmul.mubr.bf16.gmra.mxu0 %v2681
      %v2765 = vpop.f32.mrf.mxu0
      %v2766 = vadd.f32 0.0, %v2765
      %v2767 = vpop.f32.mrf.mxu0
      %v2768 = vpop.f32.mrf.mxu0
      %v2769 = vadd.f32 0.0, %v2768
      %v2770 = vpop.f32.mrf.mxu0
      %2771 = vmatprep.mubr.bf16.mxu0 0
      %2772 = vmatmul.mubr.bf16.gmra.mxu0 %v2684
      %v2773 = vpop.f32.mrf.mxu0
      %v2774 = vadd.f32 0.0, %v2773
      %v2775 = vpop.f32.mrf.mxu0
      %v2776 = vpop.f32.mrf.mxu0
      %v2777 = vadd.f32 0.0, %v2776
      %v2778 = vpop.f32.mrf.mxu0
      %2779 = vmatprep.mubr.bf16.mxu0 0
      %2780 = vmatmul.mubr.bf16.gmra.mxu0 %v2687
      %v2781 = vpop.f32.mrf.mxu0
      %v2782 = vadd.f32 0.0, %v2781
      %v2783 = vpop.f32.mrf.mxu0
      %v2784 = vpop.f32.mrf.mxu0
      %v2785 = vadd.f32 0.0, %v2784
      %v2786 = vpop.f32.mrf.mxu0
      %2787 = vmatprep.mubr.bf16.mxu0 0
      %2788 = vmatmul.mubr.bf16.gmra.mxu0 %v2690
      %v2789 = vpop.f32.mrf.mxu0
      %v2790 = vadd.f32 0.0, %v2789
      %v2791 = vpop.f32.mrf.mxu0
      %v2792 = vpop.f32.mrf.mxu0
      %v2793 = vadd.f32 0.0, %v2792
      %v2794 = vpop.f32.mrf.mxu0
      %2795 = vmatprep.mubr.bf16.mxu0 0
      %2796 = vmatmul.mubr.bf16.gmra.mxu0 %v2693
      %v2797 = vpop.f32.mrf.mxu0
      %v2798 = vadd.f32 0.0, %v2797
      %v2799 = vpop.f32.mrf.mxu0
      %v2800 = vpop.f32.mrf.mxu0
      %v2801 = vadd.f32 0.0, %v2800
      %v2802 = vpop.f32.mrf.mxu0
      %2803 = vmatprep.mubr.bf16.mxu0 0
      %2804 = vmatmul.mubr.bf16.gmra.mxu0 %v2696
      %v2805 = vpop.f32.mrf.mxu0
      %v2806 = vadd.f32 0.0, %v2805
      %v2807 = vpop.f32.mrf.mxu0
      %v2808 = vpop.f32.mrf.mxu0
      %v2809 = vadd.f32 0.0, %v2808
      %v2810 = vpop.f32.mrf.mxu0
      %2811 = vmatprep.mubr.bf16.mxu0 0
      %2812 = vmatmul.mubr.bf16.gmra.mxu0 %v2699
      %v2813 = vpop.f32.mrf.mxu0
      %v2814 = vadd.f32 0.0, %v2813
      %v2815 = vpop.f32.mrf.mxu0
      %v2816 = vpop.f32.mrf.mxu0
      %v2817 = vadd.f32 0.0, %v2816
      %v2818 = vpop.f32.mrf.mxu0
      %2819 = vmatprep.mubr.bf16.mxu0 0
      %2820 = vmatmul.mubr.bf16.gmra.mxu0 %v2702
      %v2821 = vpop.f32.mrf.mxu0
      %v2822 = vadd.f32 0.0, %v2821
      %v2823 = vpop.f32.mrf.mxu0
      %v2824 = vpop.f32.mrf.mxu0
      %v2825 = vadd.f32 0.0, %v2824
      %v2826 = vpop.f32.mrf.mxu0
      %2827 = vmatprep.mubr.bf16.mxu0 0
      %2828 = vmatmul.mubr.bf16.gmra.mxu0 %v2705
      %v2829 = vpop.f32.mrf.mxu0
      %v2830 = vadd.f32 0.0, %v2829
      %v2831 = vpop.f32.mrf.mxu0
      %v2832 = vpop.f32.mrf.mxu0
      %v2833 = vadd.f32 0.0, %v2832
      %v2834 = vpop.f32.mrf.mxu0
      %2835 = vmatprep.mubr.bf16.mxu0 0
      %2836 = vmatmul.mubr.bf16.gmra.mxu0 %v2708
      %v2837 = vpop.f32.mrf.mxu0
      %v2838 = vadd.f32 0.0, %v2837
      %v2839 = vpop.f32.mrf.mxu0
      %v2840 = vpop.f32.mrf.mxu0
      %v2841 = vadd.f32 0.0, %v2840
      %v2842 = vpop.f32.mrf.mxu0
      %2843 = vmatprep.mubr.bf16.mxu0 0
      %2844 = vmatmul.mubr.bf16.gmra.mxu0 %v2711
      %v2845 = vpop.f32.mrf.mxu0
      %v2846 = vadd.f32 0.0, %v2845
      %v2847 = vpop.f32.mrf.mxu0
      %v2848 = vpop.f32.mrf.mxu0
      %v2849 = vadd.f32 0.0, %v2848
      %v2850 = vpop.f32.mrf.mxu0
      %2851 = vmatprep.mubr.bf16.mxu0 0
      %2852 = vmatmul.mubr.bf16.gmra.mxu0 %v2714
      %v2853 = vpop.f32.mrf.mxu0
      %v2854 = vadd.f32 0.0, %v2853
      %v2855 = vpop.f32.mrf.mxu0
      %v2856 = vpop.f32.mrf.mxu0
      %v2857 = vadd.f32 0.0, %v2856
      %v2858 = vpop.f32.mrf.mxu0
      %2859 = vmatprep.mubr.bf16.mxu0 0
      %2860 = vmatmul.mubr.bf16.gmra.mxu0 %v2717
      %v2861 = vpop.f32.mrf.mxu0
      %v2862 = vadd.f32 0.0, %v2861
      %v2863 = vpop.f32.mrf.mxu0
      %v2864 = vpop.f32.mrf.mxu0
      %v2865 = vadd.f32 0.0, %v2864
      %v2866 = vpop.f32.mrf.mxu0
      %2867 = vmatprep.mubr.bf16.mxu0 0
      %2868 = vmatmul.mubr.bf16.gmra.mxu0 %v2720
      %v2869 = vpop.f32.mrf.mxu0
      %v2870 = vadd.f32 0.0, %v2869
      %v2871 = vpop.f32.mrf.mxu0
      %v2872 = vpop.f32.mrf.mxu0
      %v2873 = vadd.f32 0.0, %v2872
      %v2874 = vpop.f32.mrf.mxu0
      %2875 = vmatprep.mubr.bf16.mxu0 0
      %2876 = vmatmul.mubr.bf16.gmra.mxu0 %v2723
      %v2877 = vpop.f32.mrf.mxu0
      %v2878 = vadd.f32 0.0, %v2877
      %v2879 = vpop.f32.mrf.mxu0
      %v2880 = vpop.f32.mrf.mxu0
      %v2881 = vadd.f32 0.0, %v2880
      %v2882 = vpop.f32.mrf.mxu0
      %2883 = vmatprep.mubr.bf16.mxu0 0
      %2884 = vmatmul.mubr.bf16.gmra.mxu0 %v2726
      %v2885 = vpop.f32.mrf.mxu0
      %v2886 = vadd.f32 0.0, %v2885
      %v2887 = vpop.f32.mrf.mxu0
      %v2888 = vpop.f32.mrf.mxu0
      %v2889 = vadd.f32 0.0, %v2888
      %v2890 = vpop.f32.mrf.mxu0
      %2891 = vdwg.mxu0
      %v2892 = vadd.f32 %v1819, %v2766
      %v2893 = vadd.f32 %v1822, %v2769
      %v2894 = vadd.f32 %v1827, %v2774
      %v2895 = vadd.f32 %v1830, %v2777
      %v2896 = vadd.f32 %v1835, %v2782
      %v2897 = vadd.f32 %v1838, %v2785
      %v2898 = vadd.f32 %v1843, %v2790
      %v2899 = vadd.f32 %v1846, %v2793
      %v2900 = vadd.f32 %v1851, %v2798
      %v2901 = vadd.f32 %v1854, %v2801
      %v2902 = vadd.f32 %v1859, %v2806
      %v2903 = vadd.f32 %v1862, %v2809
      %v2904 = vadd.f32 %v1867, %v2814
      %v2905 = vadd.f32 %v1870, %v2817
      %v2906 = vadd.f32 %v1875, %v2822
      %v2907 = vadd.f32 %v1878, %v2825
      %v2908 = vadd.f32 %v1883, %v2830
      %v2909 = vadd.f32 %v1886, %v2833
      %v2910 = vadd.f32 %v1891, %v2838
      %v2911 = vadd.f32 %v1894, %v2841
      %v2912 = vadd.f32 %v1899, %v2846
      %v2913 = vadd.f32 %v1902, %v2849
      %v2914 = vadd.f32 %v1907, %v2854
      %v2915 = vadd.f32 %v1910, %v2857
      %v2916 = vadd.f32 %v1915, %v2862
      %v2917 = vadd.f32 %v1918, %v2865
      %v2918 = vadd.f32 %v1923, %v2870
      %v2919 = vadd.f32 %v1926, %v2873
      %v2920 = vadd.f32 %v1931, %v2878
      %v2921 = vadd.f32 %v1934, %v2881
      %v2922 = vadd.f32 %v1939, %v2886
      %v2923 = vadd.f32 %v1942, %v2889
      %v2924 = vld [vmem:[%s163 + $0xc] sm:$0x8]
      %v2925 = vld [vmem:[%s163 + $0x10] sm:$0xf]
      %v2926 = vld [vmem:[%s163 + $0x14] sm:$0xf]
      %v2927 = vld [vmem:[%s163 + $0x18] sm:$0xf]
      %v2928 = vld [vmem:[%s163 + $0x1c] sm:$0xf]
      %v2929 = vld [vmem:[%s163 + $0x20] sm:$0xf]
      %v2930 = vld [vmem:[%s163 + $0x24] sm:$0xf]
      %v2931 = vld [vmem:[%s163 + $0x28] sm:$0xf]
      %v2932 = vld [vmem:[%s163 + $0x2c] sm:$0xf]
      %v2933 = vld [vmem:[%s163 + $0x30] sm:$0xf]
      %v2934 = vld [vmem:[%s163 + $0x34] sm:$0xf]
      %v2935 = vld [vmem:[%s163 + $0x38] sm:$0xf]
      %v2936 = vld [vmem:[%s163 + $0x3c] sm:$0xf]
      %v2937 = vld [vmem:[%s163 + $0x40] sm:$0xf]
      %v2938 = vld [vmem:[%s163 + $0x44] sm:$0xf]
      %v2939 = vld [vmem:[%s163 + $0x48] sm:$0xf]
      %v2940 = vld [vmem:[%s163 + $0x4c] sm:$0xf]
      %v2941 = vld [vmem:[%s163 + $0x50] sm:$0xf]
      %v2942 = vld [vmem:[%s163 + $0x54] sm:$0xf]
      %v2943 = vld [vmem:[%s163 + $0x58] sm:$0xf]
      %v2944 = vld [vmem:[%s163 + $0x5c] sm:$0xf]
      %v2945 = vld [vmem:[%s163 + $0x60] sm:$0xf]
      %v2946 = vld [vmem:[%s163 + $0x64] sm:$0xf]
      %v2947 = vld [vmem:[%s163 + $0x68] sm:$0xf]
      %v2948 = vld [vmem:[%s163 + $0x6c] sm:$0xf]
      %v2949 = vld [vmem:[%s163 + $0x70] sm:$0xf]
      %v2950 = vld [vmem:[%s163 + $0x74] sm:$0xf]
      %v2951 = vld [vmem:[%s163 + $0x78] sm:$0xf]
      %v2952 = vld [vmem:[%s163 + $0x7c] sm:$0xf]
      %v2953 = vld [vmem:[%s163 + $0x80] sm:$0xf]
      %v2954 = vld [vmem:[%s163 + $0x84] sm:$0xf]
      %v2955 = vld [vmem:[%s163 + $0x88] sm:$0xf]
      %v2956 = vld [vmem:[%s163 + $0x8c] sm:$0xf]
      %v2957 = vsel %vm1134, %v2924, 0
      %v2958 = vsel %vm1135, %v2925, 0
      %v2959 = vsel %vm1136, %v2926, 0
      %v2960 = vsel %vm1137, %v2927, 0
      %v2961 = vsel %vm1138, %v2928, 0
      %v2962 = vsel %vm1139, %v2929, 0
      %v2963 = vsel %vm1140, %v2930, 0
      %v2964 = vsel %vm1141, %v2931, 0
      %v2965 = vsel %vm1142, %v2932, 0
      %v2966 = vsel %vm1143, %v2933, 0
      %v2967 = vsel %vm1144, %v2934, 0
      %v2968 = vsel %vm1145, %v2935, 0
      %v2969 = vsel %vm1146, %v2936, 0
      %v2970 = vsel %vm1147, %v2937, 0
      %v2971 = vsel %vm1148, %v2938, 0
      %v2972 = vsel %vm1149, %v2939, 0
      %v2973 = vsel %vm1150, %v2940, 0
      %v2974 = vsel %vm1151, %v2941, 0
      %v2975 = vsel %vm1152, %v2942, 0
      %v2976 = vsel %vm1153, %v2943, 0
      %v2977 = vsel %vm1154, %v2944, 0
      %v2978 = vsel %vm1155, %v2945, 0
      %v2979 = vsel %vm1156, %v2946, 0
      %v2980 = vsel %vm1157, %v2947, 0
      %v2981 = vsel %vm1158, %v2948, 0
      %v2982 = vsel %vm1159, %v2949, 0
      %v2983 = vsel %vm1160, %v2950, 0
      %v2984 = vsel %vm1161, %v2951, 0
      %v2985 = vsel %vm1162, %v2952, 0
      %v2986 = vsel %vm1163, %v2953, 0
      %v2987 = vsel %vm1164, %v2954, 0
      %v2988 = vsel %vm1165, %v2955, 0
      %v2989 = vsel %vm1166, %v2956, 0
      %s2990 = scalar_lea.vmem %s1, 6
      %v2991 = vld [vmem:[%s2990] sm:$0x3]
      %v3025 = vunpack.c.l.b16 %v2957
      %v3026 = vunpack.c.l.b16 %v2958
      %v3027 = vunpack.c.l.b16 %v2959
      %v3028 = vunpack.c.l.b16 %v2960
      %v3029 = vunpack.c.l.b16 %v2961
      %v3030 = vunpack.c.l.b16 %v2962
      %v3031 = vunpack.c.l.b16 %v2963
      %v3032 = vunpack.c.l.b16 %v2964
      %v3033 = vunpack.c.l.b16 %v2965
      %v3034 = vunpack.c.l.b16 %v2966
      %v3035 = vunpack.c.l.b16 %v2967
      %v3036 = vunpack.c.l.b16 %v2968
      %v3037 = vunpack.c.l.b16 %v2969
      %v3038 = vunpack.c.l.b16 %v2970
      %v3039 = vunpack.c.l.b16 %v2971
      %v3040 = vunpack.c.l.b16 %v2972
      %v3041 = vunpack.c.l.b16 %v2973
      %v3042 = vunpack.c.l.b16 %v2974
      %v3043 = vunpack.c.l.b16 %v2975
      %v3044 = vunpack.c.l.b16 %v2976
      %v3045 = vunpack.c.l.b16 %v2977
      %v3046 = vunpack.c.l.b16 %v2978
      %v3047 = vunpack.c.l.b16 %v2979
      %v3048 = vunpack.c.l.b16 %v2980
      %v3049 = vunpack.c.l.b16 %v2981
      %v3050 = vunpack.c.l.b16 %v2982
      %v3051 = vunpack.c.l.b16 %v2983
      %v3052 = vunpack.c.l.b16 %v2984
      %v3053 = vunpack.c.l.b16 %v2985
      %v3054 = vunpack.c.l.b16 %v2986
      %v3055 = vunpack.c.l.b16 %v2987
      %v3056 = vunpack.c.l.b16 %v2988
      %v3057 = vunpack.c.l.b16 %v2989
      %v3058 = vpack.c.b16 %v3026, %v3025
      %v3059 = vpack.c.b16 %v3028, %v3027
      %v3060 = vpack.c.b16 %v3030, %v3029
      %v3061 = vpack.c.b16 %v3032, %v3031
      %v3062 = vpack.c.b16 %v3034, %v3033
      %v3063 = vpack.c.b16 %v3036, %v3035
      %v3064 = vpack.c.b16 %v3038, %v3037
      %v3065 = vpack.c.b16 %v3040, %v3039
      %v3066 = vpack.c.b16 %v3042, %v3041
      %v3067 = vpack.c.b16 %v3044, %v3043
      %v3068 = vpack.c.b16 %v3046, %v3045
      %v3069 = vpack.c.b16 %v3048, %v3047
      %v3070 = vpack.c.b16 %v3050, %v3049
      %v3071 = vpack.c.b16 %v3052, %v3051
      %v3072 = vpack.c.b16 %v3054, %v3053
      %v3073 = vpack.c.b16 %v3056, %v3055
      %v3074 = vpack.c.b16 %v3057, %v3057
      %v3076 = vshrl.u32 %v3058, 16
      %v3078 = vrot.slane %v3076, 3
      %v3079 = vshll.u32 %v3058, 16
      %v3081 = vrot.slane %v3079, 4
      %v3082 = vor.u32 %v3078, %v3081
      %v3084 = vshrl.u32 %v3059, 16
      %v3086 = vrot.slane %v3084, 3
      %v3087 = vshll.u32 %v3059, 16
      %v3089 = vrot.slane %v3087, 4
      %v3090 = vor.u32 %v3086, %v3089
      %v3091 = vsel %vm1580, %v3082, %v3090
      %v3093 = vshrl.u32 %v3060, 16
      %v3095 = vrot.slane %v3093, 3
      %v3096 = vshll.u32 %v3060, 16
      %v3098 = vrot.slane %v3096, 4
      %v3099 = vor.u32 %v3095, %v3098
      %v3100 = vsel %vm1580, %v3090, %v3099
      %v3102 = vshrl.u32 %v3061, 16
      %v3104 = vrot.slane %v3102, 3
      %v3105 = vshll.u32 %v3061, 16
      %v3107 = vrot.slane %v3105, 4
      %v3108 = vor.u32 %v3104, %v3107
      %v3109 = vsel %vm1580, %v3099, %v3108
      %v3111 = vshrl.u32 %v3062, 16
      %v3113 = vrot.slane %v3111, 3
      %v3114 = vshll.u32 %v3062, 16
      %v3116 = vrot.slane %v3114, 4
      %v3117 = vor.u32 %v3113, %v3116
      %v3118 = vsel %vm1580, %v3108, %v3117
      %v3120 = vshrl.u32 %v3063, 16
      %v3122 = vrot.slane %v3120, 3
      %v3123 = vshll.u32 %v3063, 16
      %v3125 = vrot.slane %v3123, 4
      %v3126 = vor.u32 %v3122, %v3125
      %v3127 = vsel %vm1580, %v3117, %v3126
      %v3129 = vshrl.u32 %v3064, 16
      %v3131 = vrot.slane %v3129, 3
      %v3132 = vshll.u32 %v3064, 16
      %v3134 = vrot.slane %v3132, 4
      %v3135 = vor.u32 %v3131, %v3134
      %v3136 = vsel %vm1580, %v3126, %v3135
      %v3138 = vshrl.u32 %v3065, 16
      %v3140 = vrot.slane %v3138, 3
      %v3141 = vshll.u32 %v3065, 16
      %v3143 = vrot.slane %v3141, 4
      %v3144 = vor.u32 %v3140, %v3143
      %v3145 = vsel %vm1580, %v3135, %v3144
      %v3147 = vshrl.u32 %v3066, 16
      %v3149 = vrot.slane %v3147, 3
      %v3150 = vshll.u32 %v3066, 16
      %v3152 = vrot.slane %v3150, 4
      %v3153 = vor.u32 %v3149, %v3152
      %v3154 = vsel %vm1580, %v3144, %v3153
      %v3156 = vshrl.u32 %v3067, 16
      %v3158 = vrot.slane %v3156, 3
      %v3159 = vshll.u32 %v3067, 16
      %v3161 = vrot.slane %v3159, 4
      %v3162 = vor.u32 %v3158, %v3161
      %v3163 = vsel %vm1580, %v3153, %v3162
      %v3165 = vshrl.u32 %v3068, 16
      %v3167 = vrot.slane %v3165, 3
      %v3168 = vshll.u32 %v3068, 16
      %v3170 = vrot.slane %v3168, 4
      %v3171 = vor.u32 %v3167, %v3170
      %v3172 = vsel %vm1580, %v3162, %v3171
      %v3174 = vshrl.u32 %v3069, 16
      %v3176 = vrot.slane %v3174, 3
      %v3177 = vshll.u32 %v3069, 16
      %v3179 = vrot.slane %v3177, 4
      %v3180 = vor.u32 %v3176, %v3179
      %v3181 = vsel %vm1580, %v3171, %v3180
      %v3183 = vshrl.u32 %v3070, 16
      %v3185 = vrot.slane %v3183, 3
      %v3186 = vshll.u32 %v3070, 16
      %v3188 = vrot.slane %v3186, 4
      %v3189 = vor.u32 %v3185, %v3188
      %v3190 = vsel %vm1580, %v3180, %v3189
      %v3192 = vshrl.u32 %v3071, 16
      %v3194 = vrot.slane %v3192, 3
      %v3195 = vshll.u32 %v3071, 16
      %v3197 = vrot.slane %v3195, 4
      %v3198 = vor.u32 %v3194, %v3197
      %v3199 = vsel %vm1580, %v3189, %v3198
      %v3201 = vshrl.u32 %v3072, 16
      %v3203 = vrot.slane %v3201, 3
      %v3204 = vshll.u32 %v3072, 16
      %v3206 = vrot.slane %v3204, 4
      %v3207 = vor.u32 %v3203, %v3206
      %v3208 = vsel %vm1580, %v3198, %v3207
      %v3210 = vshrl.u32 %v3073, 16
      %v3212 = vrot.slane %v3210, 3
      %v3213 = vshll.u32 %v3073, 16
      %v3215 = vrot.slane %v3213, 4
      %v3216 = vor.u32 %v3212, %v3215
      %v3217 = vsel %vm1580, %v3207, %v3216
      %v3219 = vshrl.u32 %v3074, 16
      %v3221 = vrot.slane %v3219, 3
      %v3222 = vshll.u32 %v3074, 16
      %v3224 = vrot.slane %v3222, 4
      %v3225 = vor.u32 %v3221, %v3224
      %v3226 = vsel %vm1580, %v3216, %v3225
      %v3228 = vsel %vm1283, %v3091, 0
      %v3231 = vsel %vm1283, %v3100, 0
      %v3234 = vsel %vm1283, %v3109, 0
      %v3237 = vsel %vm1283, %v3118, 0
      %v3240 = vsel %vm1283, %v3127, 0
      %v3243 = vsel %vm1283, %v3136, 0
      %v3246 = vsel %vm1283, %v3145, 0
      %v3249 = vsel %vm1283, %v3154, 0
      %v3252 = vsel %vm1283, %v3163, 0
      %v3255 = vsel %vm1283, %v3172, 0
      %v3258 = vsel %vm1283, %v3181, 0
      %v3261 = vsel %vm1283, %v3190, 0
      %v3264 = vsel %vm1283, %v3199, 0
      %v3267 = vsel %vm1283, %v3208, 0
      %v3270 = vsel %vm1283, %v3217, 0
      %v3273 = vsel %vm1283, %v3226, 0
      %v3276 = vsel %vm1332, %v2991, 0
      %3278 = vmatprep.subr.bf16.mxu0 0
      %3279 = vmatpush1.bf16.msra.mxu0 0
      %3280 = vmatprep.subr.bf16.mxu0 0
      %3281 = vmatpush1.bf16.msra.mxu0 0
      %3282 = vmatprep.subr.bf16.mxu0 0
      %3283 = vmatpush1.bf16.msra.mxu0 0
      %3284 = vmatprep.subr.bf16.mxu0 0
      %3285 = vmatpush1.bf16.msra.mxu0 0
      %3286 = vmatprep.subr.bf16.mxu0 0
      %3287 = vmatpush1.bf16.msra.mxu0 0
      %3288 = vmatprep.subr.bf16.mxu0 0
      %3289 = vmatpush1.bf16.msra.mxu0 0
      %3290 = vmatprep.subr.bf16.mxu0 0
      %3291 = vmatpush1.bf16.msra.mxu0 0
      %3292 = vmatprep.subr.bf16.mxu0 0
      %3293 = vmatpush1.bf16.msra.mxu0 %v3276
      %3294 = vmatprep.subr.bf16.mxu0 0
      %3295 = vmatpush2.bf16.msra.mxu0 0
      %3296 = vmatprep.subr.bf16.mxu0 0
      %3297 = vmatpush2.bf16.msra.mxu0 0
      %3298 = vmatprep.subr.bf16.mxu0 0
      %3299 = vmatpush2.bf16.msra.mxu0 0
      %3300 = vmatprep.subr.bf16.mxu0 0
      %3301 = vmatpush2.bf16.msra.mxu0 0
      %3302 = vmatprep.subr.bf16.mxu0 0
      %3303 = vmatpush2.bf16.msra.mxu0 0
      %3304 = vmatprep.subr.bf16.mxu0 0
      %3305 = vmatpush2.bf16.msra.mxu0 0
      %3306 = vmatprep.subr.bf16.mxu0 0
      %3307 = vmatpush2.bf16.msra.mxu0 0
      %3308 = vmatprep.subr.bf16.mxu0 0
      %3309 = vmatpush2.bf16.msra.mxu0 0
      %3310 = vmatprep.mubr.bf16.mxu0 0
      %3311 = vmatmul.mubr.bf16.gmra.mxu0 %v3228
      %v3312 = vpop.f32.mrf.mxu0
      %v3313 = vadd.f32 0.0, %v3312
      %v3314 = vpop.f32.mrf.mxu0
      %v3315 = vpop.f32.mrf.mxu0
      %v3316 = vadd.f32 0.0, %v3315
      %v3317 = vpop.f32.mrf.mxu0
      %3318 = vmatprep.mubr.bf16.mxu0 0
      %3319 = vmatmul.mubr.bf16.gmra.mxu0 %v3231
      %v3320 = vpop.f32.mrf.mxu0
      %v3321 = vadd.f32 0.0, %v3320
      %v3322 = vpop.f32.mrf.mxu0
      %v3323 = vpop.f32.mrf.mxu0
      %v3324 = vadd.f32 0.0, %v3323
      %v3325 = vpop.f32.mrf.mxu0
      %3326 = vmatprep.mubr.bf16.mxu0 0
      %3327 = vmatmul.mubr.bf16.gmra.mxu0 %v3234
      %v3328 = vpop.f32.mrf.mxu0
      %v3329 = vadd.f32 0.0, %v3328
      %v3330 = vpop.f32.mrf.mxu0
      %v3331 = vpop.f32.mrf.mxu0
      %v3332 = vadd.f32 0.0, %v3331
      %v3333 = vpop.f32.mrf.mxu0
      %3334 = vmatprep.mubr.bf16.mxu0 0
      %3335 = vmatmul.mubr.bf16.gmra.mxu0 %v3237
      %v3336 = vpop.f32.mrf.mxu0
      %v3337 = vadd.f32 0.0, %v3336
      %v3338 = vpop.f32.mrf.mxu0
      %v3339 = vpop.f32.mrf.mxu0
      %v3340 = vadd.f32 0.0, %v3339
      %v3341 = vpop.f32.mrf.mxu0
      %3342 = vmatprep.mubr.bf16.mxu0 0
      %3343 = vmatmul.mubr.bf16.gmra.mxu0 %v3240
      %v3344 = vpop.f32.mrf.mxu0
      %v3345 = vadd.f32 0.0, %v3344
      %v3346 = vpop.f32.mrf.mxu0
      %v3347 = vpop.f32.mrf.mxu0
      %v3348 = vadd.f32 0.0, %v3347
      %v3349 = vpop.f32.mrf.mxu0
      %3350 = vmatprep.mubr.bf16.mxu0 0
      %3351 = vmatmul.mubr.bf16.gmra.mxu0 %v3243
      %v3352 = vpop.f32.mrf.mxu0
      %v3353 = vadd.f32 0.0, %v3352
      %v3354 = vpop.f32.mrf.mxu0
      %v3355 = vpop.f32.mrf.mxu0
      %v3356 = vadd.f32 0.0, %v3355
      %v3357 = vpop.f32.mrf.mxu0
      %3358 = vmatprep.mubr.bf16.mxu0 0
      %3359 = vmatmul.mubr.bf16.gmra.mxu0 %v3246
      %v3360 = vpop.f32.mrf.mxu0
      %v3361 = vadd.f32 0.0, %v3360
      %v3362 = vpop.f32.mrf.mxu0
      %v3363 = vpop.f32.mrf.mxu0
      %v3364 = vadd.f32 0.0, %v3363
      %v3365 = vpop.f32.mrf.mxu0
      %3366 = vmatprep.mubr.bf16.mxu0 0
      %3367 = vmatmul.mubr.bf16.gmra.mxu0 %v3249
      %v3368 = vpop.f32.mrf.mxu0
      %v3369 = vadd.f32 0.0, %v3368
      %v3370 = vpop.f32.mrf.mxu0
      %v3371 = vpop.f32.mrf.mxu0
      %v3372 = vadd.f32 0.0, %v3371
      %v3373 = vpop.f32.mrf.mxu0
      %3374 = vmatprep.mubr.bf16.mxu0 0
      %3375 = vmatmul.mubr.bf16.gmra.mxu0 %v3252
      %v3376 = vpop.f32.mrf.mxu0
      %v3377 = vadd.f32 0.0, %v3376
      %v3378 = vpop.f32.mrf.mxu0
      %v3379 = vpop.f32.mrf.mxu0
      %v3380 = vadd.f32 0.0, %v3379
      %v3381 = vpop.f32.mrf.mxu0
      %3382 = vmatprep.mubr.bf16.mxu0 0
      %3383 = vmatmul.mubr.bf16.gmra.mxu0 %v3255
      %v3384 = vpop.f32.mrf.mxu0
      %v3385 = vadd.f32 0.0, %v3384
      %v3386 = vpop.f32.mrf.mxu0
      %v3387 = vpop.f32.mrf.mxu0
      %v3388 = vadd.f32 0.0, %v3387
      %v3389 = vpop.f32.mrf.mxu0
      %3390 = vmatprep.mubr.bf16.mxu0 0
      %3391 = vmatmul.mubr.bf16.gmra.mxu0 %v3258
      %v3392 = vpop.f32.mrf.mxu0
      %v3393 = vadd.f32 0.0, %v3392
      %v3394 = vpop.f32.mrf.mxu0
      %v3395 = vpop.f32.mrf.mxu0
      %v3396 = vadd.f32 0.0, %v3395
      %v3397 = vpop.f32.mrf.mxu0
      %3398 = vmatprep.mubr.bf16.mxu0 0
      %3399 = vmatmul.mubr.bf16.gmra.mxu0 %v3261
      %v3400 = vpop.f32.mrf.mxu0
      %v3401 = vadd.f32 0.0, %v3400
      %v3402 = vpop.f32.mrf.mxu0
      %v3403 = vpop.f32.mrf.mxu0
      %v3404 = vadd.f32 0.0, %v3403
      %v3405 = vpop.f32.mrf.mxu0
      %3406 = vmatprep.mubr.bf16.mxu0 0
      %3407 = vmatmul.mubr.bf16.gmra.mxu0 %v3264
      %v3408 = vpop.f32.mrf.mxu0
      %v3409 = vadd.f32 0.0, %v3408
      %v3410 = vpop.f32.mrf.mxu0
      %v3411 = vpop.f32.mrf.mxu0
      %v3412 = vadd.f32 0.0, %v3411
      %v3413 = vpop.f32.mrf.mxu0
      %3414 = vmatprep.mubr.bf16.mxu0 0
      %3415 = vmatmul.mubr.bf16.gmra.mxu0 %v3267
      %v3416 = vpop.f32.mrf.mxu0
      %v3417 = vadd.f32 0.0, %v3416
      %v3418 = vpop.f32.mrf.mxu0
      %v3419 = vpop.f32.mrf.mxu0
      %v3420 = vadd.f32 0.0, %v3419
      %v3421 = vpop.f32.mrf.mxu0
      %3422 = vmatprep.mubr.bf16.mxu0 0
      %3423 = vmatmul.mubr.bf16.gmra.mxu0 %v3270
      %v3424 = vpop.f32.mrf.mxu0
      %v3425 = vadd.f32 0.0, %v3424
      %v3426 = vpop.f32.mrf.mxu0
      %v3427 = vpop.f32.mrf.mxu0
      %v3428 = vadd.f32 0.0, %v3427
      %v3429 = vpop.f32.mrf.mxu0
      %3430 = vmatprep.mubr.bf16.mxu0 0
      %3431 = vmatmul.mubr.bf16.gmra.mxu0 %v3273
      %v3432 = vpop.f32.mrf.mxu0
      %v3433 = vadd.f32 0.0, %v3432
      %v3434 = vpop.f32.mrf.mxu0
      %v3435 = vpop.f32.mrf.mxu0
      %v3436 = vadd.f32 0.0, %v3435
      %v3437 = vpop.f32.mrf.mxu0
      %3438 = vdwg.mxu0
      %v3439 = vadd.f32 %v2892, %v3313
      %v3440 = vadd.f32 %v2893, %v3316
      %v3441 = vadd.f32 %v2894, %v3321
      %v3442 = vadd.f32 %v2895, %v3324
      %v3443 = vadd.f32 %v2896, %v3329
      %v3444 = vadd.f32 %v2897, %v3332
      %v3445 = vadd.f32 %v2898, %v3337
      %v3446 = vadd.f32 %v2899, %v3340
      %v3447 = vadd.f32 %v2900, %v3345
      %v3448 = vadd.f32 %v2901, %v3348
      %v3449 = vadd.f32 %v2902, %v3353
      %v3450 = vadd.f32 %v2903, %v3356
      %v3451 = vadd.f32 %v2904, %v3361
      %v3452 = vadd.f32 %v2905, %v3364
      %v3453 = vadd.f32 %v2906, %v3369
      %v3454 = vadd.f32 %v2907, %v3372
      %v3455 = vadd.f32 %v2908, %v3377
      %v3456 = vadd.f32 %v2909, %v3380
      %v3457 = vadd.f32 %v2910, %v3385
      %v3458 = vadd.f32 %v2911, %v3388
      %v3459 = vadd.f32 %v2912, %v3393
      %v3460 = vadd.f32 %v2913, %v3396
      %v3461 = vadd.f32 %v2914, %v3401
      %v3462 = vadd.f32 %v2915, %v3404
      %v3463 = vadd.f32 %v2916, %v3409
      %v3464 = vadd.f32 %v2917, %v3412
      %v3465 = vadd.f32 %v2918, %v3417
      %v3466 = vadd.f32 %v2919, %v3420
      %v3467 = vadd.f32 %v2920, %v3425
      %v3468 = vadd.f32 %v2921, %v3428
      %v3469 = vadd.f32 %v2922, %v3433
      %v3470 = vadd.f32 %v2923, %v3436
      %s3471 = scalar_lea.vmem %s1, 8
      %v3472 = vld [vmem:[%s3471] sm:$0x3]
      %v3505 = vunpack.c.l.b16 %v2925
      %v3506 = vunpack.c.l.b16 %v2926
      %v3507 = vunpack.c.l.b16 %v2927
      %v3508 = vunpack.c.l.b16 %v2928
      %v3509 = vunpack.c.l.b16 %v2929
      %v3510 = vunpack.c.l.b16 %v2930
      %v3511 = vunpack.c.l.b16 %v2931
      %v3512 = vunpack.c.l.b16 %v2932
      %v3513 = vunpack.c.l.b16 %v2933
      %v3514 = vunpack.c.l.b16 %v2934
      %v3515 = vunpack.c.l.b16 %v2935
      %v3516 = vunpack.c.l.b16 %v2936
      %v3517 = vunpack.c.l.b16 %v2937
      %v3518 = vunpack.c.l.b16 %v2938
      %v3519 = vunpack.c.l.b16 %v2939
      %v3520 = vunpack.c.l.b16 %v2940
      %v3521 = vunpack.c.l.b16 %v2941
      %v3522 = vunpack.c.l.b16 %v2942
      %v3523 = vunpack.c.l.b16 %v2943
      %v3524 = vunpack.c.l.b16 %v2944
      %v3525 = vunpack.c.l.b16 %v2945
      %v3526 = vunpack.c.l.b16 %v2946
      %v3527 = vunpack.c.l.b16 %v2947
      %v3528 = vunpack.c.l.b16 %v2948
      %v3529 = vunpack.c.l.b16 %v2949
      %v3530 = vunpack.c.l.b16 %v2950
      %v3531 = vunpack.c.l.b16 %v2951
      %v3532 = vunpack.c.l.b16 %v2952
      %v3533 = vunpack.c.l.b16 %v2953
      %v3534 = vunpack.c.l.b16 %v2954
      %v3535 = vunpack.c.l.b16 %v2955
      %v3536 = vunpack.c.l.b16 %v2956
      %v3537 = vpack.c.b16 %v3506, %v3505
      %v3538 = vpack.c.b16 %v3508, %v3507
      %v3539 = vpack.c.b16 %v3510, %v3509
      %v3540 = vpack.c.b16 %v3512, %v3511
      %v3541 = vpack.c.b16 %v3514, %v3513
      %v3542 = vpack.c.b16 %v3516, %v3515
      %v3543 = vpack.c.b16 %v3518, %v3517
      %v3544 = vpack.c.b16 %v3520, %v3519
      %v3545 = vpack.c.b16 %v3522, %v3521
      %v3546 = vpack.c.b16 %v3524, %v3523
      %v3547 = vpack.c.b16 %v3526, %v3525
      %v3548 = vpack.c.b16 %v3528, %v3527
      %v3549 = vpack.c.b16 %v3530, %v3529
      %v3550 = vpack.c.b16 %v3532, %v3531
      %v3551 = vpack.c.b16 %v3534, %v3533
      %v3552 = vpack.c.b16 %v3536, %v3535
      %v3554 = vsel %vm1283, %v3537, 0
      %v3557 = vsel %vm1283, %v3538, 0
      %v3560 = vsel %vm1283, %v3539, 0
      %v3563 = vsel %vm1283, %v3540, 0
      %v3566 = vsel %vm1283, %v3541, 0
      %v3569 = vsel %vm1283, %v3542, 0
      %v3572 = vsel %vm1283, %v3543, 0
      %v3575 = vsel %vm1283, %v3544, 0
      %v3578 = vsel %vm1283, %v3545, 0
      %v3581 = vsel %vm1283, %v3546, 0
      %v3584 = vsel %vm1283, %v3547, 0
      %v3587 = vsel %vm1283, %v3548, 0
      %v3590 = vsel %vm1283, %v3549, 0
      %v3593 = vsel %vm1283, %v3550, 0
      %v3596 = vsel %vm1283, %v3551, 0
      %v3599 = vsel %vm1283, %v3552, 0
      %v3602 = vsel %vm1332, %v3472, 0
      %3604 = vmatprep.subr.bf16.mxu0 0
      %3605 = vmatpush1.bf16.msra.mxu0 0
      %3606 = vmatprep.subr.bf16.mxu0 0
      %3607 = vmatpush1.bf16.msra.mxu0 0
      %3608 = vmatprep.subr.bf16.mxu0 0
      %3609 = vmatpush1.bf16.msra.mxu0 0
      %3610 = vmatprep.subr.bf16.mxu0 0
      %3611 = vmatpush1.bf16.msra.mxu0 0
      %3612 = vmatprep.subr.bf16.mxu0 0
      %3613 = vmatpush1.bf16.msra.mxu0 0
      %3614 = vmatprep.subr.bf16.mxu0 0
      %3615 = vmatpush1.bf16.msra.mxu0 0
      %3616 = vmatprep.subr.bf16.mxu0 0
      %3617 = vmatpush1.bf16.msra.mxu0 0
      %3618 = vmatprep.subr.bf16.mxu0 0
      %3619 = vmatpush1.bf16.msra.mxu0 %v3602
      %3620 = vmatprep.subr.bf16.mxu0 0
      %3621 = vmatpush2.bf16.msra.mxu0 0
      %3622 = vmatprep.subr.bf16.mxu0 0
      %3623 = vmatpush2.bf16.msra.mxu0 0
      %3624 = vmatprep.subr.bf16.mxu0 0
      %3625 = vmatpush2.bf16.msra.mxu0 0
      %3626 = vmatprep.subr.bf16.mxu0 0
      %3627 = vmatpush2.bf16.msra.mxu0 0
      %3628 = vmatprep.subr.bf16.mxu0 0
      %3629 = vmatpush2.bf16.msra.mxu0 0
      %3630 = vmatprep.subr.bf16.mxu0 0
      %3631 = vmatpush2.bf16.msra.mxu0 0
      %3632 = vmatprep.subr.bf16.mxu0 0
      %3633 = vmatpush2.bf16.msra.mxu0 0
      %3634 = vmatprep.subr.bf16.mxu0 0
      %3635 = vmatpush2.bf16.msra.mxu0 0
      %3636 = vmatprep.mubr.bf16.mxu0 0
      %3637 = vmatmul.mubr.bf16.gmra.mxu0 %v3554
      %v3638 = vpop.f32.mrf.mxu0
      %v3639 = vadd.f32 0.0, %v3638
      %v3640 = vpop.f32.mrf.mxu0
      %v3641 = vpop.f32.mrf.mxu0
      %v3642 = vadd.f32 0.0, %v3641
      %v3643 = vpop.f32.mrf.mxu0
      %3644 = vmatprep.mubr.bf16.mxu0 0
      %3645 = vmatmul.mubr.bf16.gmra.mxu0 %v3557
      %v3646 = vpop.f32.mrf.mxu0
      %v3647 = vadd.f32 0.0, %v3646
      %v3648 = vpop.f32.mrf.mxu0
      %v3649 = vpop.f32.mrf.mxu0
      %v3650 = vadd.f32 0.0, %v3649
      %v3651 = vpop.f32.mrf.mxu0
      %3652 = vmatprep.mubr.bf16.mxu0 0
      %3653 = vmatmul.mubr.bf16.gmra.mxu0 %v3560
      %v3654 = vpop.f32.mrf.mxu0
      %v3655 = vadd.f32 0.0, %v3654
      %v3656 = vpop.f32.mrf.mxu0
      %v3657 = vpop.f32.mrf.mxu0
      %v3658 = vadd.f32 0.0, %v3657
      %v3659 = vpop.f32.mrf.mxu0
      %3660 = vmatprep.mubr.bf16.mxu0 0
      %3661 = vmatmul.mubr.bf16.gmra.mxu0 %v3563
      %v3662 = vpop.f32.mrf.mxu0
      %v3663 = vadd.f32 0.0, %v3662
      %v3664 = vpop.f32.mrf.mxu0
      %v3665 = vpop.f32.mrf.mxu0
      %v3666 = vadd.f32 0.0, %v3665
      %v3667 = vpop.f32.mrf.mxu0
      %3668 = vmatprep.mubr.bf16.mxu0 0
      %3669 = vmatmul.mubr.bf16.gmra.mxu0 %v3566
      %v3670 = vpop.f32.mrf.mxu0
      %v3671 = vadd.f32 0.0, %v3670
      %v3672 = vpop.f32.mrf.mxu0
      %v3673 = vpop.f32.mrf.mxu0
      %v3674 = vadd.f32 0.0, %v3673
      %v3675 = vpop.f32.mrf.mxu0
      %3676 = vmatprep.mubr.bf16.mxu0 0
      %3677 = vmatmul.mubr.bf16.gmra.mxu0 %v3569
      %v3678 = vpop.f32.mrf.mxu0
      %v3679 = vadd.f32 0.0, %v3678
      %v3680 = vpop.f32.mrf.mxu0
      %v3681 = vpop.f32.mrf.mxu0
      %v3682 = vadd.f32 0.0, %v3681
      %v3683 = vpop.f32.mrf.mxu0
      %3684 = vmatprep.mubr.bf16.mxu0 0
      %3685 = vmatmul.mubr.bf16.gmra.mxu0 %v3572
      %v3686 = vpop.f32.mrf.mxu0
      %v3687 = vadd.f32 0.0, %v3686
      %v3688 = vpop.f32.mrf.mxu0
      %v3689 = vpop.f32.mrf.mxu0
      %v3690 = vadd.f32 0.0, %v3689
      %v3691 = vpop.f32.mrf.mxu0
      %3692 = vmatprep.mubr.bf16.mxu0 0
      %3693 = vmatmul.mubr.bf16.gmra.mxu0 %v3575
      %v3694 = vpop.f32.mrf.mxu0
      %v3695 = vadd.f32 0.0, %v3694
      %v3696 = vpop.f32.mrf.mxu0
      %v3697 = vpop.f32.mrf.mxu0
      %v3698 = vadd.f32 0.0, %v3697
      %v3699 = vpop.f32.mrf.mxu0
      %3700 = vmatprep.mubr.bf16.mxu0 0
      %3701 = vmatmul.mubr.bf16.gmra.mxu0 %v3578
      %v3702 = vpop.f32.mrf.mxu0
      %v3703 = vadd.f32 0.0, %v3702
      %v3704 = vpop.f32.mrf.mxu0
      %v3705 = vpop.f32.mrf.mxu0
      %v3706 = vadd.f32 0.0, %v3705
      %v3707 = vpop.f32.mrf.mxu0
      %3708 = vmatprep.mubr.bf16.mxu0 0
      %3709 = vmatmul.mubr.bf16.gmra.mxu0 %v3581
      %v3710 = vpop.f32.mrf.mxu0
      %v3711 = vadd.f32 0.0, %v3710
      %v3712 = vpop.f32.mrf.mxu0
      %v3713 = vpop.f32.mrf.mxu0
      %v3714 = vadd.f32 0.0, %v3713
      %v3715 = vpop.f32.mrf.mxu0
      %3716 = vmatprep.mubr.bf16.mxu0 0
      %3717 = vmatmul.mubr.bf16.gmra.mxu0 %v3584
      %v3718 = vpop.f32.mrf.mxu0
      %v3719 = vadd.f32 0.0, %v3718
      %v3720 = vpop.f32.mrf.mxu0
      %v3721 = vpop.f32.mrf.mxu0
      %v3722 = vadd.f32 0.0, %v3721
      %v3723 = vpop.f32.mrf.mxu0
      %3724 = vmatprep.mubr.bf16.mxu0 0
      %3725 = vmatmul.mubr.bf16.gmra.mxu0 %v3587
      %v3726 = vpop.f32.mrf.mxu0
      %v3727 = vadd.f32 0.0, %v3726
      %v3728 = vpop.f32.mrf.mxu0
      %v3729 = vpop.f32.mrf.mxu0
      %v3730 = vadd.f32 0.0, %v3729
      %v3731 = vpop.f32.mrf.mxu0
      %3732 = vmatprep.mubr.bf16.mxu0 0
      %3733 = vmatmul.mubr.bf16.gmra.mxu0 %v3590
      %v3734 = vpop.f32.mrf.mxu0
      %v3735 = vadd.f32 0.0, %v3734
      %v3736 = vpop.f32.mrf.mxu0
      %v3737 = vpop.f32.mrf.mxu0
      %v3738 = vadd.f32 0.0, %v3737
      %v3739 = vpop.f32.mrf.mxu0
      %3740 = vmatprep.mubr.bf16.mxu0 0
      %3741 = vmatmul.mubr.bf16.gmra.mxu0 %v3593
      %v3742 = vpop.f32.mrf.mxu0
      %v3743 = vadd.f32 0.0, %v3742
      %v3744 = vpop.f32.mrf.mxu0
      %v3745 = vpop.f32.mrf.mxu0
      %v3746 = vadd.f32 0.0, %v3745
      %v3747 = vpop.f32.mrf.mxu0
      %3748 = vmatprep.mubr.bf16.mxu0 0
      %3749 = vmatmul.mubr.bf16.gmra.mxu0 %v3596
      %v3750 = vpop.f32.mrf.mxu0
      %v3751 = vadd.f32 0.0, %v3750
      %v3752 = vpop.f32.mrf.mxu0
      %v3753 = vpop.f32.mrf.mxu0
      %v3754 = vadd.f32 0.0, %v3753
      %v3755 = vpop.f32.mrf.mxu0
      %3756 = vmatprep.mubr.bf16.mxu0 0
      %3757 = vmatmul.mubr.bf16.gmra.mxu0 %v3599
      %v3758 = vpop.f32.mrf.mxu0
      %v3759 = vadd.f32 0.0, %v3758
      %v3760 = vpop.f32.mrf.mxu0
      %v3761 = vpop.f32.mrf.mxu0
      %v3762 = vadd.f32 0.0, %v3761
      %v3763 = vpop.f32.mrf.mxu0
      %3764 = vdwg.mxu0
      %v3765 = vadd.f32 %v3439, %v3639
      %v3766 = vadd.f32 %v3440, %v3642
      %v3767 = vadd.f32 %v3441, %v3647
      %v3768 = vadd.f32 %v3442, %v3650
      %v3769 = vadd.f32 %v3443, %v3655
      %v3770 = vadd.f32 %v3444, %v3658
      %v3771 = vadd.f32 %v3445, %v3663
      %v3772 = vadd.f32 %v3446, %v3666
      %v3773 = vadd.f32 %v3447, %v3671
      %v3774 = vadd.f32 %v3448, %v3674
      %v3775 = vadd.f32 %v3449, %v3679
      %v3776 = vadd.f32 %v3450, %v3682
      %v3777 = vadd.f32 %v3451, %v3687
      %v3778 = vadd.f32 %v3452, %v3690
      %v3779 = vadd.f32 %v3453, %v3695
      %v3780 = vadd.f32 %v3454, %v3698
      %v3781 = vadd.f32 %v3455, %v3703
      %v3782 = vadd.f32 %v3456, %v3706
      %v3783 = vadd.f32 %v3457, %v3711
      %v3784 = vadd.f32 %v3458, %v3714
      %v3785 = vadd.f32 %v3459, %v3719
      %v3786 = vadd.f32 %v3460, %v3722
      %v3787 = vadd.f32 %v3461, %v3727
      %v3788 = vadd.f32 %v3462, %v3730
      %v3789 = vadd.f32 %v3463, %v3735
      %v3790 = vadd.f32 %v3464, %v3738
      %v3791 = vadd.f32 %v3465, %v3743
      %v3792 = vadd.f32 %v3466, %v3746
      %v3793 = vadd.f32 %v3467, %v3751
      %v3794 = vadd.f32 %v3468, %v3754
      %v3795 = vadd.f32 %v3469, %v3759
      %v3796 = vadd.f32 %v3470, %v3762
      %v3797 = vld [vmem:[%s163 + $0x10] sm:$0xf]
      %v3798 = vld [vmem:[%s163 + $0x14] sm:$0xf]
      %v3799 = vld [vmem:[%s163 + $0x18] sm:$0xf]
      %v3800 = vld [vmem:[%s163 + $0x1c] sm:$0xf]
      %v3801 = vld [vmem:[%s163 + $0x20] sm:$0xf]
      %v3802 = vld [vmem:[%s163 + $0x24] sm:$0xf]
      %v3803 = vld [vmem:[%s163 + $0x28] sm:$0xf]
      %v3804 = vld [vmem:[%s163 + $0x2c] sm:$0xf]
      %v3805 = vld [vmem:[%s163 + $0x30] sm:$0xf]
      %v3806 = vld [vmem:[%s163 + $0x34] sm:$0xf]
      %v3807 = vld [vmem:[%s163 + $0x38] sm:$0xf]
      %v3808 = vld [vmem:[%s163 + $0x3c] sm:$0xf]
      %v3809 = vld [vmem:[%s163 + $0x40] sm:$0xf]
      %v3810 = vld [vmem:[%s163 + $0x44] sm:$0xf]
      %v3811 = vld [vmem:[%s163 + $0x48] sm:$0xf]
      %v3812 = vld [vmem:[%s163 + $0x4c] sm:$0xf]
      %v3813 = vld [vmem:[%s163 + $0x50] sm:$0xf]
      %v3814 = vld [vmem:[%s163 + $0x54] sm:$0xf]
      %v3815 = vld [vmem:[%s163 + $0x58] sm:$0xf]
      %v3816 = vld [vmem:[%s163 + $0x5c] sm:$0xf]
      %v3817 = vld [vmem:[%s163 + $0x60] sm:$0xf]
      %v3818 = vld [vmem:[%s163 + $0x64] sm:$0xf]
      %v3819 = vld [vmem:[%s163 + $0x68] sm:$0xf]
      %v3820 = vld [vmem:[%s163 + $0x6c] sm:$0xf]
      %v3821 = vld [vmem:[%s163 + $0x70] sm:$0xf]
      %v3822 = vld [vmem:[%s163 + $0x74] sm:$0xf]
      %v3823 = vld [vmem:[%s163 + $0x78] sm:$0xf]
      %v3824 = vld [vmem:[%s163 + $0x7c] sm:$0xf]
      %v3825 = vld [vmem:[%s163 + $0x80] sm:$0xf]
      %v3826 = vld [vmem:[%s163 + $0x84] sm:$0xf]
      %v3827 = vld [vmem:[%s163 + $0x88] sm:$0xf]
      %v3828 = vld [vmem:[%s163 + $0x8c] sm:$0xf]
      %v3829 = vld [vmem:[%s163 + $0x90] sm:$0x1]
      %v3830 = vsel %vm2396, %v3797, 0
      %v3831 = vsel %vm2397, %v3798, 0
      %v3832 = vsel %vm2398, %v3799, 0
      %v3833 = vsel %vm2399, %v3800, 0
      %v3834 = vsel %vm2400, %v3801, 0
      %v3835 = vsel %vm2401, %v3802, 0
      %v3836 = vsel %vm2402, %v3803, 0
      %v3837 = vsel %vm2403, %v3804, 0
      %v3838 = vsel %vm2404, %v3805, 0
      %v3839 = vsel %vm2405, %v3806, 0
      %v3840 = vsel %vm2406, %v3807, 0
      %v3841 = vsel %vm2407, %v3808, 0
      %v3842 = vsel %vm2408, %v3809, 0
      %v3843 = vsel %vm2409, %v3810, 0
      %v3844 = vsel %vm2410, %v3811, 0
      %v3845 = vsel %vm2411, %v3812, 0
      %v3846 = vsel %vm2412, %v3813, 0
      %v3847 = vsel %vm2413, %v3814, 0
      %v3848 = vsel %vm2414, %v3815, 0
      %v3849 = vsel %vm2415, %v3816, 0
      %v3850 = vsel %vm2416, %v3817, 0
      %v3851 = vsel %vm2417, %v3818, 0
      %v3852 = vsel %vm2418, %v3819, 0
      %v3853 = vsel %vm2419, %v3820, 0
      %v3854 = vsel %vm2420, %v3821, 0
      %v3855 = vsel %vm2421, %v3822, 0
      %v3856 = vsel %vm2422, %v3823, 0
      %v3857 = vsel %vm2423, %v3824, 0
      %v3858 = vsel %vm2424, %v3825, 0
      %v3859 = vsel %vm2425, %v3826, 0
      %v3860 = vsel %vm2426, %v3827, 0
      %v3861 = vsel %vm2427, %v3828, 0
      %v3862 = vsel %vm2428, %v3829, 0
      %s3863 = scalar_lea.vmem %s1, 10
      %v3864 = vld [vmem:[%s3863] sm:$0x3]
      %v3898 = vunpack.c.l.b16 %v3830
      %v3899 = vunpack.c.l.b16 %v3831
      %v3900 = vunpack.c.l.b16 %v3832
      %v3901 = vunpack.c.l.b16 %v3833
      %v3902 = vunpack.c.l.b16 %v3834
      %v3903 = vunpack.c.l.b16 %v3835
      %v3904 = vunpack.c.l.b16 %v3836
      %v3905 = vunpack.c.l.b16 %v3837
      %v3906 = vunpack.c.l.b16 %v3838
      %v3907 = vunpack.c.l.b16 %v3839
      %v3908 = vunpack.c.l.b16 %v3840
      %v3909 = vunpack.c.l.b16 %v3841
      %v3910 = vunpack.c.l.b16 %v3842
      %v3911 = vunpack.c.l.b16 %v3843
      %v3912 = vunpack.c.l.b16 %v3844
      %v3913 = vunpack.c.l.b16 %v3845
      %v3914 = vunpack.c.l.b16 %v3846
      %v3915 = vunpack.c.l.b16 %v3847
      %v3916 = vunpack.c.l.b16 %v3848
      %v3917 = vunpack.c.l.b16 %v3849
      %v3918 = vunpack.c.l.b16 %v3850
      %v3919 = vunpack.c.l.b16 %v3851
      %v3920 = vunpack.c.l.b16 %v3852
      %v3921 = vunpack.c.l.b16 %v3853
      %v3922 = vunpack.c.l.b16 %v3854
      %v3923 = vunpack.c.l.b16 %v3855
      %v3924 = vunpack.c.l.b16 %v3856
      %v3925 = vunpack.c.l.b16 %v3857
      %v3926 = vunpack.c.l.b16 %v3858
      %v3927 = vunpack.c.l.b16 %v3859
      %v3928 = vunpack.c.l.b16 %v3860
      %v3929 = vunpack.c.l.b16 %v3861
      %v3930 = vunpack.c.l.b16 %v3862
      %v3931 = vpack.c.b16 %v3899, %v3898
      %v3932 = vpack.c.b16 %v3901, %v3900
      %v3933 = vpack.c.b16 %v3903, %v3902
      %v3934 = vpack.c.b16 %v3905, %v3904
      %v3935 = vpack.c.b16 %v3907, %v3906
      %v3936 = vpack.c.b16 %v3909, %v3908
      %v3937 = vpack.c.b16 %v3911, %v3910
      %v3938 = vpack.c.b16 %v3913, %v3912
      %v3939 = vpack.c.b16 %v3915, %v3914
      %v3940 = vpack.c.b16 %v3917, %v3916
      %v3941 = vpack.c.b16 %v3919, %v3918
      %v3942 = vpack.c.b16 %v3921, %v3920
      %v3943 = vpack.c.b16 %v3923, %v3922
      %v3944 = vpack.c.b16 %v3925, %v3924
      %v3945 = vpack.c.b16 %v3927, %v3926
      %v3946 = vpack.c.b16 %v3929, %v3928
      %v3947 = vpack.c.b16 %v3930, %v3930
      %v3949 = vshrl.u32 %v3931, 16
      %v3951 = vshll.u32 %v3931, 16
      %v3953 = vrot.slane %v3951, 1
      %v3954 = vor.u32 %v3949, %v3953
      %v3956 = vshll.u32 %v3932, 16
      %v3958 = vrot.slane %v3956, 1
      %v3959 = vsel %vm2547, %v3954, %v3958
      %v3960 = vshrl.u32 %v3932, 16
      %v3962 = vor.u32 %v3960, %v3958
      %v3964 = vshll.u32 %v3933, 16
      %v3966 = vrot.slane %v3964, 1
      %v3967 = vsel %vm2547, %v3962, %v3966
      %v3968 = vshrl.u32 %v3933, 16
      %v3970 = vor.u32 %v3968, %v3966
      %v3972 = vshll.u32 %v3934, 16
      %v3974 = vrot.slane %v3972, 1
      %v3975 = vsel %vm2547, %v3970, %v3974
      %v3976 = vshrl.u32 %v3934, 16
      %v3978 = vor.u32 %v3976, %v3974
      %v3980 = vshll.u32 %v3935, 16
      %v3982 = vrot.slane %v3980, 1
      %v3983 = vsel %vm2547, %v3978, %v3982
      %v3984 = vshrl.u32 %v3935, 16
      %v3986 = vor.u32 %v3984, %v3982
      %v3988 = vshll.u32 %v3936, 16
      %v3990 = vrot.slane %v3988, 1
      %v3991 = vsel %vm2547, %v3986, %v3990
      %v3992 = vshrl.u32 %v3936, 16
      %v3994 = vor.u32 %v3992, %v3990
      %v3996 = vshll.u32 %v3937, 16
      %v3998 = vrot.slane %v3996, 1
      %v3999 = vsel %vm2547, %v3994, %v3998
      %v4000 = vshrl.u32 %v3937, 16
      %v4002 = vor.u32 %v4000, %v3998
      %v4004 = vshll.u32 %v3938, 16
      %v4006 = vrot.slane %v4004, 1
      %v4007 = vsel %vm2547, %v4002, %v4006
      %v4008 = vshrl.u32 %v3938, 16
      %v4010 = vor.u32 %v4008, %v4006
      %v4012 = vshll.u32 %v3939, 16
      %v4014 = vrot.slane %v4012, 1
      %v4015 = vsel %vm2547, %v4010, %v4014
      %v4016 = vshrl.u32 %v3939, 16
      %v4018 = vor.u32 %v4016, %v4014
      %v4020 = vshll.u32 %v3940, 16
      %v4022 = vrot.slane %v4020, 1
      %v4023 = vsel %vm2547, %v4018, %v4022
      %v4024 = vshrl.u32 %v3940, 16
      %v4026 = vor.u32 %v4024, %v4022
      %v4028 = vshll.u32 %v3941, 16
      %v4030 = vrot.slane %v4028, 1
      %v4031 = vsel %vm2547, %v4026, %v4030
      %v4032 = vshrl.u32 %v3941, 16
      %v4034 = vor.u32 %v4032, %v4030
      %v4036 = vshll.u32 %v3942, 16
      %v4038 = vrot.slane %v4036, 1
      %v4039 = vsel %vm2547, %v4034, %v4038
      %v4040 = vshrl.u32 %v3942, 16
      %v4042 = vor.u32 %v4040, %v4038
      %v4044 = vshll.u32 %v3943, 16
      %v4046 = vrot.slane %v4044, 1
      %v4047 = vsel %vm2547, %v4042, %v4046
      %v4048 = vshrl.u32 %v3943, 16
      %v4050 = vor.u32 %v4048, %v4046
      %v4052 = vshll.u32 %v3944, 16
      %v4054 = vrot.slane %v4052, 1
      %v4055 = vsel %vm2547, %v4050, %v4054
      %v4056 = vshrl.u32 %v3944, 16
      %v4058 = vor.u32 %v4056, %v4054
      %v4060 = vshll.u32 %v3945, 16
      %v4062 = vrot.slane %v4060, 1
      %v4063 = vsel %vm2547, %v4058, %v4062
      %v4064 = vshrl.u32 %v3945, 16
      %v4066 = vor.u32 %v4064, %v4062
      %v4068 = vshll.u32 %v3946, 16
      %v4070 = vrot.slane %v4068, 1
      %v4071 = vsel %vm2547, %v4066, %v4070
      %v4072 = vshrl.u32 %v3946, 16
      %v4074 = vor.u32 %v4072, %v4070
      %v4076 = vshll.u32 %v3947, 16
      %v4078 = vrot.slane %v4076, 1
      %v4079 = vsel %vm2547, %v4074, %v4078
      %v4081 = vsel %vm1283, %v3959, 0
      %v4084 = vsel %vm1283, %v3967, 0
      %v4087 = vsel %vm1283, %v3975, 0
      %v4090 = vsel %vm1283, %v3983, 0
      %v4093 = vsel %vm1283, %v3991, 0
      %v4096 = vsel %vm1283, %v3999, 0
      %v4099 = vsel %vm1283, %v4007, 0
      %v4102 = vsel %vm1283, %v4015, 0
      %v4105 = vsel %vm1283, %v4023, 0
      %v4108 = vsel %vm1283, %v4031, 0
      %v4111 = vsel %vm1283, %v4039, 0
      %v4114 = vsel %vm1283, %v4047, 0
      %v4117 = vsel %vm1283, %v4055, 0
      %v4120 = vsel %vm1283, %v4063, 0
      %v4123 = vsel %vm1283, %v4071, 0
      %v4126 = vsel %vm1283, %v4079, 0
      %v4129 = vsel %vm1332, %v3864, 0
      %4131 = vmatprep.subr.bf16.mxu0 0
      %4132 = vmatpush1.bf16.msra.mxu0 0
      %4133 = vmatprep.subr.bf16.mxu0 0
      %4134 = vmatpush1.bf16.msra.mxu0 0
      %4135 = vmatprep.subr.bf16.mxu0 0
      %4136 = vmatpush1.bf16.msra.mxu0 0
      %4137 = vmatprep.subr.bf16.mxu0 0
      %4138 = vmatpush1.bf16.msra.mxu0 0
      %4139 = vmatprep.subr.bf16.mxu0 0
      %4140 = vmatpush1.bf16.msra.mxu0 0
      %4141 = vmatprep.subr.bf16.mxu0 0
      %4142 = vmatpush1.bf16.msra.mxu0 0
      %4143 = vmatprep.subr.bf16.mxu0 0
      %4144 = vmatpush1.bf16.msra.mxu0 0
      %4145 = vmatprep.subr.bf16.mxu0 0
      %4146 = vmatpush1.bf16.msra.mxu0 %v4129
      %4147 = vmatprep.subr.bf16.mxu0 0
      %4148 = vmatpush2.bf16.msra.mxu0 0
      %4149 = vmatprep.subr.bf16.mxu0 0
      %4150 = vmatpush2.bf16.msra.mxu0 0
      %4151 = vmatprep.subr.bf16.mxu0 0
      %4152 = vmatpush2.bf16.msra.mxu0 0
      %4153 = vmatprep.subr.bf16.mxu0 0
      %4154 = vmatpush2.bf16.msra.mxu0 0
      %4155 = vmatprep.subr.bf16.mxu0 0
      %4156 = vmatpush2.bf16.msra.mxu0 0
      %4157 = vmatprep.subr.bf16.mxu0 0
      %4158 = vmatpush2.bf16.msra.mxu0 0
      %4159 = vmatprep.subr.bf16.mxu0 0
      %4160 = vmatpush2.bf16.msra.mxu0 0
      %4161 = vmatprep.subr.bf16.mxu0 0
      %4162 = vmatpush2.bf16.msra.mxu0 0
      %4163 = vmatprep.mubr.bf16.mxu0 0
      %4164 = vmatmul.mubr.bf16.gmra.mxu0 %v4081
      %v4165 = vpop.f32.mrf.mxu0
      %v4166 = vadd.f32 0.0, %v4165
      %v4167 = vpop.f32.mrf.mxu0
      %v4168 = vpop.f32.mrf.mxu0
      %v4169 = vadd.f32 0.0, %v4168
      %v4170 = vpop.f32.mrf.mxu0
      %4171 = vmatprep.mubr.bf16.mxu0 0
      %4172 = vmatmul.mubr.bf16.gmra.mxu0 %v4084
      %v4173 = vpop.f32.mrf.mxu0
      %v4174 = vadd.f32 0.0, %v4173
      %v4175 = vpop.f32.mrf.mxu0
      %v4176 = vpop.f32.mrf.mxu0
      %v4177 = vadd.f32 0.0, %v4176
      %v4178 = vpop.f32.mrf.mxu0
      %4179 = vmatprep.mubr.bf16.mxu0 0
      %4180 = vmatmul.mubr.bf16.gmra.mxu0 %v4087
      %v4181 = vpop.f32.mrf.mxu0
      %v4182 = vadd.f32 0.0, %v4181
      %v4183 = vpop.f32.mrf.mxu0
      %v4184 = vpop.f32.mrf.mxu0
      %v4185 = vadd.f32 0.0, %v4184
      %v4186 = vpop.f32.mrf.mxu0
      %4187 = vmatprep.mubr.bf16.mxu0 0
      %4188 = vmatmul.mubr.bf16.gmra.mxu0 %v4090
      %v4189 = vpop.f32.mrf.mxu0
      %v4190 = vadd.f32 0.0, %v4189
      %v4191 = vpop.f32.mrf.mxu0
      %v4192 = vpop.f32.mrf.mxu0
      %v4193 = vadd.f32 0.0, %v4192
      %v4194 = vpop.f32.mrf.mxu0
      %4195 = vmatprep.mubr.bf16.mxu0 0
      %4196 = vmatmul.mubr.bf16.gmra.mxu0 %v4093
      %v4197 = vpop.f32.mrf.mxu0
      %v4198 = vadd.f32 0.0, %v4197
      %v4199 = vpop.f32.mrf.mxu0
      %v4200 = vpop.f32.mrf.mxu0
      %v4201 = vadd.f32 0.0, %v4200
      %v4202 = vpop.f32.mrf.mxu0
      %4203 = vmatprep.mubr.bf16.mxu0 0
      %4204 = vmatmul.mubr.bf16.gmra.mxu0 %v4096
      %v4205 = vpop.f32.mrf.mxu0
      %v4206 = vadd.f32 0.0, %v4205
      %v4207 = vpop.f32.mrf.mxu0
      %v4208 = vpop.f32.mrf.mxu0
      %v4209 = vadd.f32 0.0, %v4208
      %v4210 = vpop.f32.mrf.mxu0
      %4211 = vmatprep.mubr.bf16.mxu0 0
      %4212 = vmatmul.mubr.bf16.gmra.mxu0 %v4099
      %v4213 = vpop.f32.mrf.mxu0
      %v4214 = vadd.f32 0.0, %v4213
      %v4215 = vpop.f32.mrf.mxu0
      %v4216 = vpop.f32.mrf.mxu0
      %v4217 = vadd.f32 0.0, %v4216
      %v4218 = vpop.f32.mrf.mxu0
      %4219 = vmatprep.mubr.bf16.mxu0 0
      %4220 = vmatmul.mubr.bf16.gmra.mxu0 %v4102
      %v4221 = vpop.f32.mrf.mxu0
      %v4222 = vadd.f32 0.0, %v4221
      %v4223 = vpop.f32.mrf.mxu0
      %v4224 = vpop.f32.mrf.mxu0
      %v4225 = vadd.f32 0.0, %v4224
      %v4226 = vpop.f32.mrf.mxu0
      %4227 = vmatprep.mubr.bf16.mxu0 0
      %4228 = vmatmul.mubr.bf16.gmra.mxu0 %v4105
      %v4229 = vpop.f32.mrf.mxu0
      %v4230 = vadd.f32 0.0, %v4229
      %v4231 = vpop.f32.mrf.mxu0
      %v4232 = vpop.f32.mrf.mxu0
      %v4233 = vadd.f32 0.0, %v4232
      %v4234 = vpop.f32.mrf.mxu0
      %4235 = vmatprep.mubr.bf16.mxu0 0
      %4236 = vmatmul.mubr.bf16.gmra.mxu0 %v4108
      %v4237 = vpop.f32.mrf.mxu0
      %v4238 = vadd.f32 0.0, %v4237
      %v4239 = vpop.f32.mrf.mxu0
      %v4240 = vpop.f32.mrf.mxu0
      %v4241 = vadd.f32 0.0, %v4240
      %v4242 = vpop.f32.mrf.mxu0
      %4243 = vmatprep.mubr.bf16.mxu0 0
      %4244 = vmatmul.mubr.bf16.gmra.mxu0 %v4111
      %v4245 = vpop.f32.mrf.mxu0
      %v4246 = vadd.f32 0.0, %v4245
      %v4247 = vpop.f32.mrf.mxu0
      %v4248 = vpop.f32.mrf.mxu0
      %v4249 = vadd.f32 0.0, %v4248
      %v4250 = vpop.f32.mrf.mxu0
      %4251 = vmatprep.mubr.bf16.mxu0 0
      %4252 = vmatmul.mubr.bf16.gmra.mxu0 %v4114
      %v4253 = vpop.f32.mrf.mxu0
      %v4254 = vadd.f32 0.0, %v4253
      %v4255 = vpop.f32.mrf.mxu0
      %v4256 = vpop.f32.mrf.mxu0
      %v4257 = vadd.f32 0.0, %v4256
      %v4258 = vpop.f32.mrf.mxu0
      %4259 = vmatprep.mubr.bf16.mxu0 0
      %4260 = vmatmul.mubr.bf16.gmra.mxu0 %v4117
      %v4261 = vpop.f32.mrf.mxu0
      %v4262 = vadd.f32 0.0, %v4261
      %v4263 = vpop.f32.mrf.mxu0
      %v4264 = vpop.f32.mrf.mxu0
      %v4265 = vadd.f32 0.0, %v4264
      %v4266 = vpop.f32.mrf.mxu0
      %4267 = vmatprep.mubr.bf16.mxu0 0
      %4268 = vmatmul.mubr.bf16.gmra.mxu0 %v4120
      %v4269 = vpop.f32.mrf.mxu0
      %v4270 = vadd.f32 0.0, %v4269
      %v4271 = vpop.f32.mrf.mxu0
      %v4272 = vpop.f32.mrf.mxu0
      %v4273 = vadd.f32 0.0, %v4272
      %v4274 = vpop.f32.mrf.mxu0
      %4275 = vmatprep.mubr.bf16.mxu0 0
      %4276 = vmatmul.mubr.bf16.gmra.mxu0 %v4123
      %v4277 = vpop.f32.mrf.mxu0
      %v4278 = vadd.f32 0.0, %v4277
      %v4279 = vpop.f32.mrf.mxu0
      %v4280 = vpop.f32.mrf.mxu0
      %v4281 = vadd.f32 0.0, %v4280
      %v4282 = vpop.f32.mrf.mxu0
      %4283 = vmatprep.mubr.bf16.mxu0 0
      %4284 = vmatmul.mubr.bf16.gmra.mxu0 %v4126
      %v4285 = vpop.f32.mrf.mxu0
      %v4286 = vadd.f32 0.0, %v4285
      %v4287 = vpop.f32.mrf.mxu0
      %v4288 = vpop.f32.mrf.mxu0
      %v4289 = vadd.f32 0.0, %v4288
      %v4290 = vpop.f32.mrf.mxu0
      %4291 = vdwg.mxu0
      %v4292 = vadd.f32 %v3765, %v4166
      %v4293 = vadd.f32 %v3766, %v4169
      %v4294 = vadd.f32 %v3767, %v4174
      %v4295 = vadd.f32 %v3768, %v4177
      %v4296 = vadd.f32 %v3769, %v4182
      %v4297 = vadd.f32 %v3770, %v4185
      %v4298 = vadd.f32 %v3771, %v4190
      %v4299 = vadd.f32 %v3772, %v4193
      %v4300 = vadd.f32 %v3773, %v4198
      %v4301 = vadd.f32 %v3774, %v4201
      %v4302 = vadd.f32 %v3775, %v4206
      %v4303 = vadd.f32 %v3776, %v4209
      %v4304 = vadd.f32 %v3777, %v4214
      %v4305 = vadd.f32 %v3778, %v4217
      %v4306 = vadd.f32 %v3779, %v4222
      %v4307 = vadd.f32 %v3780, %v4225
      %v4308 = vadd.f32 %v3781, %v4230
      %v4309 = vadd.f32 %v3782, %v4233
      %v4310 = vadd.f32 %v3783, %v4238
      %v4311 = vadd.f32 %v3784, %v4241
      %v4312 = vadd.f32 %v3785, %v4246
      %v4313 = vadd.f32 %v3786, %v4249
      %v4314 = vadd.f32 %v3787, %v4254
      %v4315 = vadd.f32 %v3788, %v4257
      %v4316 = vadd.f32 %v3789, %v4262
      %v4317 = vadd.f32 %v3790, %v4265
      %v4318 = vadd.f32 %v3791, %v4270
      %v4319 = vadd.f32 %v3792, %v4273
      %v4320 = vadd.f32 %v3793, %v4278
      %v4321 = vadd.f32 %v3794, %v4281
      %v4322 = vadd.f32 %v3795, %v4286
      %v4323 = vadd.f32 %v3796, %v4289
      %v4324 = vld [vmem:[%s163 + $0x14] sm:$0x8]
      %v4325 = vld [vmem:[%s163 + $0x18] sm:$0xf]
      %v4326 = vld [vmem:[%s163 + $0x1c] sm:$0xf]
      %v4327 = vld [vmem:[%s163 + $0x20] sm:$0xf]
      %v4328 = vld [vmem:[%s163 + $0x24] sm:$0xf]
      %v4329 = vld [vmem:[%s163 + $0x28] sm:$0xf]
      %v4330 = vld [vmem:[%s163 + $0x2c] sm:$0xf]
      %v4331 = vld [vmem:[%s163 + $0x30] sm:$0xf]
      %v4332 = vld [vmem:[%s163 + $0x34] sm:$0xf]
      %v4333 = vld [vmem:[%s163 + $0x38] sm:$0xf]
      %v4334 = vld [vmem:[%s163 + $0x3c] sm:$0xf]
      %v4335 = vld [vmem:[%s163 + $0x40] sm:$0xf]
      %v4336 = vld [vmem:[%s163 + $0x44] sm:$0xf]
      %v4337 = vld [vmem:[%s163 + $0x48] sm:$0xf]
      %v4338 = vld [vmem:[%s163 + $0x4c] sm:$0xf]
      %v4339 = vld [vmem:[%s163 + $0x50] sm:$0xf]
      %v4340 = vld [vmem:[%s163 + $0x54] sm:$0xf]
      %v4341 = vld [vmem:[%s163 + $0x58] sm:$0xf]
      %v4342 = vld [vmem:[%s163 + $0x5c] sm:$0xf]
      %v4343 = vld [vmem:[%s163 + $0x60] sm:$0xf]
      %v4344 = vld [vmem:[%s163 + $0x64] sm:$0xf]
      %v4345 = vld [vmem:[%s163 + $0x68] sm:$0xf]
      %v4346 = vld [vmem:[%s163 + $0x6c] sm:$0xf]
      %v4347 = vld [vmem:[%s163 + $0x70] sm:$0xf]
      %v4348 = vld [vmem:[%s163 + $0x74] sm:$0xf]
      %v4349 = vld [vmem:[%s163 + $0x78] sm:$0xf]
      %v4350 = vld [vmem:[%s163 + $0x7c] sm:$0xf]
      %v4351 = vld [vmem:[%s163 + $0x80] sm:$0xf]
      %v4352 = vld [vmem:[%s163 + $0x84] sm:$0xf]
      %v4353 = vld [vmem:[%s163 + $0x88] sm:$0xf]
      %v4354 = vld [vmem:[%s163 + $0x8c] sm:$0xf]
      %v4355 = vld [vmem:[%s163 + $0x90] sm:$0xf]
      %v4356 = vld [vmem:[%s163 + $0x94] sm:$0xf]
      %v4357 = vsel %vm1134, %v4324, 0
      %v4358 = vsel %vm1135, %v4325, 0
      %v4359 = vsel %vm1136, %v4326, 0
      %v4360 = vsel %vm1137, %v4327, 0
      %v4361 = vsel %vm1138, %v4328, 0
      %v4362 = vsel %vm1139, %v4329, 0
      %v4363 = vsel %vm1140, %v4330, 0
      %v4364 = vsel %vm1141, %v4331, 0
      %v4365 = vsel %vm1142, %v4332, 0
      %v4366 = vsel %vm1143, %v4333, 0
      %v4367 = vsel %vm1144, %v4334, 0
      %v4368 = vsel %vm1145, %v4335, 0
      %v4369 = vsel %vm1146, %v4336, 0
      %v4370 = vsel %vm1147, %v4337, 0
      %v4371 = vsel %vm1148, %v4338, 0
      %v4372 = vsel %vm1149, %v4339, 0
      %v4373 = vsel %vm1150, %v4340, 0
      %v4374 = vsel %vm1151, %v4341, 0
      %v4375 = vsel %vm1152, %v4342, 0
      %v4376 = vsel %vm1153, %v4343, 0
      %v4377 = vsel %vm1154, %v4344, 0
      %v4378 = vsel %vm1155, %v4345, 0
      %v4379 = vsel %vm1156, %v4346, 0
      %v4380 = vsel %vm1157, %v4347, 0
      %v4381 = vsel %vm1158, %v4348, 0
      %v4382 = vsel %vm1159, %v4349, 0
      %v4383 = vsel %vm1160, %v4350, 0
      %v4384 = vsel %vm1161, %v4351, 0
      %v4385 = vsel %vm1162, %v4352, 0
      %v4386 = vsel %vm1163, %v4353, 0
      %v4387 = vsel %vm1164, %v4354, 0
      %v4388 = vsel %vm1165, %v4355, 0
      %v4389 = vsel %vm1166, %v4356, 0
      %s4390 = scalar_lea.vmem %s1, 12
      %v4391 = vld [vmem:[%s4390] sm:$0x3]
      %v4425 = vunpack.c.l.b16 %v4357
      %v4426 = vunpack.c.l.b16 %v4358
      %v4427 = vunpack.c.l.b16 %v4359
      %v4428 = vunpack.c.l.b16 %v4360
      %v4429 = vunpack.c.l.b16 %v4361
      %v4430 = vunpack.c.l.b16 %v4362
      %v4431 = vunpack.c.l.b16 %v4363
      %v4432 = vunpack.c.l.b16 %v4364
      %v4433 = vunpack.c.l.b16 %v4365
      %v4434 = vunpack.c.l.b16 %v4366
      %v4435 = vunpack.c.l.b16 %v4367
      %v4436 = vunpack.c.l.b16 %v4368
      %v4437 = vunpack.c.l.b16 %v4369
      %v4438 = vunpack.c.l.b16 %v4370
      %v4439 = vunpack.c.l.b16 %v4371
      %v4440 = vunpack.c.l.b16 %v4372
      %v4441 = vunpack.c.l.b16 %v4373
      %v4442 = vunpack.c.l.b16 %v4374
      %v4443 = vunpack.c.l.b16 %v4375
      %v4444 = vunpack.c.l.b16 %v4376
      %v4445 = vunpack.c.l.b16 %v4377
      %v4446 = vunpack.c.l.b16 %v4378
      %v4447 = vunpack.c.l.b16 %v4379
      %v4448 = vunpack.c.l.b16 %v4380
      %v4449 = vunpack.c.l.b16 %v4381
      %v4450 = vunpack.c.l.b16 %v4382
      %v4451 = vunpack.c.l.b16 %v4383
      %v4452 = vunpack.c.l.b16 %v4384
      %v4453 = vunpack.c.l.b16 %v4385
      %v4454 = vunpack.c.l.b16 %v4386
      %v4455 = vunpack.c.l.b16 %v4387
      %v4456 = vunpack.c.l.b16 %v4388
      %v4457 = vunpack.c.l.b16 %v4389
      %v4458 = vpack.c.b16 %v4426, %v4425
      %v4459 = vpack.c.b16 %v4428, %v4427
      %v4460 = vpack.c.b16 %v4430, %v4429
      %v4461 = vpack.c.b16 %v4432, %v4431
      %v4462 = vpack.c.b16 %v4434, %v4433
      %v4463 = vpack.c.b16 %v4436, %v4435
      %v4464 = vpack.c.b16 %v4438, %v4437
      %v4465 = vpack.c.b16 %v4440, %v4439
      %v4466 = vpack.c.b16 %v4442, %v4441
      %v4467 = vpack.c.b16 %v4444, %v4443
      %v4468 = vpack.c.b16 %v4446, %v4445
      %v4469 = vpack.c.b16 %v4448, %v4447
      %v4470 = vpack.c.b16 %v4450, %v4449
      %v4471 = vpack.c.b16 %v4452, %v4451
      %v4472 = vpack.c.b16 %v4454, %v4453
      %v4473 = vpack.c.b16 %v4456, %v4455
      %v4474 = vpack.c.b16 %v4457, %v4457
      %v4476 = vshrl.u32 %v4458, 16
      %v4478 = vrot.slane %v4476, 3
      %v4479 = vshll.u32 %v4458, 16
      %v4481 = vrot.slane %v4479, 4
      %v4482 = vor.u32 %v4478, %v4481
      %v4484 = vshrl.u32 %v4459, 16
      %v4486 = vrot.slane %v4484, 3
      %v4487 = vshll.u32 %v4459, 16
      %v4489 = vrot.slane %v4487, 4
      %v4490 = vor.u32 %v4486, %v4489
      %v4491 = vsel %vm1580, %v4482, %v4490
      %v4493 = vshrl.u32 %v4460, 16
      %v4495 = vrot.slane %v4493, 3
      %v4496 = vshll.u32 %v4460, 16
      %v4498 = vrot.slane %v4496, 4
      %v4499 = vor.u32 %v4495, %v4498
      %v4500 = vsel %vm1580, %v4490, %v4499
      %v4502 = vshrl.u32 %v4461, 16
      %v4504 = vrot.slane %v4502, 3
      %v4505 = vshll.u32 %v4461, 16
      %v4507 = vrot.slane %v4505, 4
      %v4508 = vor.u32 %v4504, %v4507
      %v4509 = vsel %vm1580, %v4499, %v4508
      %v4511 = vshrl.u32 %v4462, 16
      %v4513 = vrot.slane %v4511, 3
      %v4514 = vshll.u32 %v4462, 16
      %v4516 = vrot.slane %v4514, 4
      %v4517 = vor.u32 %v4513, %v4516
      %v4518 = vsel %vm1580, %v4508, %v4517
      %v4520 = vshrl.u32 %v4463, 16
      %v4522 = vrot.slane %v4520, 3
      %v4523 = vshll.u32 %v4463, 16
      %v4525 = vrot.slane %v4523, 4
      %v4526 = vor.u32 %v4522, %v4525
      %v4527 = vsel %vm1580, %v4517, %v4526
      %v4529 = vshrl.u32 %v4464, 16
      %v4531 = vrot.slane %v4529, 3
      %v4532 = vshll.u32 %v4464, 16
      %v4534 = vrot.slane %v4532, 4
      %v4535 = vor.u32 %v4531, %v4534
      %v4536 = vsel %vm1580, %v4526, %v4535
      %v4538 = vshrl.u32 %v4465, 16
      %v4540 = vrot.slane %v4538, 3
      %v4541 = vshll.u32 %v4465, 16
      %v4543 = vrot.slane %v4541, 4
      %v4544 = vor.u32 %v4540, %v4543
      %v4545 = vsel %vm1580, %v4535, %v4544
      %v4547 = vshrl.u32 %v4466, 16
      %v4549 = vrot.slane %v4547, 3
      %v4550 = vshll.u32 %v4466, 16
      %v4552 = vrot.slane %v4550, 4
      %v4553 = vor.u32 %v4549, %v4552
      %v4554 = vsel %vm1580, %v4544, %v4553
      %v4556 = vshrl.u32 %v4467, 16
      %v4558 = vrot.slane %v4556, 3
      %v4559 = vshll.u32 %v4467, 16
      %v4561 = vrot.slane %v4559, 4
      %v4562 = vor.u32 %v4558, %v4561
      %v4563 = vsel %vm1580, %v4553, %v4562
      %v4565 = vshrl.u32 %v4468, 16
      %v4567 = vrot.slane %v4565, 3
      %v4568 = vshll.u32 %v4468, 16
      %v4570 = vrot.slane %v4568, 4
      %v4571 = vor.u32 %v4567, %v4570
      %v4572 = vsel %vm1580, %v4562, %v4571
      %v4574 = vshrl.u32 %v4469, 16
      %v4576 = vrot.slane %v4574, 3
      %v4577 = vshll.u32 %v4469, 16
      %v4579 = vrot.slane %v4577, 4
      %v4580 = vor.u32 %v4576, %v4579
      %v4581 = vsel %vm1580, %v4571, %v4580
      %v4583 = vshrl.u32 %v4470, 16
      %v4585 = vrot.slane %v4583, 3
      %v4586 = vshll.u32 %v4470, 16
      %v4588 = vrot.slane %v4586, 4
      %v4589 = vor.u32 %v4585, %v4588
      %v4590 = vsel %vm1580, %v4580, %v4589
      %v4592 = vshrl.u32 %v4471, 16
      %v4594 = vrot.slane %v4592, 3
      %v4595 = vshll.u32 %v4471, 16
      %v4597 = vrot.slane %v4595, 4
      %v4598 = vor.u32 %v4594, %v4597
      %v4599 = vsel %vm1580, %v4589, %v4598
      %v4601 = vshrl.u32 %v4472, 16
      %v4603 = vrot.slane %v4601, 3
      %v4604 = vshll.u32 %v4472, 16
      %v4606 = vrot.slane %v4604, 4
      %v4607 = vor.u32 %v4603, %v4606
      %v4608 = vsel %vm1580, %v4598, %v4607
      %v4610 = vshrl.u32 %v4473, 16
      %v4612 = vrot.slane %v4610, 3
      %v4613 = vshll.u32 %v4473, 16
      %v4615 = vrot.slane %v4613, 4
      %v4616 = vor.u32 %v4612, %v4615
      %v4617 = vsel %vm1580, %v4607, %v4616
      %v4619 = vshrl.u32 %v4474, 16
      %v4621 = vrot.slane %v4619, 3
      %v4622 = vshll.u32 %v4474, 16
      %v4624 = vrot.slane %v4622, 4
      %v4625 = vor.u32 %v4621, %v4624
      %v4626 = vsel %vm1580, %v4616, %v4625
      %v4628 = vsel %vm1283, %v4491, 0
      %v4631 = vsel %vm1283, %v4500, 0
      %v4634 = vsel %vm1283, %v4509, 0
      %v4637 = vsel %vm1283, %v4518, 0
      %v4640 = vsel %vm1283, %v4527, 0
      %v4643 = vsel %vm1283, %v4536, 0
      %v4646 = vsel %vm1283, %v4545, 0
      %v4649 = vsel %vm1283, %v4554, 0
      %v4652 = vsel %vm1283, %v4563, 0
      %v4655 = vsel %vm1283, %v4572, 0
      %v4658 = vsel %vm1283, %v4581, 0
      %v4661 = vsel %vm1283, %v4590, 0
      %v4664 = vsel %vm1283, %v4599, 0
      %v4667 = vsel %vm1283, %v4608, 0
      %v4670 = vsel %vm1283, %v4617, 0
      %v4673 = vsel %vm1283, %v4626, 0
      %v4676 = vsel %vm1332, %v4391, 0
      %4678 = vmatprep.subr.bf16.mxu0 0
      %4679 = vmatpush1.bf16.msra.mxu0 0
      %4680 = vmatprep.subr.bf16.mxu0 0
      %4681 = vmatpush1.bf16.msra.mxu0 0
      %4682 = vmatprep.subr.bf16.mxu0 0
      %4683 = vmatpush1.bf16.msra.mxu0 0
      %4684 = vmatprep.subr.bf16.mxu0 0
      %4685 = vmatpush1.bf16.msra.mxu0 0
      %4686 = vmatprep.subr.bf16.mxu0 0
      %4687 = vmatpush1.bf16.msra.mxu0 0
      %4688 = vmatprep.subr.bf16.mxu0 0
      %4689 = vmatpush1.bf16.msra.mxu0 0
      %4690 = vmatprep.subr.bf16.mxu0 0
      %4691 = vmatpush1.bf16.msra.mxu0 0
      %4692 = vmatprep.subr.bf16.mxu0 0
      %4693 = vmatpush1.bf16.msra.mxu0 %v4676
      %4694 = vmatprep.subr.bf16.mxu0 0
      %4695 = vmatpush2.bf16.msra.mxu0 0
      %4696 = vmatprep.subr.bf16.mxu0 0
      %4697 = vmatpush2.bf16.msra.mxu0 0
      %4698 = vmatprep.subr.bf16.mxu0 0
      %4699 = vmatpush2.bf16.msra.mxu0 0
      %4700 = vmatprep.subr.bf16.mxu0 0
      %4701 = vmatpush2.bf16.msra.mxu0 0
      %4702 = vmatprep.subr.bf16.mxu0 0
      %4703 = vmatpush2.bf16.msra.mxu0 0
      %4704 = vmatprep.subr.bf16.mxu0 0
      %4705 = vmatpush2.bf16.msra.mxu0 0
      %4706 = vmatprep.subr.bf16.mxu0 0
      %4707 = vmatpush2.bf16.msra.mxu0 0
      %4708 = vmatprep.subr.bf16.mxu0 0
      %4709 = vmatpush2.bf16.msra.mxu0 0
      %4710 = vmatprep.mubr.bf16.mxu0 0
      %4711 = vmatmul.mubr.bf16.gmra.mxu0 %v4628
      %v4712 = vpop.f32.mrf.mxu0
      %v4713 = vadd.f32 0.0, %v4712
      %v4714 = vpop.f32.mrf.mxu0
      %v4715 = vpop.f32.mrf.mxu0
      %v4716 = vadd.f32 0.0, %v4715
      %v4717 = vpop.f32.mrf.mxu0
      %4718 = vmatprep.mubr.bf16.mxu0 0
      %4719 = vmatmul.mubr.bf16.gmra.mxu0 %v4631
      %v4720 = vpop.f32.mrf.mxu0
      %v4721 = vadd.f32 0.0, %v4720
      %v4722 = vpop.f32.mrf.mxu0
      %v4723 = vpop.f32.mrf.mxu0
      %v4724 = vadd.f32 0.0, %v4723
      %v4725 = vpop.f32.mrf.mxu0
      %4726 = vmatprep.mubr.bf16.mxu0 0
      %4727 = vmatmul.mubr.bf16.gmra.mxu0 %v4634
      %v4728 = vpop.f32.mrf.mxu0
      %v4729 = vadd.f32 0.0, %v4728
      %v4730 = vpop.f32.mrf.mxu0
      %v4731 = vpop.f32.mrf.mxu0
      %v4732 = vadd.f32 0.0, %v4731
      %v4733 = vpop.f32.mrf.mxu0
      %4734 = vmatprep.mubr.bf16.mxu0 0
      %4735 = vmatmul.mubr.bf16.gmra.mxu0 %v4637
      %v4736 = vpop.f32.mrf.mxu0
      %v4737 = vadd.f32 0.0, %v4736
      %v4738 = vpop.f32.mrf.mxu0
      %v4739 = vpop.f32.mrf.mxu0
      %v4740 = vadd.f32 0.0, %v4739
      %v4741 = vpop.f32.mrf.mxu0
      %4742 = vmatprep.mubr.bf16.mxu0 0
      %4743 = vmatmul.mubr.bf16.gmra.mxu0 %v4640
      %v4744 = vpop.f32.mrf.mxu0
      %v4745 = vadd.f32 0.0, %v4744
      %v4746 = vpop.f32.mrf.mxu0
      %v4747 = vpop.f32.mrf.mxu0
      %v4748 = vadd.f32 0.0, %v4747
      %v4749 = vpop.f32.mrf.mxu0
      %4750 = vmatprep.mubr.bf16.mxu0 0
      %4751 = vmatmul.mubr.bf16.gmra.mxu0 %v4643
      %v4752 = vpop.f32.mrf.mxu0
      %v4753 = vadd.f32 0.0, %v4752
      %v4754 = vpop.f32.mrf.mxu0
      %v4755 = vpop.f32.mrf.mxu0
      %v4756 = vadd.f32 0.0, %v4755
      %v4757 = vpop.f32.mrf.mxu0
      %4758 = vmatprep.mubr.bf16.mxu0 0
      %4759 = vmatmul.mubr.bf16.gmra.mxu0 %v4646
      %v4760 = vpop.f32.mrf.mxu0
      %v4761 = vadd.f32 0.0, %v4760
      %v4762 = vpop.f32.mrf.mxu0
      %v4763 = vpop.f32.mrf.mxu0
      %v4764 = vadd.f32 0.0, %v4763
      %v4765 = vpop.f32.mrf.mxu0
      %4766 = vmatprep.mubr.bf16.mxu0 0
      %4767 = vmatmul.mubr.bf16.gmra.mxu0 %v4649
      %v4768 = vpop.f32.mrf.mxu0
      %v4769 = vadd.f32 0.0, %v4768
      %v4770 = vpop.f32.mrf.mxu0
      %v4771 = vpop.f32.mrf.mxu0
      %v4772 = vadd.f32 0.0, %v4771
      %v4773 = vpop.f32.mrf.mxu0
      %4774 = vmatprep.mubr.bf16.mxu0 0
      %4775 = vmatmul.mubr.bf16.gmra.mxu0 %v4652
      %v4776 = vpop.f32.mrf.mxu0
      %v4777 = vadd.f32 0.0, %v4776
      %v4778 = vpop.f32.mrf.mxu0
      %v4779 = vpop.f32.mrf.mxu0
      %v4780 = vadd.f32 0.0, %v4779
      %v4781 = vpop.f32.mrf.mxu0
      %4782 = vmatprep.mubr.bf16.mxu0 0
      %4783 = vmatmul.mubr.bf16.gmra.mxu0 %v4655
      %v4784 = vpop.f32.mrf.mxu0
      %v4785 = vadd.f32 0.0, %v4784
      %v4786 = vpop.f32.mrf.mxu0
      %v4787 = vpop.f32.mrf.mxu0
      %v4788 = vadd.f32 0.0, %v4787
      %v4789 = vpop.f32.mrf.mxu0
      %4790 = vmatprep.mubr.bf16.mxu0 0
      %4791 = vmatmul.mubr.bf16.gmra.mxu0 %v4658
      %v4792 = vpop.f32.mrf.mxu0
      %v4793 = vadd.f32 0.0, %v4792
      %v4794 = vpop.f32.mrf.mxu0
      %v4795 = vpop.f32.mrf.mxu0
      %v4796 = vadd.f32 0.0, %v4795
      %v4797 = vpop.f32.mrf.mxu0
      %4798 = vmatprep.mubr.bf16.mxu0 0
      %4799 = vmatmul.mubr.bf16.gmra.mxu0 %v4661
      %v4800 = vpop.f32.mrf.mxu0
      %v4801 = vadd.f32 0.0, %v4800
      %v4802 = vpop.f32.mrf.mxu0
      %v4803 = vpop.f32.mrf.mxu0
      %v4804 = vadd.f32 0.0, %v4803
      %v4805 = vpop.f32.mrf.mxu0
      %4806 = vmatprep.mubr.bf16.mxu0 0
      %4807 = vmatmul.mubr.bf16.gmra.mxu0 %v4664
      %v4808 = vpop.f32.mrf.mxu0
      %v4809 = vadd.f32 0.0, %v4808
      %v4810 = vpop.f32.mrf.mxu0
      %v4811 = vpop.f32.mrf.mxu0
      %v4812 = vadd.f32 0.0, %v4811
      %v4813 = vpop.f32.mrf.mxu0
      %4814 = vmatprep.mubr.bf16.mxu0 0
      %4815 = vmatmul.mubr.bf16.gmra.mxu0 %v4667
      %v4816 = vpop.f32.mrf.mxu0
      %v4817 = vadd.f32 0.0, %v4816
      %v4818 = vpop.f32.mrf.mxu0
      %v4819 = vpop.f32.mrf.mxu0
      %v4820 = vadd.f32 0.0, %v4819
      %v4821 = vpop.f32.mrf.mxu0
      %4822 = vmatprep.mubr.bf16.mxu0 0
      %4823 = vmatmul.mubr.bf16.gmra.mxu0 %v4670
      %v4824 = vpop.f32.mrf.mxu0
      %v4825 = vadd.f32 0.0, %v4824
      %v4826 = vpop.f32.mrf.mxu0
      %v4827 = vpop.f32.mrf.mxu0
      %v4828 = vadd.f32 0.0, %v4827
      %v4829 = vpop.f32.mrf.mxu0
      %4830 = vmatprep.mubr.bf16.mxu0 0
      %4831 = vmatmul.mubr.bf16.gmra.mxu0 %v4673
      %v4832 = vpop.f32.mrf.mxu0
      %v4833 = vadd.f32 0.0, %v4832
      %v4834 = vpop.f32.mrf.mxu0
      %v4835 = vpop.f32.mrf.mxu0
      %v4836 = vadd.f32 0.0, %v4835
      %v4837 = vpop.f32.mrf.mxu0
      %4838 = vdwg.mxu0
      %v4839 = vadd.f32 %v4292, %v4713
      %v4840 = vadd.f32 %v4293, %v4716
      %v4841 = vadd.f32 %v4294, %v4721
      %v4842 = vadd.f32 %v4295, %v4724
      %v4843 = vadd.f32 %v4296, %v4729
      %v4844 = vadd.f32 %v4297, %v4732
      %v4845 = vadd.f32 %v4298, %v4737
      %v4846 = vadd.f32 %v4299, %v4740
      %v4847 = vadd.f32 %v4300, %v4745
      %v4848 = vadd.f32 %v4301, %v4748
      %v4849 = vadd.f32 %v4302, %v4753
      %v4850 = vadd.f32 %v4303, %v4756
      %v4851 = vadd.f32 %v4304, %v4761
      %v4852 = vadd.f32 %v4305, %v4764
      %v4853 = vadd.f32 %v4306, %v4769
      %v4854 = vadd.f32 %v4307, %v4772
      %v4855 = vadd.f32 %v4308, %v4777
      %v4856 = vadd.f32 %v4309, %v4780
      %v4857 = vadd.f32 %v4310, %v4785
      %v4858 = vadd.f32 %v4311, %v4788
      %v4859 = vadd.f32 %v4312, %v4793
      %v4860 = vadd.f32 %v4313, %v4796
      %v4861 = vadd.f32 %v4314, %v4801
      %v4862 = vadd.f32 %v4315, %v4804
      %v4863 = vadd.f32 %v4316, %v4809
      %v4864 = vadd.f32 %v4317, %v4812
      %v4865 = vadd.f32 %v4318, %v4817
      %v4866 = vadd.f32 %v4319, %v4820
      %v4867 = vadd.f32 %v4320, %v4825
      %v4868 = vadd.f32 %v4321, %v4828
      %v4869 = vadd.f32 %v4322, %v4833
      %v4870 = vadd.f32 %v4323, %v4836
      %s4871 = scalar_lea.vmem %s1, 14
      %v4872 = vld [vmem:[%s4871] sm:$0x3]
      %v4905 = vunpack.c.l.b16 %v4325
      %v4906 = vunpack.c.l.b16 %v4326
      %v4907 = vunpack.c.l.b16 %v4327
      %v4908 = vunpack.c.l.b16 %v4328
      %v4909 = vunpack.c.l.b16 %v4329
      %v4910 = vunpack.c.l.b16 %v4330
      %v4911 = vunpack.c.l.b16 %v4331
      %v4912 = vunpack.c.l.b16 %v4332
      %v4913 = vunpack.c.l.b16 %v4333
      %v4914 = vunpack.c.l.b16 %v4334
      %v4915 = vunpack.c.l.b16 %v4335
      %v4916 = vunpack.c.l.b16 %v4336
      %v4917 = vunpack.c.l.b16 %v4337
      %v4918 = vunpack.c.l.b16 %v4338
      %v4919 = vunpack.c.l.b16 %v4339
      %v4920 = vunpack.c.l.b16 %v4340
      %v4921 = vunpack.c.l.b16 %v4341
      %v4922 = vunpack.c.l.b16 %v4342
      %v4923 = vunpack.c.l.b16 %v4343
      %v4924 = vunpack.c.l.b16 %v4344
      %v4925 = vunpack.c.l.b16 %v4345
      %v4926 = vunpack.c.l.b16 %v4346
      %v4927 = vunpack.c.l.b16 %v4347
      %v4928 = vunpack.c.l.b16 %v4348
      %v4929 = vunpack.c.l.b16 %v4349
      %v4930 = vunpack.c.l.b16 %v4350
      %v4931 = vunpack.c.l.b16 %v4351
      %v4932 = vunpack.c.l.b16 %v4352
      %v4933 = vunpack.c.l.b16 %v4353
      %v4934 = vunpack.c.l.b16 %v4354
      %v4935 = vunpack.c.l.b16 %v4355
      %v4936 = vunpack.c.l.b16 %v4356
      %v4937 = vpack.c.b16 %v4906, %v4905
      %v4938 = vpack.c.b16 %v4908, %v4907
      %v4939 = vpack.c.b16 %v4910, %v4909
      %v4940 = vpack.c.b16 %v4912, %v4911
      %v4941 = vpack.c.b16 %v4914, %v4913
      %v4942 = vpack.c.b16 %v4916, %v4915
      %v4943 = vpack.c.b16 %v4918, %v4917
      %v4944 = vpack.c.b16 %v4920, %v4919
      %v4945 = vpack.c.b16 %v4922, %v4921
      %v4946 = vpack.c.b16 %v4924, %v4923
      %v4947 = vpack.c.b16 %v4926, %v4925
      %v4948 = vpack.c.b16 %v4928, %v4927
      %v4949 = vpack.c.b16 %v4930, %v4929
      %v4950 = vpack.c.b16 %v4932, %v4931
      %v4951 = vpack.c.b16 %v4934, %v4933
      %v4952 = vpack.c.b16 %v4936, %v4935
      %v4954 = vsel %vm1283, %v4937, 0
      %v4957 = vsel %vm1283, %v4938, 0
      %v4960 = vsel %vm1283, %v4939, 0
      %v4963 = vsel %vm1283, %v4940, 0
      %v4966 = vsel %vm1283, %v4941, 0
      %v4969 = vsel %vm1283, %v4942, 0
      %v4972 = vsel %vm1283, %v4943, 0
      %v4975 = vsel %vm1283, %v4944, 0
      %v4978 = vsel %vm1283, %v4945, 0
      %v4981 = vsel %vm1283, %v4946, 0
      %v4984 = vsel %vm1283, %v4947, 0
      %v4987 = vsel %vm1283, %v4948, 0
      %v4990 = vsel %vm1283, %v4949, 0
      %v4993 = vsel %vm1283, %v4950, 0
      %v4996 = vsel %vm1283, %v4951, 0
      %v4999 = vsel %vm1283, %v4952, 0
      %v5002 = vsel %vm1332, %v4872, 0
      %5004 = vmatprep.subr.bf16.mxu0 0
      %5005 = vmatpush1.bf16.msra.mxu0 0
      %5006 = vmatprep.subr.bf16.mxu0 0
      %5007 = vmatpush1.bf16.msra.mxu0 0
      %5008 = vmatprep.subr.bf16.mxu0 0
      %5009 = vmatpush1.bf16.msra.mxu0 0
      %5010 = vmatprep.subr.bf16.mxu0 0
      %5011 = vmatpush1.bf16.msra.mxu0 0
      %5012 = vmatprep.subr.bf16.mxu0 0
      %5013 = vmatpush1.bf16.msra.mxu0 0
      %5014 = vmatprep.subr.bf16.mxu0 0
      %5015 = vmatpush1.bf16.msra.mxu0 0
      %5016 = vmatprep.subr.bf16.mxu0 0
      %5017 = vmatpush1.bf16.msra.mxu0 0
      %5018 = vmatprep.subr.bf16.mxu0 0
      %5019 = vmatpush1.bf16.msra.mxu0 %v5002
      %5020 = vmatprep.subr.bf16.mxu0 0
      %5021 = vmatpush2.bf16.msra.mxu0 0
      %5022 = vmatprep.subr.bf16.mxu0 0
      %5023 = vmatpush2.bf16.msra.mxu0 0
      %5024 = vmatprep.subr.bf16.mxu0 0
      %5025 = vmatpush2.bf16.msra.mxu0 0
      %5026 = vmatprep.subr.bf16.mxu0 0
      %5027 = vmatpush2.bf16.msra.mxu0 0
      %5028 = vmatprep.subr.bf16.mxu0 0
      %5029 = vmatpush2.bf16.msra.mxu0 0
      %5030 = vmatprep.subr.bf16.mxu0 0
      %5031 = vmatpush2.bf16.msra.mxu0 0
      %5032 = vmatprep.subr.bf16.mxu0 0
      %5033 = vmatpush2.bf16.msra.mxu0 0
      %5034 = vmatprep.subr.bf16.mxu0 0
      %5035 = vmatpush2.bf16.msra.mxu0 0
      %5036 = vmatprep.mubr.bf16.mxu0 0
      %5037 = vmatmul.mubr.bf16.gmra.mxu0 %v4954
      %v5038 = vpop.f32.mrf.mxu0
      %v5039 = vadd.f32 0.0, %v5038
      %v5040 = vpop.f32.mrf.mxu0
      %v5041 = vpop.f32.mrf.mxu0
      %v5042 = vadd.f32 0.0, %v5041
      %v5043 = vpop.f32.mrf.mxu0
      %5044 = vmatprep.mubr.bf16.mxu0 0
      %5045 = vmatmul.mubr.bf16.gmra.mxu0 %v4957
      %v5046 = vpop.f32.mrf.mxu0
      %v5047 = vadd.f32 0.0, %v5046
      %v5048 = vpop.f32.mrf.mxu0
      %v5049 = vpop.f32.mrf.mxu0
      %v5050 = vadd.f32 0.0, %v5049
      %v5051 = vpop.f32.mrf.mxu0
      %5052 = vmatprep.mubr.bf16.mxu0 0
      %5053 = vmatmul.mubr.bf16.gmra.mxu0 %v4960
      %v5054 = vpop.f32.mrf.mxu0
      %v5055 = vadd.f32 0.0, %v5054
      %v5056 = vpop.f32.mrf.mxu0
      %v5057 = vpop.f32.mrf.mxu0
      %v5058 = vadd.f32 0.0, %v5057
      %v5059 = vpop.f32.mrf.mxu0
      %5060 = vmatprep.mubr.bf16.mxu0 0
      %5061 = vmatmul.mubr.bf16.gmra.mxu0 %v4963
      %v5062 = vpop.f32.mrf.mxu0
      %v5063 = vadd.f32 0.0, %v5062
      %v5064 = vpop.f32.mrf.mxu0
      %v5065 = vpop.f32.mrf.mxu0
      %v5066 = vadd.f32 0.0, %v5065
      %v5067 = vpop.f32.mrf.mxu0
      %5068 = vmatprep.mubr.bf16.mxu0 0
      %5069 = vmatmul.mubr.bf16.gmra.mxu0 %v4966
      %v5070 = vpop.f32.mrf.mxu0
      %v5071 = vadd.f32 0.0, %v5070
      %v5072 = vpop.f32.mrf.mxu0
      %v5073 = vpop.f32.mrf.mxu0
      %v5074 = vadd.f32 0.0, %v5073
      %v5075 = vpop.f32.mrf.mxu0
      %5076 = vmatprep.mubr.bf16.mxu0 0
      %5077 = vmatmul.mubr.bf16.gmra.mxu0 %v4969
      %v5078 = vpop.f32.mrf.mxu0
      %v5079 = vadd.f32 0.0, %v5078
      %v5080 = vpop.f32.mrf.mxu0
      %v5081 = vpop.f32.mrf.mxu0
      %v5082 = vadd.f32 0.0, %v5081
      %v5083 = vpop.f32.mrf.mxu0
      %5084 = vmatprep.mubr.bf16.mxu0 0
      %5085 = vmatmul.mubr.bf16.gmra.mxu0 %v4972
      %v5086 = vpop.f32.mrf.mxu0
      %v5087 = vadd.f32 0.0, %v5086
      %v5088 = vpop.f32.mrf.mxu0
      %v5089 = vpop.f32.mrf.mxu0
      %v5090 = vadd.f32 0.0, %v5089
      %v5091 = vpop.f32.mrf.mxu0
      %5092 = vmatprep.mubr.bf16.mxu0 0
      %5093 = vmatmul.mubr.bf16.gmra.mxu0 %v4975
      %v5094 = vpop.f32.mrf.mxu0
      %v5095 = vadd.f32 0.0, %v5094
      %v5096 = vpop.f32.mrf.mxu0
      %v5097 = vpop.f32.mrf.mxu0
      %v5098 = vadd.f32 0.0, %v5097
      %v5099 = vpop.f32.mrf.mxu0
      %5100 = vmatprep.mubr.bf16.mxu0 0
      %5101 = vmatmul.mubr.bf16.gmra.mxu0 %v4978
      %v5102 = vpop.f32.mrf.mxu0
      %v5103 = vadd.f32 0.0, %v5102
      %v5104 = vpop.f32.mrf.mxu0
      %v5105 = vpop.f32.mrf.mxu0
      %v5106 = vadd.f32 0.0, %v5105
      %v5107 = vpop.f32.mrf.mxu0
      %5108 = vmatprep.mubr.bf16.mxu0 0
      %5109 = vmatmul.mubr.bf16.gmra.mxu0 %v4981
      %v5110 = vpop.f32.mrf.mxu0
      %v5111 = vadd.f32 0.0, %v5110
      %v5112 = vpop.f32.mrf.mxu0
      %v5113 = vpop.f32.mrf.mxu0
      %v5114 = vadd.f32 0.0, %v5113
      %v5115 = vpop.f32.mrf.mxu0
      %5116 = vmatprep.mubr.bf16.mxu0 0
      %5117 = vmatmul.mubr.bf16.gmra.mxu0 %v4984
      %v5118 = vpop.f32.mrf.mxu0
      %v5119 = vadd.f32 0.0, %v5118
      %v5120 = vpop.f32.mrf.mxu0
      %v5121 = vpop.f32.mrf.mxu0
      %v5122 = vadd.f32 0.0, %v5121
      %v5123 = vpop.f32.mrf.mxu0
      %5124 = vmatprep.mubr.bf16.mxu0 0
      %5125 = vmatmul.mubr.bf16.gmra.mxu0 %v4987
      %v5126 = vpop.f32.mrf.mxu0
      %v5127 = vadd.f32 0.0, %v5126
      %v5128 = vpop.f32.mrf.mxu0
      %v5129 = vpop.f32.mrf.mxu0
      %v5130 = vadd.f32 0.0, %v5129
      %v5131 = vpop.f32.mrf.mxu0
      %5132 = vmatprep.mubr.bf16.mxu0 0
      %5133 = vmatmul.mubr.bf16.gmra.mxu0 %v4990
      %v5134 = vpop.f32.mrf.mxu0
      %v5135 = vadd.f32 0.0, %v5134
      %v5136 = vpop.f32.mrf.mxu0
      %v5137 = vpop.f32.mrf.mxu0
      %v5138 = vadd.f32 0.0, %v5137
      %v5139 = vpop.f32.mrf.mxu0
      %5140 = vmatprep.mubr.bf16.mxu0 0
      %5141 = vmatmul.mubr.bf16.gmra.mxu0 %v4993
      %v5142 = vpop.f32.mrf.mxu0
      %v5143 = vadd.f32 0.0, %v5142
      %v5144 = vpop.f32.mrf.mxu0
      %v5145 = vpop.f32.mrf.mxu0
      %v5146 = vadd.f32 0.0, %v5145
      %v5147 = vpop.f32.mrf.mxu0
      %5148 = vmatprep.mubr.bf16.mxu0 0
      %5149 = vmatmul.mubr.bf16.gmra.mxu0 %v4996
      %v5150 = vpop.f32.mrf.mxu0
      %v5151 = vadd.f32 0.0, %v5150
      %v5152 = vpop.f32.mrf.mxu0
      %v5153 = vpop.f32.mrf.mxu0
      %v5154 = vadd.f32 0.0, %v5153
      %v5155 = vpop.f32.mrf.mxu0
      %5156 = vmatprep.mubr.bf16.mxu0 0
      %5157 = vmatmul.mubr.bf16.gmra.mxu0 %v4999
      %v5158 = vpop.f32.mrf.mxu0
      %v5159 = vadd.f32 0.0, %v5158
      %v5160 = vpop.f32.mrf.mxu0
      %v5161 = vpop.f32.mrf.mxu0
      %v5162 = vadd.f32 0.0, %v5161
      %v5163 = vpop.f32.mrf.mxu0
      %5164 = vdwg.mxu0
      %v5165 = vadd.f32 %v4839, %v5039
      %v5166 = vadd.f32 %v4840, %v5042
      %v5167 = vadd.f32 %v4841, %v5047
      %v5168 = vadd.f32 %v4842, %v5050
      %v5169 = vadd.f32 %v4843, %v5055
      %v5170 = vadd.f32 %v4844, %v5058
      %v5171 = vadd.f32 %v4845, %v5063
      %v5172 = vadd.f32 %v4846, %v5066
      %v5173 = vadd.f32 %v4847, %v5071
      %v5174 = vadd.f32 %v4848, %v5074
      %v5175 = vadd.f32 %v4849, %v5079
      %v5176 = vadd.f32 %v4850, %v5082
      %v5177 = vadd.f32 %v4851, %v5087
      %v5178 = vadd.f32 %v4852, %v5090
      %v5179 = vadd.f32 %v4853, %v5095
      %v5180 = vadd.f32 %v4854, %v5098
      %v5181 = vadd.f32 %v4855, %v5103
      %v5182 = vadd.f32 %v4856, %v5106
      %v5183 = vadd.f32 %v4857, %v5111
      %v5184 = vadd.f32 %v4858, %v5114
      %v5185 = vadd.f32 %v4859, %v5119
      %v5186 = vadd.f32 %v4860, %v5122
      %v5187 = vadd.f32 %v4861, %v5127
      %v5188 = vadd.f32 %v4862, %v5130
      %v5189 = vadd.f32 %v4863, %v5135
      %v5190 = vadd.f32 %v4864, %v5138
      %v5191 = vadd.f32 %v4865, %v5143
      %v5192 = vadd.f32 %v4866, %v5146
      %v5193 = vadd.f32 %v4867, %v5151
      %v5194 = vadd.f32 %v4868, %v5154
      %v5195 = vadd.f32 %v4869, %v5159
      %v5196 = vadd.f32 %v4870, %v5162
      %v5197 = vld [vmem:[%s163 + $0x18] sm:$0xf]
      %v5198 = vld [vmem:[%s163 + $0x1c] sm:$0xf]
      %v5199 = vld [vmem:[%s163 + $0x20] sm:$0xf]
      %v5200 = vld [vmem:[%s163 + $0x24] sm:$0xf]
      %v5201 = vld [vmem:[%s163 + $0x28] sm:$0xf]
      %v5202 = vld [vmem:[%s163 + $0x2c] sm:$0xf]
      %v5203 = vld [vmem:[%s163 + $0x30] sm:$0xf]
      %v5204 = vld [vmem:[%s163 + $0x34] sm:$0xf]
      %v5205 = vld [vmem:[%s163 + $0x38] sm:$0xf]
      %v5206 = vld [vmem:[%s163 + $0x3c] sm:$0xf]
      %v5207 = vld [vmem:[%s163 + $0x40] sm:$0xf]
      %v5208 = vld [vmem:[%s163 + $0x44] sm:$0xf]
      %v5209 = vld [vmem:[%s163 + $0x48] sm:$0xf]
      %v5210 = vld [vmem:[%s163 + $0x4c] sm:$0xf]
      %v5211 = vld [vmem:[%s163 + $0x50] sm:$0xf]
      %v5212 = vld [vmem:[%s163 + $0x54] sm:$0xf]
      %v5213 = vld [vmem:[%s163 + $0x58] sm:$0xf]
      %v5214 = vld [vmem:[%s163 + $0x5c] sm:$0xf]
      %v5215 = vld [vmem:[%s163 + $0x60] sm:$0xf]
      %v5216 = vld [vmem:[%s163 + $0x64] sm:$0xf]
      %v5217 = vld [vmem:[%s163 + $0x68] sm:$0xf]
      %v5218 = vld [vmem:[%s163 + $0x6c] sm:$0xf]
      %v5219 = vld [vmem:[%s163 + $0x70] sm:$0xf]
      %v5220 = vld [vmem:[%s163 + $0x74] sm:$0xf]
      %v5221 = vld [vmem:[%s163 + $0x78] sm:$0xf]
      %v5222 = vld [vmem:[%s163 + $0x7c] sm:$0xf]
      %v5223 = vld [vmem:[%s163 + $0x80] sm:$0xf]
      %v5224 = vld [vmem:[%s163 + $0x84] sm:$0xf]
      %v5225 = vld [vmem:[%s163 + $0x88] sm:$0xf]
      %v5226 = vld [vmem:[%s163 + $0x8c] sm:$0xf]
      %v5227 = vld [vmem:[%s163 + $0x90] sm:$0xf]
      %v5228 = vld [vmem:[%s163 + $0x94] sm:$0xf]
      %v5229 = vld [vmem:[%s163 + $0x98] sm:$0x1]
      %v5230 = vsel %vm2396, %v5197, 0
      %v5231 = vsel %vm2397, %v5198, 0
      %v5232 = vsel %vm2398, %v5199, 0
      %v5233 = vsel %vm2399, %v5200, 0
      %v5234 = vsel %vm2400, %v5201, 0
      %v5235 = vsel %vm2401, %v5202, 0
      %v5236 = vsel %vm2402, %v5203, 0
      %v5237 = vsel %vm2403, %v5204, 0
      %v5238 = vsel %vm2404, %v5205, 0
      %v5239 = vsel %vm2405, %v5206, 0
      %v5240 = vsel %vm2406, %v5207, 0
      %v5241 = vsel %vm2407, %v5208, 0
      %v5242 = vsel %vm2408, %v5209, 0
      %v5243 = vsel %vm2409, %v5210, 0
      %v5244 = vsel %vm2410, %v5211, 0
      %v5245 = vsel %vm2411, %v5212, 0
      %v5246 = vsel %vm2412, %v5213, 0
      %v5247 = vsel %vm2413, %v5214, 0
      %v5248 = vsel %vm2414, %v5215, 0
      %v5249 = vsel %vm2415, %v5216, 0
      %v5250 = vsel %vm2416, %v5217, 0
      %v5251 = vsel %vm2417, %v5218, 0
      %v5252 = vsel %vm2418, %v5219, 0
      %v5253 = vsel %vm2419, %v5220, 0
      %v5254 = vsel %vm2420, %v5221, 0
      %v5255 = vsel %vm2421, %v5222, 0
      %v5256 = vsel %vm2422, %v5223, 0
      %v5257 = vsel %vm2423, %v5224, 0
      %v5258 = vsel %vm2424, %v5225, 0
      %v5259 = vsel %vm2425, %v5226, 0
      %v5260 = vsel %vm2426, %v5227, 0
      %v5261 = vsel %vm2427, %v5228, 0
      %v5262 = vsel %vm2428, %v5229, 0
      %s5263 = scalar_lea.vmem %s1, 16
      %v5264 = vld [vmem:[%s5263] sm:$0x3]
      %v5298 = vunpack.c.l.b16 %v5230
      %v5299 = vunpack.c.l.b16 %v5231
      %v5300 = vunpack.c.l.b16 %v5232
      %v5301 = vunpack.c.l.b16 %v5233
      %v5302 = vunpack.c.l.b16 %v5234
      %v5303 = vunpack.c.l.b16 %v5235
      %v5304 = vunpack.c.l.b16 %v5236
      %v5305 = vunpack.c.l.b16 %v5237
      %v5306 = vunpack.c.l.b16 %v5238
      %v5307 = vunpack.c.l.b16 %v5239
      %v5308 = vunpack.c.l.b16 %v5240
      %v5309 = vunpack.c.l.b16 %v5241
      %v5310 = vunpack.c.l.b16 %v5242
      %v5311 = vunpack.c.l.b16 %v5243
      %v5312 = vunpack.c.l.b16 %v5244
      %v5313 = vunpack.c.l.b16 %v5245
      %v5314 = vunpack.c.l.b16 %v5246
      %v5315 = vunpack.c.l.b16 %v5247
      %v5316 = vunpack.c.l.b16 %v5248
      %v5317 = vunpack.c.l.b16 %v5249
      %v5318 = vunpack.c.l.b16 %v5250
      %v5319 = vunpack.c.l.b16 %v5251
      %v5320 = vunpack.c.l.b16 %v5252
      %v5321 = vunpack.c.l.b16 %v5253
      %v5322 = vunpack.c.l.b16 %v5254
      %v5323 = vunpack.c.l.b16 %v5255
      %v5324 = vunpack.c.l.b16 %v5256
      %v5325 = vunpack.c.l.b16 %v5257
      %v5326 = vunpack.c.l.b16 %v5258
      %v5327 = vunpack.c.l.b16 %v5259
      %v5328 = vunpack.c.l.b16 %v5260
      %v5329 = vunpack.c.l.b16 %v5261
      %v5330 = vunpack.c.l.b16 %v5262
      %v5331 = vpack.c.b16 %v5299, %v5298
      %v5332 = vpack.c.b16 %v5301, %v5300
      %v5333 = vpack.c.b16 %v5303, %v5302
      %v5334 = vpack.c.b16 %v5305, %v5304
      %v5335 = vpack.c.b16 %v5307, %v5306
      %v5336 = vpack.c.b16 %v5309, %v5308
      %v5337 = vpack.c.b16 %v5311, %v5310
      %v5338 = vpack.c.b16 %v5313, %v5312
      %v5339 = vpack.c.b16 %v5315, %v5314
      %v5340 = vpack.c.b16 %v5317, %v5316
      %v5341 = vpack.c.b16 %v5319, %v5318
      %v5342 = vpack.c.b16 %v5321, %v5320
      %v5343 = vpack.c.b16 %v5323, %v5322
      %v5344 = vpack.c.b16 %v5325, %v5324
      %v5345 = vpack.c.b16 %v5327, %v5326
      %v5346 = vpack.c.b16 %v5329, %v5328
      %v5347 = vpack.c.b16 %v5330, %v5330
      %v5349 = vshrl.u32 %v5331, 16
      %v5351 = vshll.u32 %v5331, 16
      %v5353 = vrot.slane %v5351, 1
      %v5354 = vor.u32 %v5349, %v5353
      %v5356 = vshll.u32 %v5332, 16
      %v5358 = vrot.slane %v5356, 1
      %v5359 = vsel %vm2547, %v5354, %v5358
      %v5360 = vshrl.u32 %v5332, 16
      %v5362 = vor.u32 %v5360, %v5358
      %v5364 = vshll.u32 %v5333, 16
      %v5366 = vrot.slane %v5364, 1
      %v5367 = vsel %vm2547, %v5362, %v5366
      %v5368 = vshrl.u32 %v5333, 16
      %v5370 = vor.u32 %v5368, %v5366
      %v5372 = vshll.u32 %v5334, 16
      %v5374 = vrot.slane %v5372, 1
      %v5375 = vsel %vm2547, %v5370, %v5374
      %v5376 = vshrl.u32 %v5334, 16
      %v5378 = vor.u32 %v5376, %v5374
      %v5380 = vshll.u32 %v5335, 16
      %v5382 = vrot.slane %v5380, 1
      %v5383 = vsel %vm2547, %v5378, %v5382
      %v5384 = vshrl.u32 %v5335, 16
      %v5386 = vor.u32 %v5384, %v5382
      %v5388 = vshll.u32 %v5336, 16
      %v5390 = vrot.slane %v5388, 1
      %v5391 = vsel %vm2547, %v5386, %v5390
      %v5392 = vshrl.u32 %v5336, 16
      %v5394 = vor.u32 %v5392, %v5390
      %v5396 = vshll.u32 %v5337, 16
      %v5398 = vrot.slane %v5396, 1
      %v5399 = vsel %vm2547, %v5394, %v5398
      %v5400 = vshrl.u32 %v5337, 16
      %v5402 = vor.u32 %v5400, %v5398
      %v5404 = vshll.u32 %v5338, 16
      %v5406 = vrot.slane %v5404, 1
      %v5407 = vsel %vm2547, %v5402, %v5406
      %v5408 = vshrl.u32 %v5338, 16
      %v5410 = vor.u32 %v5408, %v5406
      %v5412 = vshll.u32 %v5339, 16
      %v5414 = vrot.slane %v5412, 1
      %v5415 = vsel %vm2547, %v5410, %v5414
      %v5416 = vshrl.u32 %v5339, 16
      %v5418 = vor.u32 %v5416, %v5414
      %v5420 = vshll.u32 %v5340, 16
      %v5422 = vrot.slane %v5420, 1
      %v5423 = vsel %vm2547, %v5418, %v5422
      %v5424 = vshrl.u32 %v5340, 16
      %v5426 = vor.u32 %v5424, %v5422
      %v5428 = vshll.u32 %v5341, 16
      %v5430 = vrot.slane %v5428, 1
      %v5431 = vsel %vm2547, %v5426, %v5430
      %v5432 = vshrl.u32 %v5341, 16
      %v5434 = vor.u32 %v5432, %v5430
      %v5436 = vshll.u32 %v5342, 16
      %v5438 = vrot.slane %v5436, 1
      %v5439 = vsel %vm2547, %v5434, %v5438
      %v5440 = vshrl.u32 %v5342, 16
      %v5442 = vor.u32 %v5440, %v5438
      %v5444 = vshll.u32 %v5343, 16
      %v5446 = vrot.slane %v5444, 1
      %v5447 = vsel %vm2547, %v5442, %v5446
      %v5448 = vshrl.u32 %v5343, 16
      %v5450 = vor.u32 %v5448, %v5446
      %v5452 = vshll.u32 %v5344, 16
      %v5454 = vrot.slane %v5452, 1
      %v5455 = vsel %vm2547, %v5450, %v5454
      %v5456 = vshrl.u32 %v5344, 16
      %v5458 = vor.u32 %v5456, %v5454
      %v5460 = vshll.u32 %v5345, 16
      %v5462 = vrot.slane %v5460, 1
      %v5463 = vsel %vm2547, %v5458, %v5462
      %v5464 = vshrl.u32 %v5345, 16
      %v5466 = vor.u32 %v5464, %v5462
      %v5468 = vshll.u32 %v5346, 16
      %v5470 = vrot.slane %v5468, 1
      %v5471 = vsel %vm2547, %v5466, %v5470
      %v5472 = vshrl.u32 %v5346, 16
      %v5474 = vor.u32 %v5472, %v5470
      %v5476 = vshll.u32 %v5347, 16
      %v5478 = vrot.slane %v5476, 1
      %v5479 = vsel %vm2547, %v5474, %v5478
      %v5481 = vsel %vm1283, %v5359, 0
      %v5484 = vsel %vm1283, %v5367, 0
      %v5487 = vsel %vm1283, %v5375, 0
      %v5490 = vsel %vm1283, %v5383, 0
      %v5493 = vsel %vm1283, %v5391, 0
      %v5496 = vsel %vm1283, %v5399, 0
      %v5499 = vsel %vm1283, %v5407, 0
      %v5502 = vsel %vm1283, %v5415, 0
      %v5505 = vsel %vm1283, %v5423, 0
      %v5508 = vsel %vm1283, %v5431, 0
      %v5511 = vsel %vm1283, %v5439, 0
      %v5514 = vsel %vm1283, %v5447, 0
      %v5517 = vsel %vm1283, %v5455, 0
      %v5520 = vsel %vm1283, %v5463, 0
      %v5523 = vsel %vm1283, %v5471, 0
      %v5526 = vsel %vm1283, %v5479, 0
      %v5529 = vsel %vm1332, %v5264, 0
      %5531 = vmatprep.subr.bf16.mxu0 0
      %5532 = vmatpush1.bf16.msra.mxu0 0
      %5533 = vmatprep.subr.bf16.mxu0 0
      %5534 = vmatpush1.bf16.msra.mxu0 0
      %5535 = vmatprep.subr.bf16.mxu0 0
      %5536 = vmatpush1.bf16.msra.mxu0 0
      %5537 = vmatprep.subr.bf16.mxu0 0
      %5538 = vmatpush1.bf16.msra.mxu0 0
      %5539 = vmatprep.subr.bf16.mxu0 0
      %5540 = vmatpush1.bf16.msra.mxu0 0
      %5541 = vmatprep.subr.bf16.mxu0 0
      %5542 = vmatpush1.bf16.msra.mxu0 0
      %5543 = vmatprep.subr.bf16.mxu0 0
      %5544 = vmatpush1.bf16.msra.mxu0 0
      %5545 = vmatprep.subr.bf16.mxu0 0
      %5546 = vmatpush1.bf16.msra.mxu0 %v5529
      %5547 = vmatprep.subr.bf16.mxu0 0
      %5548 = vmatpush2.bf16.msra.mxu0 0
      %5549 = vmatprep.subr.bf16.mxu0 0
      %5550 = vmatpush2.bf16.msra.mxu0 0
      %5551 = vmatprep.subr.bf16.mxu0 0
      %5552 = vmatpush2.bf16.msra.mxu0 0
      %5553 = vmatprep.subr.bf16.mxu0 0
      %5554 = vmatpush2.bf16.msra.mxu0 0
      %5555 = vmatprep.subr.bf16.mxu0 0
      %5556 = vmatpush2.bf16.msra.mxu0 0
      %5557 = vmatprep.subr.bf16.mxu0 0
      %5558 = vmatpush2.bf16.msra.mxu0 0
      %5559 = vmatprep.subr.bf16.mxu0 0
      %5560 = vmatpush2.bf16.msra.mxu0 0
      %5561 = vmatprep.subr.bf16.mxu0 0
      %5562 = vmatpush2.bf16.msra.mxu0 0
      %5563 = vmatprep.mubr.bf16.mxu0 0
      %5564 = vmatmul.mubr.bf16.gmra.mxu0 %v5481
      %v5565 = vpop.f32.mrf.mxu0
      %v5566 = vadd.f32 0.0, %v5565
      %v5567 = vpop.f32.mrf.mxu0
      %v5568 = vpop.f32.mrf.mxu0
      %v5569 = vadd.f32 0.0, %v5568
      %v5570 = vpop.f32.mrf.mxu0
      %5571 = vmatprep.mubr.bf16.mxu0 0
      %5572 = vmatmul.mubr.bf16.gmra.mxu0 %v5484
      %v5573 = vpop.f32.mrf.mxu0
      %v5574 = vadd.f32 0.0, %v5573
      %v5575 = vpop.f32.mrf.mxu0
      %v5576 = vpop.f32.mrf.mxu0
      %v5577 = vadd.f32 0.0, %v5576
      %v5578 = vpop.f32.mrf.mxu0
      %5579 = vmatprep.mubr.bf16.mxu0 0
      %5580 = vmatmul.mubr.bf16.gmra.mxu0 %v5487
      %v5581 = vpop.f32.mrf.mxu0
      %v5582 = vadd.f32 0.0, %v5581
      %v5583 = vpop.f32.mrf.mxu0
      %v5584 = vpop.f32.mrf.mxu0
      %v5585 = vadd.f32 0.0, %v5584
      %v5586 = vpop.f32.mrf.mxu0
      %5587 = vmatprep.mubr.bf16.mxu0 0
      %5588 = vmatmul.mubr.bf16.gmra.mxu0 %v5490
      %v5589 = vpop.f32.mrf.mxu0
      %v5590 = vadd.f32 0.0, %v5589
      %v5591 = vpop.f32.mrf.mxu0
      %v5592 = vpop.f32.mrf.mxu0
      %v5593 = vadd.f32 0.0, %v5592
      %v5594 = vpop.f32.mrf.mxu0
      %5595 = vmatprep.mubr.bf16.mxu0 0
      %5596 = vmatmul.mubr.bf16.gmra.mxu0 %v5493
      %v5597 = vpop.f32.mrf.mxu0
      %v5598 = vadd.f32 0.0, %v5597
      %v5599 = vpop.f32.mrf.mxu0
      %v5600 = vpop.f32.mrf.mxu0
      %v5601 = vadd.f32 0.0, %v5600
      %v5602 = vpop.f32.mrf.mxu0
      %5603 = vmatprep.mubr.bf16.mxu0 0
      %5604 = vmatmul.mubr.bf16.gmra.mxu0 %v5496
      %v5605 = vpop.f32.mrf.mxu0
      %v5606 = vadd.f32 0.0, %v5605
      %v5607 = vpop.f32.mrf.mxu0
      %v5608 = vpop.f32.mrf.mxu0
      %v5609 = vadd.f32 0.0, %v5608
      %v5610 = vpop.f32.mrf.mxu0
      %5611 = vmatprep.mubr.bf16.mxu0 0
      %5612 = vmatmul.mubr.bf16.gmra.mxu0 %v5499
      %v5613 = vpop.f32.mrf.mxu0
      %v5614 = vadd.f32 0.0, %v5613
      %v5615 = vpop.f32.mrf.mxu0
      %v5616 = vpop.f32.mrf.mxu0
      %v5617 = vadd.f32 0.0, %v5616
      %v5618 = vpop.f32.mrf.mxu0
      %5619 = vmatprep.mubr.bf16.mxu0 0
      %5620 = vmatmul.mubr.bf16.gmra.mxu0 %v5502
      %v5621 = vpop.f32.mrf.mxu0
      %v5622 = vadd.f32 0.0, %v5621
      %v5623 = vpop.f32.mrf.mxu0
      %v5624 = vpop.f32.mrf.mxu0
      %v5625 = vadd.f32 0.0, %v5624
      %v5626 = vpop.f32.mrf.mxu0
      %5627 = vmatprep.mubr.bf16.mxu0 0
      %5628 = vmatmul.mubr.bf16.gmra.mxu0 %v5505
      %v5629 = vpop.f32.mrf.mxu0
      %v5630 = vadd.f32 0.0, %v5629
      %v5631 = vpop.f32.mrf.mxu0
      %v5632 = vpop.f32.mrf.mxu0
      %v5633 = vadd.f32 0.0, %v5632
      %v5634 = vpop.f32.mrf.mxu0
      %5635 = vmatprep.mubr.bf16.mxu0 0
      %5636 = vmatmul.mubr.bf16.gmra.mxu0 %v5508
      %v5637 = vpop.f32.mrf.mxu0
      %v5638 = vadd.f32 0.0, %v5637
      %v5639 = vpop.f32.mrf.mxu0
      %v5640 = vpop.f32.mrf.mxu0
      %v5641 = vadd.f32 0.0, %v5640
      %v5642 = vpop.f32.mrf.mxu0
      %5643 = vmatprep.mubr.bf16.mxu0 0
      %5644 = vmatmul.mubr.bf16.gmra.mxu0 %v5511
      %v5645 = vpop.f32.mrf.mxu0
      %v5646 = vadd.f32 0.0, %v5645
      %v5647 = vpop.f32.mrf.mxu0
      %v5648 = vpop.f32.mrf.mxu0
      %v5649 = vadd.f32 0.0, %v5648
      %v5650 = vpop.f32.mrf.mxu0
      %5651 = vmatprep.mubr.bf16.mxu0 0
      %5652 = vmatmul.mubr.bf16.gmra.mxu0 %v5514
      %v5653 = vpop.f32.mrf.mxu0
      %v5654 = vadd.f32 0.0, %v5653
      %v5655 = vpop.f32.mrf.mxu0
      %v5656 = vpop.f32.mrf.mxu0
      %v5657 = vadd.f32 0.0, %v5656
      %v5658 = vpop.f32.mrf.mxu0
      %5659 = vmatprep.mubr.bf16.mxu0 0
      %5660 = vmatmul.mubr.bf16.gmra.mxu0 %v5517
      %v5661 = vpop.f32.mrf.mxu0
      %v5662 = vadd.f32 0.0, %v5661
      %v5663 = vpop.f32.mrf.mxu0
      %v5664 = vpop.f32.mrf.mxu0
      %v5665 = vadd.f32 0.0, %v5664
      %v5666 = vpop.f32.mrf.mxu0
      %5667 = vmatprep.mubr.bf16.mxu0 0
      %5668 = vmatmul.mubr.bf16.gmra.mxu0 %v5520
      %v5669 = vpop.f32.mrf.mxu0
      %v5670 = vadd.f32 0.0, %v5669
      %v5671 = vpop.f32.mrf.mxu0
      %v5672 = vpop.f32.mrf.mxu0
      %v5673 = vadd.f32 0.0, %v5672
      %v5674 = vpop.f32.mrf.mxu0
      %5675 = vmatprep.mubr.bf16.mxu0 0
      %5676 = vmatmul.mubr.bf16.gmra.mxu0 %v5523
      %v5677 = vpop.f32.mrf.mxu0
      %v5678 = vadd.f32 0.0, %v5677
      %v5679 = vpop.f32.mrf.mxu0
      %v5680 = vpop.f32.mrf.mxu0
      %v5681 = vadd.f32 0.0, %v5680
      %v5682 = vpop.f32.mrf.mxu0
      %5683 = vmatprep.mubr.bf16.mxu0 0
      %5684 = vmatmul.mubr.bf16.gmra.mxu0 %v5526
      %v5685 = vpop.f32.mrf.mxu0
      %v5686 = vadd.f32 0.0, %v5685
      %v5687 = vpop.f32.mrf.mxu0
      %v5688 = vpop.f32.mrf.mxu0
      %v5689 = vadd.f32 0.0, %v5688
      %v5690 = vpop.f32.mrf.mxu0
      %5691 = vdwg.mxu0
      %v5692 = vadd.f32 %v5165, %v5566
      %v5693 = vadd.f32 %v5166, %v5569
      %v5694 = vadd.f32 %v5167, %v5574
      %v5695 = vadd.f32 %v5168, %v5577
      %v5696 = vadd.f32 %v5169, %v5582
      %v5697 = vadd.f32 %v5170, %v5585
      %v5698 = vadd.f32 %v5171, %v5590
      %v5699 = vadd.f32 %v5172, %v5593
      %v5700 = vadd.f32 %v5173, %v5598
      %v5701 = vadd.f32 %v5174, %v5601
      %v5702 = vadd.f32 %v5175, %v5606
      %v5703 = vadd.f32 %v5176, %v5609
      %v5704 = vadd.f32 %v5177, %v5614
      %v5705 = vadd.f32 %v5178, %v5617
      %v5706 = vadd.f32 %v5179, %v5622
      %v5707 = vadd.f32 %v5180, %v5625
      %v5708 = vadd.f32 %v5181, %v5630
      %v5709 = vadd.f32 %v5182, %v5633
      %v5710 = vadd.f32 %v5183, %v5638
      %v5711 = vadd.f32 %v5184, %v5641
      %v5712 = vadd.f32 %v5185, %v5646
      %v5713 = vadd.f32 %v5186, %v5649
      %v5714 = vadd.f32 %v5187, %v5654
      %v5715 = vadd.f32 %v5188, %v5657
      %v5716 = vadd.f32 %v5189, %v5662
      %v5717 = vadd.f32 %v5190, %v5665
      %v5718 = vadd.f32 %v5191, %v5670
      %v5719 = vadd.f32 %v5192, %v5673
      %v5720 = vadd.f32 %v5193, %v5678
      %v5721 = vadd.f32 %v5194, %v5681
      %v5722 = vadd.f32 %v5195, %v5686
      %v5723 = vadd.f32 %v5196, %v5689
      %v5724 = vld [vmem:[%s2] sm:$0x1]
      %v5726 = vlaneseq
      %v5727 = vshrl.u32 %v5726, 7
      %v5728 = vsub.s32 0, %v5727
      %v5729 = vrot.slane %v5724, %v5728
      %v5731 = vadd.f32 %v5692, %v5729
      %v5732 = vadd.f32 %v5693, %v5729
      %v5733 = vadd.f32 %v5694, %v5729
      %v5734 = vadd.f32 %v5695, %v5729
      %v5735 = vadd.f32 %v5696, %v5729
      %v5736 = vadd.f32 %v5697, %v5729
      %v5737 = vadd.f32 %v5698, %v5729
      %v5738 = vadd.f32 %v5699, %v5729
      %v5739 = vadd.f32 %v5700, %v5729
      %v5740 = vadd.f32 %v5701, %v5729
      %v5741 = vadd.f32 %v5702, %v5729
      %v5742 = vadd.f32 %v5703, %v5729
      %v5743 = vadd.f32 %v5704, %v5729
      %v5744 = vadd.f32 %v5705, %v5729
      %v5745 = vadd.f32 %v5706, %v5729
      %v5746 = vadd.f32 %v5707, %v5729
      %v5747 = vadd.f32 %v5708, %v5729
      %v5748 = vadd.f32 %v5709, %v5729
      %v5749 = vadd.f32 %v5710, %v5729
      %v5750 = vadd.f32 %v5711, %v5729
      %v5751 = vadd.f32 %v5712, %v5729
      %v5752 = vadd.f32 %v5713, %v5729
      %v5753 = vadd.f32 %v5714, %v5729
      %v5754 = vadd.f32 %v5715, %v5729
      %v5755 = vadd.f32 %v5716, %v5729
      %v5756 = vadd.f32 %v5717, %v5729
      %v5757 = vadd.f32 %v5718, %v5729
      %v5758 = vadd.f32 %v5719, %v5729
      %v5759 = vadd.f32 %v5720, %v5729
      %v5760 = vadd.f32 %v5721, %v5729
      %v5761 = vadd.f32 %v5722, %v5729
      %v5762 = vadd.f32 %v5723, %v5729
      %v5763 = vmax.f32 %v5731, 0.0
      %v5764 = vmax.f32 %v5732, 0.0
      %v5765 = vmax.f32 %v5733, 0.0
      %v5766 = vmax.f32 %v5734, 0.0
      %v5767 = vmax.f32 %v5735, 0.0
      %v5768 = vmax.f32 %v5736, 0.0
      %v5769 = vmax.f32 %v5737, 0.0
      %v5770 = vmax.f32 %v5738, 0.0
      %v5771 = vmax.f32 %v5739, 0.0
      %v5772 = vmax.f32 %v5740, 0.0
      %v5773 = vmax.f32 %v5741, 0.0
      %v5774 = vmax.f32 %v5742, 0.0
      %v5775 = vmax.f32 %v5743, 0.0
      %v5776 = vmax.f32 %v5744, 0.0
      %v5777 = vmax.f32 %v5745, 0.0
      %v5778 = vmax.f32 %v5746, 0.0
      %v5779 = vmax.f32 %v5747, 0.0
      %v5780 = vmax.f32 %v5748, 0.0
      %v5781 = vmax.f32 %v5749, 0.0
      %v5782 = vmax.f32 %v5750, 0.0
      %v5783 = vmax.f32 %v5751, 0.0
      %v5784 = vmax.f32 %v5752, 0.0
      %v5785 = vmax.f32 %v5753, 0.0
      %v5786 = vmax.f32 %v5754, 0.0
      %v5787 = vmax.f32 %v5755, 0.0
      %v5788 = vmax.f32 %v5756, 0.0
      %v5789 = vmax.f32 %v5757, 0.0
      %v5790 = vmax.f32 %v5758, 0.0
      %v5791 = vmax.f32 %v5759, 0.0
      %v5792 = vmax.f32 %v5760, 0.0
      %v5793 = vmax.f32 %v5761, 0.0
      %v5794 = vmax.f32 %v5762, 0.0
      %v5795 = vadd.f32 %v5763, %v5764
      %v5796 = vadd.f32 %v5795, %v5765
      %v5797 = vadd.f32 %v5796, %v5766
      %v5798 = vadd.f32 %v5797, %v5767
      %v5799 = vadd.f32 %v5798, %v5768
      %v5800 = vadd.f32 %v5799, %v5769
      %v5801 = vadd.f32 %v5800, %v5770
      %v5802 = vadd.f32 %v5801, %v5771
      %v5803 = vadd.f32 %v5802, %v5772
      %v5804 = vadd.f32 %v5803, %v5773
      %v5805 = vadd.f32 %v5804, %v5774
      %v5806 = vadd.f32 %v5805, %v5775
      %v5807 = vadd.f32 %v5806, %v5776
      %v5808 = vadd.f32 %v5807, %v5777
      %v5809 = vadd.f32 %v5808, %v5778
      %v5810 = vadd.f32 %v5809, %v5779
      %v5811 = vadd.f32 %v5810, %v5780
      %v5812 = vadd.f32 %v5811, %v5781
      %v5813 = vadd.f32 %v5812, %v5782
      %v5814 = vadd.f32 %v5813, %v5783
      %v5815 = vadd.f32 %v5814, %v5784
      %v5816 = vadd.f32 %v5815, %v5785
      %v5817 = vadd.f32 %v5816, %v5786
      %v5818 = vadd.f32 %v5817, %v5787
      %v5819 = vadd.f32 %v5818, %v5788
      %v5820 = vadd.f32 %v5819, %v5789
      %v5821 = vadd.f32 %v5820, %v5790
      %v5822 = vadd.f32 %v5821, %v5791
      %v5823 = vadd.f32 %v5822, %v5792
      %v5824 = vadd.f32 %v5823, %v5793
      %v5825 = vadd.f32 %v5824, %v5794
      %v5826 = vrot.slane %v5825, 4
      %v5827 = vadd.f32 %v5825, %v5826
      %v5828 = vrot.slane %v5827, 2
      %v5829 = vadd.f32 %v5827, %v5828
      %v5830 = vrot.slane %v5829, 1
      %v5831 = vadd.f32 %v5829, %v5830
      %v5832 = vrcp.pop 256.0
      %v5833 = vmul.f32 %v5831, %v5832
      %5834 = vst [vmem:[%s166] sm:$0x1] %v5833
      %p5835 = scmp.lt.s32.totalorder %s14, 1
      %s5836 = scalar_select %p5835, %s14, 1
      %s5837 = scalar_lea.vmem %s3, %s5836
      // Predicated region
      $region33: #{encoder_image_forward.2} parent=31 // pred_check
        %p5838 = pneg %p100
      $region34: #{encoder_image_forward.2} parent=31 // pred_check_branch
        %5840 = sbr.rel (%p5838) target = $region36
      $region35: #{encoder_image_forward.2} parent=31 // pred_region
        _
      $region36: #{encoder_image_forward.2} parent=31 // pred_fallthru
        _
    $region32: #{encoder_image_forward.2} parent=5 // pred_fallthru
      _
    %p5841 = scmp.le.s32.totalorder 2, %s9
    // Predicated region
    $region37: #{encoder_image_forward.2} parent=5 // pred_check
      %p5842 = pneg %p5841
    $region38: #{encoder_image_forward.2} parent=5 // pred_check_branch
      %5844 = sbr.rel (%p5842) target = $region40
    $region39: #{encoder_image_forward.2} parent=5 // pred_region
      %s5845 = ssub.s32 %s9, 2
      // Predicated region
      $region41: #{encoder_image_forward.2} parent=39 // pred_check
        %p5846 = pneg %p106
      $region42: #{encoder_image_forward.2} parent=39 // pred_check_branch
        %5848 = sbr.rel (%p5846) target = $region44
      $region43: #{encoder_image_forward.2} parent=39 // pred_region
        %p5849 = scmp.lt.s32.totalorder %s15, 1
        %s5850 = scalar_select %p5849, %s15, 1
        %s5851 = scalar_lea.vmem %s3, %s5850
      $region44: #{encoder_image_forward.2} parent=39 // pred_fallthru
        _
    $region40: #{encoder_image_forward.2} parent=5 // pred_fallthru
      _
  $region6: #{encoder_image_forward.2} parent=0 // loop_footer
    %s13 = sadd.s32 1, %s9
  $region7: #{encoder_image_forward.2} parent=0 // loop_footer_branch
    %8 = sbr.rel target = $region3
  $region8: #{encoder_image_forward.2} parent=0 // loop_exit
    _

</llo_original>
